<compile_context>
chip_gen: v6e
topology: v6e:2x2x1
jax: 0.10.0
libtpu: 0.0.40
codegen_flags: <defaults>
</compile_context>

<pallas_src>
import functools

import jax
import jax.numpy as jnp
from jax.experimental import pallas as pl
from jax.experimental.pallas import tpu as pltpu

EPS = 1e-5                      # PyTorch BatchNorm1d default eps
LANE = 128
HIGHEST = jax.lax.Precision.HIGHEST


def _round_up(n, m=LANE):
    return ((n + m - 1) // m) * m


# ---------------------------------------------------------------------------
# shared math (used inside the Pallas kernel and in the JAX reference)
# ---------------------------------------------------------------------------
def _bn_train(x, gamma, beta):
    """BatchNorm1d in training mode: biased batch statistics over dim 0."""
    mean = jnp.mean(x, axis=0, keepdims=True)
    var = jnp.mean((x - mean) ** 2, axis=0, keepdims=True)
    xhat = (x - mean) * jax.lax.rsqrt(var + EPS)
    if gamma is None:            # affine=False
        return xhat
    return xhat * gamma + beta


# ---------------------------------------------------------------------------
# fused Pallas kernel: conv3x3 (single K=9*Cin matmul) -> ReLU -> GAP -> heads
# All refs are full-array VMEM blocks (no grid); whole batch per invocation.
# ---------------------------------------------------------------------------
def fused_kernel(xcol_ref,                    # (B*H*W, KP)  bf16 im2col (zero lane padding)
                 wconv_ref, bconv_ref,        # (KP, CP) bf16, (1, CP) f32
                 w1_ref, g1_ref, be1_ref,     # proj layer 1
                 w2_ref, g2_ref, be2_ref,     # proj layer 2
                 w3_ref, b3_ref,              # proj layer 3
                 w4_ref, g4_ref, be4_ref,     # pred layer 1
                 w5_ref, b5_ref,              # pred layer 2
                 proj_ref, pred_ref,          # (B, DP) outputs
                 *, B, HW):
    # ---- backbone: one bf16 MXU matmul (f32 accumulation), ReLU, GAP --------
    acc = jnp.dot(xcol_ref[...], wconv_ref[...],
                  preferred_element_type=jnp.float32)            # (B*HW, CP)
    y = jnp.maximum(acc + bconv_ref[...], 0.0)                   # ReLU
    cp = y.shape[-1]
    # global average pool per image (leading-dim reshape, lane dim unchanged)
    feat = jnp.sum(y.reshape(B, HW, cp), axis=1) * (1.0 / HW)    # (B, CP) f32

    # ---- heads: f32, HIGHEST-precision dots (tiny, BN stats are sensitive) --
    def dotf(a, b):
        return jnp.dot(a, b, preferred_element_type=jnp.float32, precision=HIGHEST)

    # NOTE: padded lanes stay exactly zero: weights/gamma/beta are zero-padded,
    # so padded columns are 0 -> BN gives 0 -> ReLU keeps 0 -> next matmul 0.
    h = jnp.maximum(_bn_train(dotf(feat, w1_ref[...]), g1_ref[...], be1_ref[...]), 0.0)
    h = jnp.maximum(_bn_train(dotf(h, w2_ref[...]), g2_ref[...], be2_ref[...]), 0.0)
    proj = _bn_train(dotf(h, w3_ref[...]) + b3_ref[...], None, None)   # BN(dim, affine=False)
    proj_ref[...] = proj

    p = jnp.maximum(_bn_train(dotf(proj, w4_ref[...]), g4_ref[...], be4_ref[...]), 0.0)
    pred_ref[...] = dotf(p, w5_ref[...]) + b5_ref[...]


# ---------------------------------------------------------------------------
# JAX wrapper: im2col + bf16 cast + lane padding in the wrapper, one pallas_call
# ---------------------------------------------------------------------------
def _pad2(w, rows, cols):
    return jnp.pad(w, ((0, rows - w.shape[0]), (0, cols - w.shape[1])))


@jax.jit
def network_forward(x_nchw, params):
    B, Cin, H, W = x_nchw.shape
    c_bb = params["b_conv"].shape[-1]
    dim = params["b3"].shape[-1]
    pdim = params["g4"].shape[-1]
    K = 9 * Cin
    KP, CP, DP, PP = _round_up(K), _round_up(c_bb), _round_up(dim), _round_up(pdim)

    # im2col built once in the wrapper (~B*H*W*9*Cin elements, trivial here),
    # cast to bf16 before the call -> halves input DMA bytes, no in-kernel casts.
    x_nhwc = jnp.transpose(x_nchw, (0, 2, 3, 1))
    x_sp = jnp.pad(x_nhwc, ((0, 0), (1, 1), (1, 1), (0, 0)))        # (B, H+2, W+2, Cin)
    taps = [x_sp[:, dh:dh + H, dw:dw + W, :] for dh in range(3) for dw in range(3)]
    xcol = jnp.concatenate(taps, axis=-1).reshape(B * H * W, K).astype(jnp.bfloat16)
    xcol = jnp.pad(xcol, ((0, 0), (0, KP - K)))                     # lane-dense K

    # lane-pad parameters with ZEROS (padded lanes provably stay zero, see kernel)
    wconv = _pad2(params["w_conv"].reshape(K, c_bb), KP, CP).astype(jnp.bfloat16)
    bconv = _pad2(params["b_conv"], 1, CP)
    w1 = _pad2(params["w1"], CP, CP); g1 = _pad2(params["g1"], 1, CP); be1 = _pad2(params["be1"], 1, CP)
    w2 = _pad2(params["w2"], CP, CP); g2 = _pad2(params["g2"], 1, CP); be2 = _pad2(params["be2"], 1, CP)
    w3 = _pad2(params["w3"], CP, DP); b3 = _pad2(params["b3"], 1, DP)
    w4 = _pad2(params["w4"], DP, PP); g4 = _pad2(params["g4"], 1, PP); be4 = _pad2(params["be4"], 1, PP)
    w5 = _pad2(params["w5"], PP, DP); b5 = _pad2(params["b5"], 1, DP)

    kernel = functools.partial(fused_kernel, B=B, HW=H * W)

    flops = (2 * B * H * W * KP * CP
             + 2 * B * (2 * CP * CP + CP * DP + DP * PP + PP * DP))
    bytes_acc = (xcol.size * 2 + wconv.size * 2
                 + 4 * (bconv.size + w1.size + w2.size + w3.size + w4.size + w5.size
                        + g1.size + be1.size + g2.size + be2.size + b3.size
                        + g4.size + be4.size + b5.size)
                 + 2 * B * DP * 4)

    # No grid: the whole (small) batch is one step; all operands are full-array
    # VMEM blocks, weights resident, outputs lane-dense (DP = 128 multiple).
    proj_p, pred_p = pl.pallas_call(
        kernel,
        out_shape=(jax.ShapeDtypeStruct((B, DP), jnp.float32),
                   jax.ShapeDtypeStruct((B, DP), jnp.float32)),
        compiler_params=pltpu.CompilerParams(vmem_limit_bytes=64 * 1024 * 1024),
        cost_estimate=pl.CostEstimate(flops=flops, transcendentals=5 * CP,
                                      bytes_accessed=bytes_acc),
    )(xcol, wconv, bconv,
      w1, g1, be1, w2, g2, be2, w3, b3, w4, g4, be4, w5, b5)

    return {"proj": proj_p[:, :dim], "pred": pred_p[:, :dim]}


# ---------------------------------------------------------------------------
# pure-JAX f32 reference (same math, no Pallas, no padding) for a sanity check
# ---------------------------------------------------------------------------
def network_reference(x_nchw, p):
    x_nhwc = jnp.transpose(x_nchw, (0, 2, 3, 1))
    B, H, W, Cin = x_nhwc.shape
    xp = jnp.pad(x_nhwc, ((0, 0), (1, 1), (1, 1), (0, 0)))
    acc = jnp.zeros((B, H * W, p["w_conv"].shape[-1]), jnp.float32)
    t = 0
    for dh in range(3):
        for dw in range(3):
            xt = xp[:, dh:dh + H, dw:dw + W, :].reshape(B, H * W, Cin)
            acc = acc + jnp.einsum("bpc,cd->bpd", xt, p["w_conv"][t])
            t += 1
    y = jnp.maximum(acc + p["b_conv"], 0.0)
    feat = jnp.mean(y, axis=1)

    h = jnp.maximum(_bn_train(feat @ p["w1"], p["g1"], p["be1"]), 0.0)
    h = jnp.maximum(_bn_train(h @ p["w2"], p["g2"], p["be2"]), 0.0)
    proj = _bn_train(h @ p["w3"] + p["b3"], None, None)
    q = jnp.maximum(_bn_train(proj @ p["w4"], p["g4"], p["be4"]), 0.0)
    pred = q @ p["w5"] + p["b5"]
    return {"proj": proj, "pred": pred}


# ---------------------------------------------------------------------------
# deterministic parameter init (logical / unpadded shapes, matmul layout)
# ---------------------------------------------------------------------------
def init_params(key, cin=4, c_bb=32, dim=64, pred_dim=16):
    ks = jax.random.split(key, 8)
    s = 0.1
    f32 = jnp.float32
    return {
        # backbone conv: torch (C_BB, Cin, 3, 3) stored tap-major as (9, Cin, C_BB)
        "w_conv": jax.random.normal(ks[0], (9, cin, c_bb), f32) * s,
        "b_conv": jnp.zeros((1, c_bb), f32),
        # proj
        "w1": jax.random.normal(ks[1], (c_bb, c_bb), f32) * s,
        "g1": jnp.ones((1, c_bb), f32), "be1": jnp.zeros((1, c_bb), f32),
        "w2": jax.random.normal(ks[2], (c_bb, c_bb), f32) * s,
        "g2": jnp.ones((1, c_bb), f32), "be2": jnp.zeros((1, c_bb), f32),
        "w3": jax.random.normal(ks[3], (c_bb, dim), f32) * s,
        "b3": jax.random.normal(ks[4], (1, dim), f32) * s,
        # pred
        "w4": jax.random.normal(ks[5], (dim, pred_dim), f32) * s,
        "g4": jnp.ones((1, pred_dim), f32), "be4": jnp.zeros((1, pred_dim), f32),
        "w5": jax.random.normal(ks[6], (pred_dim, dim), f32) * s,
        "b5": jax.random.normal(ks[7], (1, dim), f32) * s,
    }


if __name__ == "__main__":
    key = jax.random.PRNGKey(0)
    kx, kp = jax.random.split(key)

    B, CIN, H, W = 8, 4, 16, 16            # small NCHW input (B=8 fills sublanes)
    C_BB, DIM, PRED_DIM = 32, 64, 16       # backbone.num_out, dim, pred_dim (scaled down)

    x = jax.random.normal(kx, (B, CIN, H, W), jnp.float32)
    params = init_params(kp, cin=CIN, c_bb=C_BB, dim=DIM, pred_dim=PRED_DIM)

    out = jax.block_until_ready(network_forward(x, params))
    ref = network_reference(x, params)

    assert out["proj"].shape == (B, DIM) and out["pred"].shape == (B, DIM)
    # tolerance covers the bf16-operand conv (f32 accumulation); heads are f32/HIGHEST
    assert jnp.allclose(out["proj"], ref["proj"], atol=2e-2, rtol=1e-2), \
        float(jnp.max(jnp.abs(out["proj"] - ref["proj"])))
    assert jnp.allclose(out["pred"], ref["pred"], atol=2e-2, rtol=1e-2), \
        float(jnp.max(jnp.abs(out["pred"] - ref["pred"])))

    print("KERNEL_OK")
</pallas_src>

<mosaic_0001>
module attributes {stable_mosaic.version = 11 : i64} {
  func.func @fused_kernel(%arg0: memref<2048x128xbf16, #tpu.memory_space<vmem>>, %arg1: memref<128x128xbf16, #tpu.memory_space<vmem>>, %arg2: memref<1x128xf32, #tpu.memory_space<vmem>>, %arg3: memref<128x128xf32, #tpu.memory_space<vmem>>, %arg4: memref<1x128xf32, #tpu.memory_space<vmem>>, %arg5: memref<1x128xf32, #tpu.memory_space<vmem>>, %arg6: memref<128x128xf32, #tpu.memory_space<vmem>>, %arg7: memref<1x128xf32, #tpu.memory_space<vmem>>, %arg8: memref<1x128xf32, #tpu.memory_space<vmem>>, %arg9: memref<128x128xf32, #tpu.memory_space<vmem>>, %arg10: memref<1x128xf32, #tpu.memory_space<vmem>>, %arg11: memref<128x128xf32, #tpu.memory_space<vmem>>, %arg12: memref<1x128xf32, #tpu.memory_space<vmem>>, %arg13: memref<1x128xf32, #tpu.memory_space<vmem>>, %arg14: memref<128x128xf32, #tpu.memory_space<vmem>>, %arg15: memref<1x128xf32, #tpu.memory_space<vmem>>, %arg16: memref<8x128xf32, #tpu.memory_space<vmem>>, %arg17: memref<8x128xf32, #tpu.memory_space<vmem>>) attributes {dimension_semantics = [], scalar_prefetch = 0 : i64, scratch_operands = 0 : i64, tpu.core_type = #tpu.core_type<tc>} {
    %c0 = arith.constant 0 : index
    %c0_0 = arith.constant 0 : index
    %0 = vector.load %arg0[%c0, %c0_0] : memref<2048x128xbf16, #tpu.memory_space<vmem>>, vector<2048x128xbf16>
    %c0_1 = arith.constant 0 : index
    %c0_2 = arith.constant 0 : index
    %1 = vector.load %arg1[%c0_1, %c0_2] : memref<128x128xbf16, #tpu.memory_space<vmem>>, vector<128x128xbf16>
    %cst = arith.constant dense<0.000000e+00> : vector<2048x128xf32>
    %2 = tpu.matmul %0, %1, %cst {dimension_numbers = #tpu.dot_dimension_numbers<[1], [0], [0], [1], [0, 0, 1, 1], [], []>} : vector<2048x128xbf16>, vector<128x128xbf16>, vector<2048x128xf32> -> vector<2048x128xf32>
    %c0_3 = arith.constant 0 : index
    %c0_4 = arith.constant 0 : index
    %3 = vector.load %arg2[%c0_3, %c0_4] : memref<1x128xf32, #tpu.memory_space<vmem>>, vector<1x128xf32>
    %4 = vector.broadcast %3 : vector<1x128xf32> to vector<2048x128xf32>
    %5 = arith.addf %2, %4 : vector<2048x128xf32>
    %cst_5 = arith.constant 0.000000e+00 : f32
    %6 = vector.broadcast %cst_5 : f32 to vector<2048x128xf32>
    %7 = arith.maximumf %5, %6 : vector<2048x128xf32>
    %8 = vector.shape_cast %7 : vector<2048x128xf32> to vector<8x256x128xf32>
    %cst_6 = arith.constant dense<0.000000e+00> : vector<8x128xf32>
    %9 = vector.multi_reduction <add>, %8, %cst_6 [1] : vector<8x256x128xf32> to vector<8x128xf32>
    %cst_7 = arith.constant 3.906250e-03 : f32
    %10 = vector.broadcast %cst_7 : f32 to vector<8x128xf32>
    %11 = arith.mulf %9, %10 : vector<8x128xf32>
    %c0_8 = arith.constant 0 : index
    %c0_9 = arith.constant 0 : index
    %12 = vector.load %arg3[%c0_8, %c0_9] : memref<128x128xf32, #tpu.memory_space<vmem>>, vector<128x128xf32>
    %cst_10 = arith.constant dense<0.000000e+00> : vector<8x128xf32>
    %13 = tpu.matmul %11, %12, %cst_10 {dimension_numbers = #tpu.dot_dimension_numbers<[1], [0], [0], [1], [0, 0, 1, 1], [], []>, precision = #tpu.contract_precision<fp32>} : vector<8x128xf32>, vector<128x128xf32>, vector<8x128xf32> -> vector<8x128xf32>
    %c0_11 = arith.constant 0 : index
    %c0_12 = arith.constant 0 : index
    %14 = vector.load %arg4[%c0_11, %c0_12] : memref<1x128xf32, #tpu.memory_space<vmem>>, vector<1x128xf32>
    %c0_13 = arith.constant 0 : index
    %c0_14 = arith.constant 0 : index
    %15 = vector.load %arg5[%c0_13, %c0_14] : memref<1x128xf32, #tpu.memory_space<vmem>>, vector<1x128xf32>
    %cst_15 = arith.constant dense<0.000000e+00> : vector<128xf32>
    %16 = vector.multi_reduction <add>, %13, %cst_15 [0] : vector<8x128xf32> to vector<128xf32>
    %17 = vector.shape_cast %16 : vector<128xf32> to vector<1x128xf32>
    %cst_16 = arith.constant 8.000000e+00 : f32
    %18 = vector.broadcast %cst_16 : f32 to vector<1x128xf32>
    %19 = arith.divf %17, %18 : vector<1x128xf32>
    %20 = vector.broadcast %19 : vector<1x128xf32> to vector<8x128xf32>
    %21 = arith.subf %13, %20 : vector<8x128xf32>
    %22 = arith.mulf %21, %21 : vector<8x128xf32>
    %cst_17 = arith.constant dense<0.000000e+00> : vector<128xf32>
    %23 = vector.multi_reduction <add>, %22, %cst_17 [0] : vector<8x128xf32> to vector<128xf32>
    %24 = vector.shape_cast %23 : vector<128xf32> to vector<1x128xf32>
    %cst_18 = arith.constant 8.000000e+00 : f32
    %25 = vector.broadcast %cst_18 : f32 to vector<1x128xf32>
    %26 = arith.divf %24, %25 : vector<1x128xf32>
    %27 = vector.broadcast %19 : vector<1x128xf32> to vector<8x128xf32>
    %28 = arith.subf %13, %27 : vector<8x128xf32>
    %cst_19 = arith.constant 9.99999974E-6 : f32
    %29 = vector.broadcast %cst_19 : f32 to vector<1x128xf32>
    %30 = arith.addf %26, %29 : vector<1x128xf32>
    %31 = math.rsqrt %30 : vector<1x128xf32>
    %32 = vector.broadcast %31 : vector<1x128xf32> to vector<8x128xf32>
    %33 = arith.mulf %28, %32 : vector<8x128xf32>
    %34 = vector.broadcast %14 : vector<1x128xf32> to vector<8x128xf32>
    %35 = arith.mulf %33, %34 : vector<8x128xf32>
    %36 = vector.broadcast %15 : vector<1x128xf32> to vector<8x128xf32>
    %37 = arith.addf %35, %36 : vector<8x128xf32>
    %cst_20 = arith.constant 0.000000e+00 : f32
    %38 = vector.broadcast %cst_20 : f32 to vector<8x128xf32>
    %39 = arith.maximumf %37, %38 : vector<8x128xf32>
    %c0_21 = arith.constant 0 : index
    %c0_22 = arith.constant 0 : index
    %40 = vector.load %arg6[%c0_21, %c0_22] : memref<128x128xf32, #tpu.memory_space<vmem>>, vector<128x128xf32>
    %cst_23 = arith.constant dense<0.000000e+00> : vector<8x128xf32>
    %41 = tpu.matmul %39, %40, %cst_23 {dimension_numbers = #tpu.dot_dimension_numbers<[1], [0], [0], [1], [0, 0, 1, 1], [], []>, precision = #tpu.contract_precision<fp32>} : vector<8x128xf32>, vector<128x128xf32>, vector<8x128xf32> -> vector<8x128xf32>
    %c0_24 = arith.constant 0 : index
    %c0_25 = arith.constant 0 : index
    %42 = vector.load %arg7[%c0_24, %c0_25] : memref<1x128xf32, #tpu.memory_space<vmem>>, vector<1x128xf32>
    %c0_26 = arith.constant 0 : index
    %c0_27 = arith.constant 0 : index
    %43 = vector.load %arg8[%c0_26, %c0_27] : memref<1x128xf32, #tpu.memory_space<vmem>>, vector<1x128xf32>
    %cst_28 = arith.constant dense<0.000000e+00> : vector<128xf32>
    %44 = vector.multi_reduction <add>, %41, %cst_28 [0] : vector<8x128xf32> to vector<128xf32>
    %45 = vector.shape_cast %44 : vector<128xf32> to vector<1x128xf32>
    %cst_29 = arith.constant 8.000000e+00 : f32
    %46 = vector.broadcast %cst_29 : f32 to vector<1x128xf32>
    %47 = arith.divf %45, %46 : vector<1x128xf32>
    %48 = vector.broadcast %47 : vector<1x128xf32> to vector<8x128xf32>
    %49 = arith.subf %41, %48 : vector<8x128xf32>
    %50 = arith.mulf %49, %49 : vector<8x128xf32>
    %cst_30 = arith.constant dense<0.000000e+00> : vector<128xf32>
    %51 = vector.multi_reduction <add>, %50, %cst_30 [0] : vector<8x128xf32> to vector<128xf32>
    %52 = vector.shape_cast %51 : vector<128xf32> to vector<1x128xf32>
    %cst_31 = arith.constant 8.000000e+00 : f32
    %53 = vector.broadcast %cst_31 : f32 to vector<1x128xf32>
    %54 = arith.divf %52, %53 : vector<1x128xf32>
    %55 = vector.broadcast %47 : vector<1x128xf32> to vector<8x128xf32>
    %56 = arith.subf %41, %55 : vector<8x128xf32>
    %cst_32 = arith.constant 9.99999974E-6 : f32
    %57 = vector.broadcast %cst_32 : f32 to vector<1x128xf32>
    %58 = arith.addf %54, %57 : vector<1x128xf32>
    %59 = math.rsqrt %58 : vector<1x128xf32>
    %60 = vector.broadcast %59 : vector<1x128xf32> to vector<8x128xf32>
    %61 = arith.mulf %56, %60 : vector<8x128xf32>
    %62 = vector.broadcast %42 : vector<1x128xf32> to vector<8x128xf32>
    %63 = arith.mulf %61, %62 : vector<8x128xf32>
    %64 = vector.broadcast %43 : vector<1x128xf32> to vector<8x128xf32>
    %65 = arith.addf %63, %64 : vector<8x128xf32>
    %cst_33 = arith.constant 0.000000e+00 : f32
    %66 = vector.broadcast %cst_33 : f32 to vector<8x128xf32>
    %67 = arith.maximumf %65, %66 : vector<8x128xf32>
    %c0_34 = arith.constant 0 : index
    %c0_35 = arith.constant 0 : index
    %68 = vector.load %arg9[%c0_34, %c0_35] : memref<128x128xf32, #tpu.memory_space<vmem>>, vector<128x128xf32>
    %cst_36 = arith.constant dense<0.000000e+00> : vector<8x128xf32>
    %69 = tpu.matmul %67, %68, %cst_36 {dimension_numbers = #tpu.dot_dimension_numbers<[1], [0], [0], [1], [0, 0, 1, 1], [], []>, precision = #tpu.contract_precision<fp32>} : vector<8x128xf32>, vector<128x128xf32>, vector<8x128xf32> -> vector<8x128xf32>
    %c0_37 = arith.constant 0 : index
    %c0_38 = arith.constant 0 : index
    %70 = vector.load %arg10[%c0_37, %c0_38] : memref<1x128xf32, #tpu.memory_space<vmem>>, vector<1x128xf32>
    %71 = vector.broadcast %70 : vector<1x128xf32> to vector<8x128xf32>
    %72 = arith.addf %69, %71 : vector<8x128xf32>
    %cst_39 = arith.constant dense<0.000000e+00> : vector<128xf32>
    %73 = vector.multi_reduction <add>, %72, %cst_39 [0] : vector<8x128xf32> to vector<128xf32>
    %74 = vector.shape_cast %73 : vector<128xf32> to vector<1x128xf32>
    %cst_40 = arith.constant 8.000000e+00 : f32
    %75 = vector.broadcast %cst_40 : f32 to vector<1x128xf32>
    %76 = arith.divf %74, %75 : vector<1x128xf32>
    %77 = vector.broadcast %76 : vector<1x128xf32> to vector<8x128xf32>
    %78 = arith.subf %72, %77 : vector<8x128xf32>
    %79 = arith.mulf %78, %78 : vector<8x128xf32>
    %cst_41 = arith.constant dense<0.000000e+00> : vector<128xf32>
    %80 = vector.multi_reduction <add>, %79, %cst_41 [0] : vector<8x128xf32> to vector<128xf32>
    %81 = vector.shape_cast %80 : vector<128xf32> to vector<1x128xf32>
    %cst_42 = arith.constant 8.000000e+00 : f32
    %82 = vector.broadcast %cst_42 : f32 to vector<1x128xf32>
    %83 = arith.divf %81, %82 : vector<1x128xf32>
    %84 = vector.broadcast %76 : vector<1x128xf32> to vector<8x128xf32>
    %85 = arith.subf %72, %84 : vector<8x128xf32>
    %cst_43 = arith.constant 9.99999974E-6 : f32
    %86 = vector.broadcast %cst_43 : f32 to vector<1x128xf32>
    %87 = arith.addf %83, %86 : vector<1x128xf32>
    %88 = math.rsqrt %87 : vector<1x128xf32>
    %89 = vector.broadcast %88 : vector<1x128xf32> to vector<8x128xf32>
    %90 = arith.mulf %85, %89 : vector<8x128xf32>
    %c0_44 = arith.constant 0 : index
    %c0_45 = arith.constant 0 : index
    %91 = vector.load %arg16[%c0_44, %c0_45] : memref<8x128xf32, #tpu.memory_space<vmem>>, vector<8x128xf32>
    tpu.vector_store %arg16[%c0_44, %c0_45], %90 {strides = array<i32>} : memref<8x128xf32, #tpu.memory_space<vmem>>, vector<8x128xf32>,
    %c0_46 = arith.constant 0 : index
    %c0_47 = arith.constant 0 : index
    %92 = vector.load %arg11[%c0_46, %c0_47] : memref<128x128xf32, #tpu.memory_space<vmem>>, vector<128x128xf32>
    %cst_48 = arith.constant dense<0.000000e+00> : vector<8x128xf32>
    %93 = tpu.matmul %90, %92, %cst_48 {dimension_numbers = #tpu.dot_dimension_numbers<[1], [0], [0], [1], [0, 0, 1, 1], [], []>, precision = #tpu.contract_precision<fp32>} : vector<8x128xf32>, vector<128x128xf32>, vector<8x128xf32> -> vector<8x128xf32>
    %c0_49 = arith.constant 0 : index
    %c0_50 = arith.constant 0 : index
    %94 = vector.load %arg12[%c0_49, %c0_50] : memref<1x128xf32, #tpu.memory_space<vmem>>, vector<1x128xf32>
    %c0_51 = arith.constant 0 : index
    %c0_52 = arith.constant 0 : index
    %95 = vector.load %arg13[%c0_51, %c0_52] : memref<1x128xf32, #tpu.memory_space<vmem>>, vector<1x128xf32>
    %cst_53 = arith.constant dense<0.000000e+00> : vector<128xf32>
    %96 = vector.multi_reduction <add>, %93, %cst_53 [0] : vector<8x128xf32> to vector<128xf32>
    %97 = vector.shape_cast %96 : vector<128xf32> to vector<1x128xf32>
    %cst_54 = arith.constant 8.000000e+00 : f32
    %98 = vector.broadcast %cst_54 : f32 to vector<1x128xf32>
    %99 = arith.divf %97, %98 : vector<1x128xf32>
    %100 = vector.broadcast %99 : vector<1x128xf32> to vector<8x128xf32>
    %101 = arith.subf %93, %100 : vector<8x128xf32>
    %102 = arith.mulf %101, %101 : vector<8x128xf32>
    %cst_55 = arith.constant dense<0.000000e+00> : vector<128xf32>
    %103 = vector.multi_reduction <add>, %102, %cst_55 [0] : vector<8x128xf32> to vector<128xf32>
    %104 = vector.shape_cast %103 : vector<128xf32> to vector<1x128xf32>
    %cst_56 = arith.constant 8.000000e+00 : f32
    %105 = vector.broadcast %cst_56 : f32 to vector<1x128xf32>
    %106 = arith.divf %104, %105 : vector<1x128xf32>
    %107 = vector.broadcast %99 : vector<1x128xf32> to vector<8x128xf32>
    %108 = arith.subf %93, %107 : vector<8x128xf32>
    %cst_57 = arith.constant 9.99999974E-6 : f32
    %109 = vector.broadcast %cst_57 : f32 to vector<1x128xf32>
    %110 = arith.addf %106, %109 : vector<1x128xf32>
    %111 = math.rsqrt %110 : vector<1x128xf32>
    %112 = vector.broadcast %111 : vector<1x128xf32> to vector<8x128xf32>
    %113 = arith.mulf %108, %112 : vector<8x128xf32>
    %114 = vector.broadcast %94 : vector<1x128xf32> to vector<8x128xf32>
    %115 = arith.mulf %113, %114 : vector<8x128xf32>
    %116 = vector.broadcast %95 : vector<1x128xf32> to vector<8x128xf32>
    %117 = arith.addf %115, %116 : vector<8x128xf32>
    %cst_58 = arith.constant 0.000000e+00 : f32
    %118 = vector.broadcast %cst_58 : f32 to vector<8x128xf32>
    %119 = arith.maximumf %117, %118 : vector<8x128xf32>
    %c0_59 = arith.constant 0 : index
    %c0_60 = arith.constant 0 : index
    %120 = vector.load %arg14[%c0_59, %c0_60] : memref<128x128xf32, #tpu.memory_space<vmem>>, vector<128x128xf32>
    %cst_61 = arith.constant dense<0.000000e+00> : vector<8x128xf32>
    %121 = tpu.matmul %119, %120, %cst_61 {dimension_numbers = #tpu.dot_dimension_numbers<[1], [0], [0], [1], [0, 0, 1, 1], [], []>, precision = #tpu.contract_precision<fp32>} : vector<8x128xf32>, vector<128x128xf32>, vector<8x128xf32> -> vector<8x128xf32>
    %c0_62 = arith.constant 0 : index
    %c0_63 = arith.constant 0 : index
    %122 = vector.load %arg15[%c0_62, %c0_63] : memref<1x128xf32, #tpu.memory_space<vmem>>, vector<1x128xf32>
    %123 = vector.broadcast %122 : vector<1x128xf32> to vector<8x128xf32>
    %124 = arith.addf %121, %123 : vector<8x128xf32>
    %c0_64 = arith.constant 0 : index
    %c0_65 = arith.constant 0 : index
    %125 = vector.load %arg17[%c0_64, %c0_65] : memref<8x128xf32, #tpu.memory_space<vmem>>, vector<8x128xf32>
    tpu.vector_store %arg17[%c0_64, %c0_65], %124 {strides = array<i32>} : memref<8x128xf32, #tpu.memory_space<vmem>>, vector<8x128xf32>,
    return
  }
}

</mosaic_0001>

<llo_original>
// kernel: network_forward.1
$region0: #{network_forward.1}
  #allocation0 [shape = 'u32[]', space=smem, size = 0x4, offset = 0x4, fixed_abs, tag = 'smem constant byte address 0x4 - core index']
  #allocation1 [shape = 'u32[144,128]{1,0:T(1,128)}', space=vmem, size = 0x12000, scoped, tag = 'internal scratch']
  %s0 = inlined_call_operand.vmem [shape: bf16[2048,128], index: 0, kind: input, shape index: {}]
  %s1 = inlined_call_operand.vmem [shape: bf16[128,128], index: 1, kind: input, shape index: {}]
  %s2 = inlined_call_operand.vmem [shape: f32[1,128], index: 2, kind: input, shape index: {}]
  %s3 = inlined_call_operand.vmem [shape: f32[128,128], index: 3, kind: input, shape index: {}]
  %s4 = inlined_call_operand.vmem [shape: f32[1,128], index: 4, kind: input, shape index: {}]
  %s5 = inlined_call_operand.vmem [shape: f32[1,128], index: 5, kind: input, shape index: {}]
  %s6 = inlined_call_operand.vmem [shape: f32[128,128], index: 6, kind: input, shape index: {}]
  %s7 = inlined_call_operand.vmem [shape: f32[1,128], index: 7, kind: input, shape index: {}]
  %s8 = inlined_call_operand.vmem [shape: f32[1,128], index: 8, kind: input, shape index: {}]
  %s9 = inlined_call_operand.vmem [shape: f32[128,128], index: 9, kind: input, shape index: {}]
  %s10 = inlined_call_operand.vmem [shape: f32[1,128], index: 10, kind: input, shape index: {}]
  %s11 = inlined_call_operand.vmem [shape: f32[128,128], index: 11, kind: input, shape index: {}]
  %s12 = inlined_call_operand.vmem [shape: f32[1,128], index: 12, kind: input, shape index: {}]
  %s13 = inlined_call_operand.vmem [shape: f32[1,128], index: 13, kind: input, shape index: {}]
  %s14 = inlined_call_operand.vmem [shape: f32[128,128], index: 14, kind: input, shape index: {}]
  %s15 = inlined_call_operand.vmem [shape: f32[1,128], index: 15, kind: input, shape index: {}]
  %s16 = inlined_call_operand.hbm [shape: f32[8,128], index: 16, kind: output, shape index: {0}]
  %s17 = inlined_call_operand.hbm [shape: f32[8,128], index: 17, kind: output, shape index: {1}]
  %18 = xla_tuple %s16, %s17
  %s19 = sld [smem:[#allocation0]]
  $region82: #{network_forward.1} parent=0
    _
  %s21 = ssub.s32 1, %s19
  %s22 = scalar_select 0, %s21, %s19
  $region1: #{network_forward.1} parent=0
    #allocation2 [shape = 'u8[4096]{0}', space=vmem, size = 0x1000, scoped, tag = 'output window, operand 0, single buffered']
    #allocation3 [shape = 's32[1]{0}', space=sflag, size = 0x4, scoped, tag = 'scoped memory for network_forward.1']
    #allocation4 [shape = 'u8[4096]{0}', space=vmem, size = 0x1000, scoped, tag = 'output window, operand 1, single buffered']
    #allocation5 [shape = 's32[1]{0}', space=sflag, size = 0x4, scoped, tag = 'scoped memory for network_forward.1']
    %23 = vsyncpa [#allocation3], 0
    %24 = vsyncpa [#allocation5], 0
    // Predicated region
    $region2: #{network_forward.1} parent=1 // pred_check
      _
    $region3: #{network_forward.1} parent=1 // pred_check_branch
      %26 = sbr.rel (0) target = $region5
    $region4: #{network_forward.1} parent=1 // pred_region
      _
    $region5: #{network_forward.1} parent=1 // pred_fallthru
      _
    // Predicated region
    $region6: #{network_forward.1} parent=1 // pred_check
      _
    $region7: #{network_forward.1} parent=1 // pred_check_branch
      %28 = sbr.rel (0) target = $region9
    $region8: #{network_forward.1} parent=1 // pred_region
      _
    $region9: #{network_forward.1} parent=1 // pred_fallthru
      _
    // Predicated region
    $region10: #{network_forward.1} parent=1 // pred_check
      _
    $region11: #{network_forward.1} parent=1 // pred_check_branch
      %30 = sbr.rel (0) target = $region13
    $region12: #{network_forward.1} parent=1 // pred_region
      _
    $region13: #{network_forward.1} parent=1 // pred_fallthru
      _
    // Predicated region
    $region14: #{network_forward.1} parent=1 // pred_check
      _
    $region15: #{network_forward.1} parent=1 // pred_check_branch
      %32 = sbr.rel (0) target = $region17
    $region16: #{network_forward.1} parent=1 // pred_region
      _
    $region17: #{network_forward.1} parent=1 // pred_fallthru
      _
    // Predicated region
    $region18: #{network_forward.1} parent=1 // pred_check
      _
    $region19: #{network_forward.1} parent=1 // pred_check_branch
      %34 = sbr.rel (0) target = $region21
    $region20: #{network_forward.1} parent=1 // pred_region
      _
    $region21: #{network_forward.1} parent=1 // pred_fallthru
      _
    // Predicated region
    $region22: #{network_forward.1} parent=1 // pred_check
      _
    $region23: #{network_forward.1} parent=1 // pred_check_branch
      %36 = sbr.rel (0) target = $region25
    $region24: #{network_forward.1} parent=1 // pred_region
      _
    $region25: #{network_forward.1} parent=1 // pred_fallthru
      _
    // Predicated region
    $region26: #{network_forward.1} parent=1 // pred_check
      _
    $region27: #{network_forward.1} parent=1 // pred_check_branch
      %38 = sbr.rel (0) target = $region29
    $region28: #{network_forward.1} parent=1 // pred_region
      _
    $region29: #{network_forward.1} parent=1 // pred_fallthru
      _
    // Predicated region
    $region30: #{network_forward.1} parent=1 // pred_check
      _
    $region31: #{network_forward.1} parent=1 // pred_check_branch
      %40 = sbr.rel (0) target = $region33
    $region32: #{network_forward.1} parent=1 // pred_region
      _
    $region33: #{network_forward.1} parent=1 // pred_fallthru
      _
    // Predicated region
    $region34: #{network_forward.1} parent=1 // pred_check
      _
    $region35: #{network_forward.1} parent=1 // pred_check_branch
      %42 = sbr.rel (0) target = $region37
    $region36: #{network_forward.1} parent=1 // pred_region
      _
    $region37: #{network_forward.1} parent=1 // pred_fallthru
      _
    // Predicated region
    $region38: #{network_forward.1} parent=1 // pred_check
      _
    $region39: #{network_forward.1} parent=1 // pred_check_branch
      %44 = sbr.rel (0) target = $region41
    $region40: #{network_forward.1} parent=1 // pred_region
      _
    $region41: #{network_forward.1} parent=1 // pred_fallthru
      _
    // Predicated region
    $region42: #{network_forward.1} parent=1 // pred_check
      _
    $region43: #{network_forward.1} parent=1 // pred_check_branch
      %46 = sbr.rel (0) target = $region45
    $region44: #{network_forward.1} parent=1 // pred_region
      _
    $region45: #{network_forward.1} parent=1 // pred_fallthru
      _
    // Predicated region
    $region46: #{network_forward.1} parent=1 // pred_check
      _
    $region47: #{network_forward.1} parent=1 // pred_check_branch
      %48 = sbr.rel (0) target = $region49
    $region48: #{network_forward.1} parent=1 // pred_region
      _
    $region49: #{network_forward.1} parent=1 // pred_fallthru
      _
    // Predicated region
    $region50: #{network_forward.1} parent=1 // pred_check
      _
    $region51: #{network_forward.1} parent=1 // pred_check_branch
      %50 = sbr.rel (0) target = $region53
    $region52: #{network_forward.1} parent=1 // pred_region
      _
    $region53: #{network_forward.1} parent=1 // pred_fallthru
      _
    // Predicated region
    $region54: #{network_forward.1} parent=1 // pred_check
      _
    $region55: #{network_forward.1} parent=1 // pred_check_branch
      %52 = sbr.rel (0) target = $region57
    $region56: #{network_forward.1} parent=1 // pred_region
      _
    $region57: #{network_forward.1} parent=1 // pred_fallthru
      _
    // Predicated region
    $region58: #{network_forward.1} parent=1 // pred_check
      _
    $region59: #{network_forward.1} parent=1 // pred_check_branch
      %54 = sbr.rel (0) target = $region61
    $region60: #{network_forward.1} parent=1 // pred_region
      _
    $region61: #{network_forward.1} parent=1 // pred_fallthru
      _
    // Predicated region
    $region62: #{network_forward.1} parent=1 // pred_check
      _
    $region63: #{network_forward.1} parent=1 // pred_check_branch
      %56 = sbr.rel (0) target = $region65
    $region64: #{network_forward.1} parent=1 // pred_region
      _
    $region65: #{network_forward.1} parent=1 // pred_fallthru
      _
    %v58 = vld [vmem:[%s0] sm:$0xf]
    %v59 = vld [vmem:[%s0 + $0x4] sm:$0xf]
    %v60 = vld [vmem:[%s0 + $0x8] sm:$0xf]
    %v61 = vld [vmem:[%s0 + $0xc] sm:$0xf]
    %v62 = vld [vmem:[%s0 + $0x10] sm:$0xf]
    %v63 = vld [vmem:[%s0 + $0x14] sm:$0xf]
    %v64 = vld [vmem:[%s0 + $0x18] sm:$0xf]
    %v65 = vld [vmem:[%s0 + $0x1c] sm:$0xf]
    %v66 = vld [vmem:[%s0 + $0x20] sm:$0xf]
    %v67 = vld [vmem:[%s0 + $0x24] sm:$0xf]
    %v68 = vld [vmem:[%s0 + $0x28] sm:$0xf]
    %v69 = vld [vmem:[%s0 + $0x2c] sm:$0xf]
    %v70 = vld [vmem:[%s0 + $0x30] sm:$0xf]
    %v71 = vld [vmem:[%s0 + $0x34] sm:$0xf]
    %v72 = vld [vmem:[%s0 + $0x38] sm:$0xf]
    %v73 = vld [vmem:[%s0 + $0x3c] sm:$0xf]
    %v74 = vld [vmem:[%s0 + $0x40] sm:$0xf]
    %v75 = vld [vmem:[%s0 + $0x44] sm:$0xf]
    %v76 = vld [vmem:[%s0 + $0x48] sm:$0xf]
    %v77 = vld [vmem:[%s0 + $0x4c] sm:$0xf]
    %v78 = vld [vmem:[%s0 + $0x50] sm:$0xf]
    %v79 = vld [vmem:[%s0 + $0x54] sm:$0xf]
    %v80 = vld [vmem:[%s0 + $0x58] sm:$0xf]
    %v81 = vld [vmem:[%s0 + $0x5c] sm:$0xf]
    %v82 = vld [vmem:[%s0 + $0x60] sm:$0xf]
    %v83 = vld [vmem:[%s0 + $0x64] sm:$0xf]
    %v84 = vld [vmem:[%s0 + $0x68] sm:$0xf]
    %v85 = vld [vmem:[%s0 + $0x6c] sm:$0xf]
    %v86 = vld [vmem:[%s0 + $0x70] sm:$0xf]
    %v87 = vld [vmem:[%s0 + $0x74] sm:$0xf]
    %v88 = vld [vmem:[%s0 + $0x78] sm:$0xf]
    %v89 = vld [vmem:[%s0 + $0x7c] sm:$0xf]
    %v90 = vld [vmem:[%s0 + $0x80] sm:$0xf]
    %v91 = vld [vmem:[%s0 + $0x84] sm:$0xf]
    %v92 = vld [vmem:[%s0 + $0x88] sm:$0xf]
    %v93 = vld [vmem:[%s0 + $0x8c] sm:$0xf]
    %v94 = vld [vmem:[%s0 + $0x90] sm:$0xf]
    %v95 = vld [vmem:[%s0 + $0x94] sm:$0xf]
    %v96 = vld [vmem:[%s0 + $0x98] sm:$0xf]
    %v97 = vld [vmem:[%s0 + $0x9c] sm:$0xf]
    %v98 = vld [vmem:[%s0 + $0xa0] sm:$0xf]
    %v99 = vld [vmem:[%s0 + $0xa4] sm:$0xf]
    %v100 = vld [vmem:[%s0 + $0xa8] sm:$0xf]
    %v101 = vld [vmem:[%s0 + $0xac] sm:$0xf]
    %v102 = vld [vmem:[%s0 + $0xb0] sm:$0xf]
    %v103 = vld [vmem:[%s0 + $0xb4] sm:$0xf]
    %v104 = vld [vmem:[%s0 + $0xb8] sm:$0xf]
    %v105 = vld [vmem:[%s0 + $0xbc] sm:$0xf]
    %v106 = vld [vmem:[%s0 + $0xc0] sm:$0xf]
    %v107 = vld [vmem:[%s0 + $0xc4] sm:$0xf]
    %v108 = vld [vmem:[%s0 + $0xc8] sm:$0xf]
    %v109 = vld [vmem:[%s0 + $0xcc] sm:$0xf]
    %v110 = vld [vmem:[%s0 + $0xd0] sm:$0xf]
    %v111 = vld [vmem:[%s0 + $0xd4] sm:$0xf]
    %v112 = vld [vmem:[%s0 + $0xd8] sm:$0xf]
    %v113 = vld [vmem:[%s0 + $0xdc] sm:$0xf]
    %v114 = vld [vmem:[%s0 + $0xe0] sm:$0xf]
    %v115 = vld [vmem:[%s0 + $0xe4] sm:$0xf]
    %v116 = vld [vmem:[%s0 + $0xe8] sm:$0xf]
    %v117 = vld [vmem:[%s0 + $0xec] sm:$0xf]
    %v118 = vld [vmem:[%s0 + $0xf0] sm:$0xf]
    %v119 = vld [vmem:[%s0 + $0xf4] sm:$0xf]
    %v120 = vld [vmem:[%s0 + $0xf8] sm:$0xf]
    %v121 = vld [vmem:[%s0 + $0xfc] sm:$0xf]
    %v122 = vld [vmem:[%s0 + $0x100] sm:$0xf]
    %v123 = vld [vmem:[%s0 + $0x104] sm:$0xf]
    %v124 = vld [vmem:[%s0 + $0x108] sm:$0xf]
    %v125 = vld [vmem:[%s0 + $0x10c] sm:$0xf]
    %v126 = vld [vmem:[%s0 + $0x110] sm:$0xf]
    %v127 = vld [vmem:[%s0 + $0x114] sm:$0xf]
    %v128 = vld [vmem:[%s0 + $0x118] sm:$0xf]
    %v129 = vld [vmem:[%s0 + $0x11c] sm:$0xf]
    %v130 = vld [vmem:[%s0 + $0x120] sm:$0xf]
    %v131 = vld [vmem:[%s0 + $0x124] sm:$0xf]
    %v132 = vld [vmem:[%s0 + $0x128] sm:$0xf]
    %v133 = vld [vmem:[%s0 + $0x12c] sm:$0xf]
    %v134 = vld [vmem:[%s0 + $0x130] sm:$0xf]
    %v135 = vld [vmem:[%s0 + $0x134] sm:$0xf]
    %v136 = vld [vmem:[%s0 + $0x138] sm:$0xf]
    %v137 = vld [vmem:[%s0 + $0x13c] sm:$0xf]
    %v138 = vld [vmem:[%s0 + $0x140] sm:$0xf]
    %v139 = vld [vmem:[%s0 + $0x144] sm:$0xf]
    %v140 = vld [vmem:[%s0 + $0x148] sm:$0xf]
    %v141 = vld [vmem:[%s0 + $0x14c] sm:$0xf]
    %v142 = vld [vmem:[%s0 + $0x150] sm:$0xf]
    %v143 = vld [vmem:[%s0 + $0x154] sm:$0xf]
    %v144 = vld [vmem:[%s0 + $0x158] sm:$0xf]
    %v145 = vld [vmem:[%s0 + $0x15c] sm:$0xf]
    %v146 = vld [vmem:[%s0 + $0x160] sm:$0xf]
    %v147 = vld [vmem:[%s0 + $0x164] sm:$0xf]
    %v148 = vld [vmem:[%s0 + $0x168] sm:$0xf]
    %v149 = vld [vmem:[%s0 + $0x16c] sm:$0xf]
    %v150 = vld [vmem:[%s0 + $0x170] sm:$0xf]
    %v151 = vld [vmem:[%s0 + $0x174] sm:$0xf]
    %v152 = vld [vmem:[%s0 + $0x178] sm:$0xf]
    %v153 = vld [vmem:[%s0 + $0x17c] sm:$0xf]
    %v154 = vld [vmem:[%s0 + $0x180] sm:$0xf]
    %v155 = vld [vmem:[%s0 + $0x184] sm:$0xf]
    %v156 = vld [vmem:[%s0 + $0x188] sm:$0xf]
    %v157 = vld [vmem:[%s0 + $0x18c] sm:$0xf]
    %v158 = vld [vmem:[%s0 + $0x190] sm:$0xf]
    %v159 = vld [vmem:[%s0 + $0x194] sm:$0xf]
    %v160 = vld [vmem:[%s0 + $0x198] sm:$0xf]
    %v161 = vld [vmem:[%s0 + $0x19c] sm:$0xf]
    %v162 = vld [vmem:[%s0 + $0x1a0] sm:$0xf]
    %v163 = vld [vmem:[%s0 + $0x1a4] sm:$0xf]
    %v164 = vld [vmem:[%s0 + $0x1a8] sm:$0xf]
    %v165 = vld [vmem:[%s0 + $0x1ac] sm:$0xf]
    %v166 = vld [vmem:[%s0 + $0x1b0] sm:$0xf]
    %v167 = vld [vmem:[%s0 + $0x1b4] sm:$0xf]
    %v168 = vld [vmem:[%s0 + $0x1b8] sm:$0xf]
    %v169 = vld [vmem:[%s0 + $0x1bc] sm:$0xf]
    %v170 = vld [vmem:[%s0 + $0x1c0] sm:$0xf]
    %v171 = vld [vmem:[%s0 + $0x1c4] sm:$0xf]
    %v172 = vld [vmem:[%s0 + $0x1c8] sm:$0xf]
    %v173 = vld [vmem:[%s0 + $0x1cc] sm:$0xf]
    %v174 = vld [vmem:[%s0 + $0x1d0] sm:$0xf]
    %v175 = vld [vmem:[%s0 + $0x1d4] sm:$0xf]
    %v176 = vld [vmem:[%s0 + $0x1d8] sm:$0xf]
    %v177 = vld [vmem:[%s0 + $0x1dc] sm:$0xf]
    %v178 = vld [vmem:[%s0 + $0x1e0] sm:$0xf]
    %v179 = vld [vmem:[%s0 + $0x1e4] sm:$0xf]
    %v180 = vld [vmem:[%s0 + $0x1e8] sm:$0xf]
    %v181 = vld [vmem:[%s0 + $0x1ec] sm:$0xf]
    %v182 = vld [vmem:[%s0 + $0x1f0] sm:$0xf]
    %v183 = vld [vmem:[%s0 + $0x1f4] sm:$0xf]
    %v184 = vld [vmem:[%s0 + $0x1f8] sm:$0xf]
    %v185 = vld [vmem:[%s0 + $0x1fc] sm:$0xf]
    %v186 = vld [vmem:[%s0 + $0x200] sm:$0xf]
    %v187 = vld [vmem:[%s0 + $0x204] sm:$0xf]
    %v188 = vld [vmem:[%s0 + $0x208] sm:$0xf]
    %v189 = vld [vmem:[%s0 + $0x20c] sm:$0xf]
    %v190 = vld [vmem:[%s0 + $0x210] sm:$0xf]
    %v191 = vld [vmem:[%s0 + $0x214] sm:$0xf]
    %v192 = vld [vmem:[%s0 + $0x218] sm:$0xf]
    %v193 = vld [vmem:[%s0 + $0x21c] sm:$0xf]
    %v194 = vld [vmem:[%s0 + $0x220] sm:$0xf]
    %v195 = vld [vmem:[%s0 + $0x224] sm:$0xf]
    %v196 = vld [vmem:[%s0 + $0x228] sm:$0xf]
    %v197 = vld [vmem:[%s0 + $0x22c] sm:$0xf]
    %v198 = vld [vmem:[%s0 + $0x230] sm:$0xf]
    %v199 = vld [vmem:[%s0 + $0x234] sm:$0xf]
    %v200 = vld [vmem:[%s0 + $0x238] sm:$0xf]
    %v201 = vld [vmem:[%s0 + $0x23c] sm:$0xf]
    %v202 = vld [vmem:[%s0 + $0x240] sm:$0xf]
    %v203 = vld [vmem:[%s0 + $0x244] sm:$0xf]
    %v204 = vld [vmem:[%s0 + $0x248] sm:$0xf]
    %v205 = vld [vmem:[%s0 + $0x24c] sm:$0xf]
    %v206 = vld [vmem:[%s0 + $0x250] sm:$0xf]
    %v207 = vld [vmem:[%s0 + $0x254] sm:$0xf]
    %v208 = vld [vmem:[%s0 + $0x258] sm:$0xf]
    %v209 = vld [vmem:[%s0 + $0x25c] sm:$0xf]
    %v210 = vld [vmem:[%s0 + $0x260] sm:$0xf]
    %v211 = vld [vmem:[%s0 + $0x264] sm:$0xf]
    %v212 = vld [vmem:[%s0 + $0x268] sm:$0xf]
    %v213 = vld [vmem:[%s0 + $0x26c] sm:$0xf]
    %v214 = vld [vmem:[%s0 + $0x270] sm:$0xf]
    %v215 = vld [vmem:[%s0 + $0x274] sm:$0xf]
    %v216 = vld [vmem:[%s0 + $0x278] sm:$0xf]
    %v217 = vld [vmem:[%s0 + $0x27c] sm:$0xf]
    %v218 = vld [vmem:[%s0 + $0x280] sm:$0xf]
    %v219 = vld [vmem:[%s0 + $0x284] sm:$0xf]
    %v220 = vld [vmem:[%s0 + $0x288] sm:$0xf]
    %v221 = vld [vmem:[%s0 + $0x28c] sm:$0xf]
    %v222 = vld [vmem:[%s0 + $0x290] sm:$0xf]
    %v223 = vld [vmem:[%s0 + $0x294] sm:$0xf]
    %v224 = vld [vmem:[%s0 + $0x298] sm:$0xf]
    %v225 = vld [vmem:[%s0 + $0x29c] sm:$0xf]
    %v226 = vld [vmem:[%s0 + $0x2a0] sm:$0xf]
    %v227 = vld [vmem:[%s0 + $0x2a4] sm:$0xf]
    %v228 = vld [vmem:[%s0 + $0x2a8] sm:$0xf]
    %v229 = vld [vmem:[%s0 + $0x2ac] sm:$0xf]
    %v230 = vld [vmem:[%s0 + $0x2b0] sm:$0xf]
    %v231 = vld [vmem:[%s0 + $0x2b4] sm:$0xf]
    %v232 = vld [vmem:[%s0 + $0x2b8] sm:$0xf]
    %v233 = vld [vmem:[%s0 + $0x2bc] sm:$0xf]
    %v234 = vld [vmem:[%s0 + $0x2c0] sm:$0xf]
    %v235 = vld [vmem:[%s0 + $0x2c4] sm:$0xf]
    %v236 = vld [vmem:[%s0 + $0x2c8] sm:$0xf]
    %v237 = vld [vmem:[%s0 + $0x2cc] sm:$0xf]
    %v238 = vld [vmem:[%s0 + $0x2d0] sm:$0xf]
    %v239 = vld [vmem:[%s0 + $0x2d4] sm:$0xf]
    %v240 = vld [vmem:[%s0 + $0x2d8] sm:$0xf]
    %v241 = vld [vmem:[%s0 + $0x2dc] sm:$0xf]
    %v242 = vld [vmem:[%s0 + $0x2e0] sm:$0xf]
    %v243 = vld [vmem:[%s0 + $0x2e4] sm:$0xf]
    %v244 = vld [vmem:[%s0 + $0x2e8] sm:$0xf]
    %v245 = vld [vmem:[%s0 + $0x2ec] sm:$0xf]
    %v246 = vld [vmem:[%s0 + $0x2f0] sm:$0xf]
    %v247 = vld [vmem:[%s0 + $0x2f4] sm:$0xf]
    %v248 = vld [vmem:[%s0 + $0x2f8] sm:$0xf]
    %v249 = vld [vmem:[%s0 + $0x2fc] sm:$0xf]
    %v250 = vld [vmem:[%s0 + $0x300] sm:$0xf]
    %v251 = vld [vmem:[%s0 + $0x304] sm:$0xf]
    %v252 = vld [vmem:[%s0 + $0x308] sm:$0xf]
    %v253 = vld [vmem:[%s0 + $0x30c] sm:$0xf]
    %v254 = vld [vmem:[%s0 + $0x310] sm:$0xf]
    %v255 = vld [vmem:[%s0 + $0x314] sm:$0xf]
    %v256 = vld [vmem:[%s0 + $0x318] sm:$0xf]
    %v257 = vld [vmem:[%s0 + $0x31c] sm:$0xf]
    %v258 = vld [vmem:[%s0 + $0x320] sm:$0xf]
    %v259 = vld [vmem:[%s0 + $0x324] sm:$0xf]
    %v260 = vld [vmem:[%s0 + $0x328] sm:$0xf]
    %v261 = vld [vmem:[%s0 + $0x32c] sm:$0xf]
    %v262 = vld [vmem:[%s0 + $0x330] sm:$0xf]
    %v263 = vld [vmem:[%s0 + $0x334] sm:$0xf]
    %v264 = vld [vmem:[%s0 + $0x338] sm:$0xf]
    %v265 = vld [vmem:[%s0 + $0x33c] sm:$0xf]
    %v266 = vld [vmem:[%s0 + $0x340] sm:$0xf]
    %v267 = vld [vmem:[%s0 + $0x344] sm:$0xf]
    %v268 = vld [vmem:[%s0 + $0x348] sm:$0xf]
    %v269 = vld [vmem:[%s0 + $0x34c] sm:$0xf]
    %v270 = vld [vmem:[%s0 + $0x350] sm:$0xf]
    %v271 = vld [vmem:[%s0 + $0x354] sm:$0xf]
    %v272 = vld [vmem:[%s0 + $0x358] sm:$0xf]
    %v273 = vld [vmem:[%s0 + $0x35c] sm:$0xf]
    %v274 = vld [vmem:[%s0 + $0x360] sm:$0xf]
    %v275 = vld [vmem:[%s0 + $0x364] sm:$0xf]
    %v276 = vld [vmem:[%s0 + $0x368] sm:$0xf]
    %v277 = vld [vmem:[%s0 + $0x36c] sm:$0xf]
    %v278 = vld [vmem:[%s0 + $0x370] sm:$0xf]
    %v279 = vld [vmem:[%s0 + $0x374] sm:$0xf]
    %v280 = vld [vmem:[%s0 + $0x378] sm:$0xf]
    %v281 = vld [vmem:[%s0 + $0x37c] sm:$0xf]
    %v282 = vld [vmem:[%s0 + $0x380] sm:$0xf]
    %v283 = vld [vmem:[%s0 + $0x384] sm:$0xf]
    %v284 = vld [vmem:[%s0 + $0x388] sm:$0xf]
    %v285 = vld [vmem:[%s0 + $0x38c] sm:$0xf]
    %v286 = vld [vmem:[%s0 + $0x390] sm:$0xf]
    %v287 = vld [vmem:[%s0 + $0x394] sm:$0xf]
    %v288 = vld [vmem:[%s0 + $0x398] sm:$0xf]
    %v289 = vld [vmem:[%s0 + $0x39c] sm:$0xf]
    %v290 = vld [vmem:[%s0 + $0x3a0] sm:$0xf]
    %v291 = vld [vmem:[%s0 + $0x3a4] sm:$0xf]
    %v292 = vld [vmem:[%s0 + $0x3a8] sm:$0xf]
    %v293 = vld [vmem:[%s0 + $0x3ac] sm:$0xf]
    %v294 = vld [vmem:[%s0 + $0x3b0] sm:$0xf]
    %v295 = vld [vmem:[%s0 + $0x3b4] sm:$0xf]
    %v296 = vld [vmem:[%s0 + $0x3b8] sm:$0xf]
    %v297 = vld [vmem:[%s0 + $0x3bc] sm:$0xf]
    %v298 = vld [vmem:[%s0 + $0x3c0] sm:$0xf]
    %v299 = vld [vmem:[%s0 + $0x3c4] sm:$0xf]
    %v300 = vld [vmem:[%s0 + $0x3c8] sm:$0xf]
    %v301 = vld [vmem:[%s0 + $0x3cc] sm:$0xf]
    %v302 = vld [vmem:[%s0 + $0x3d0] sm:$0xf]
    %v303 = vld [vmem:[%s0 + $0x3d4] sm:$0xf]
    %v304 = vld [vmem:[%s0 + $0x3d8] sm:$0xf]
    %v305 = vld [vmem:[%s0 + $0x3dc] sm:$0xf]
    %v306 = vld [vmem:[%s0 + $0x3e0] sm:$0xf]
    %v307 = vld [vmem:[%s0 + $0x3e4] sm:$0xf]
    %v308 = vld [vmem:[%s0 + $0x3e8] sm:$0xf]
    %v309 = vld [vmem:[%s0 + $0x3ec] sm:$0xf]
    %v310 = vld [vmem:[%s0 + $0x3f0] sm:$0xf]
    %v311 = vld [vmem:[%s0 + $0x3f4] sm:$0xf]
    %v312 = vld [vmem:[%s0 + $0x3f8] sm:$0xf]
    %v313 = vld [vmem:[%s0 + $0x3fc] sm:$0xf]
    %v314 = vld [vmem:[%s1] sm:$0xf]
    %v315 = vld [vmem:[%s1 + $0x4] sm:$0xf]
    %v316 = vld [vmem:[%s1 + $0x8] sm:$0xf]
    %v317 = vld [vmem:[%s1 + $0xc] sm:$0xf]
    %v318 = vld [vmem:[%s1 + $0x10] sm:$0xf]
    %v319 = vld [vmem:[%s1 + $0x14] sm:$0xf]
    %v320 = vld [vmem:[%s1 + $0x18] sm:$0xf]
    %v321 = vld [vmem:[%s1 + $0x1c] sm:$0xf]
    %v322 = vld [vmem:[%s1 + $0x20] sm:$0xf]
    %v323 = vld [vmem:[%s1 + $0x24] sm:$0xf]
    %v324 = vld [vmem:[%s1 + $0x28] sm:$0xf]
    %v325 = vld [vmem:[%s1 + $0x2c] sm:$0xf]
    %v326 = vld [vmem:[%s1 + $0x30] sm:$0xf]
    %v327 = vld [vmem:[%s1 + $0x34] sm:$0xf]
    %v328 = vld [vmem:[%s1 + $0x38] sm:$0xf]
    %v329 = vld [vmem:[%s1 + $0x3c] sm:$0xf]
    %v330 = vld [vmem:[%s2] sm:$0x1]
    %v332 = vlaneseq
    %v333 = vshrl.u32 %v332, 7
    %v334 = vsub.s32 0, %v333
    %v335 = vrot.slane %v330, %v334
    %v593 = vunpack.c.l.b16 %v58
    %v594 = vunpack.c.l.b16 %v59
    %v595 = vunpack.c.l.b16 %v60
    %v596 = vunpack.c.l.b16 %v61
    %v597 = vunpack.c.l.b16 %v62
    %v598 = vunpack.c.l.b16 %v63
    %v599 = vunpack.c.l.b16 %v64
    %v600 = vunpack.c.l.b16 %v65
    %v601 = vunpack.c.l.b16 %v66
    %v602 = vunpack.c.l.b16 %v67
    %v603 = vunpack.c.l.b16 %v68
    %v604 = vunpack.c.l.b16 %v69
    %v605 = vunpack.c.l.b16 %v70
    %v606 = vunpack.c.l.b16 %v71
    %v607 = vunpack.c.l.b16 %v72
    %v608 = vunpack.c.l.b16 %v73
    %v609 = vunpack.c.l.b16 %v74
    %v610 = vunpack.c.l.b16 %v75
    %v611 = vunpack.c.l.b16 %v76
    %v612 = vunpack.c.l.b16 %v77
    %v613 = vunpack.c.l.b16 %v78
    %v614 = vunpack.c.l.b16 %v79
    %v615 = vunpack.c.l.b16 %v80
    %v616 = vunpack.c.l.b16 %v81
    %v617 = vunpack.c.l.b16 %v82
    %v618 = vunpack.c.l.b16 %v83
    %v619 = vunpack.c.l.b16 %v84
    %v620 = vunpack.c.l.b16 %v85
    %v621 = vunpack.c.l.b16 %v86
    %v622 = vunpack.c.l.b16 %v87
    %v623 = vunpack.c.l.b16 %v88
    %v624 = vunpack.c.l.b16 %v89
    %v625 = vunpack.c.l.b16 %v90
    %v626 = vunpack.c.l.b16 %v91
    %v627 = vunpack.c.l.b16 %v92
    %v628 = vunpack.c.l.b16 %v93
    %v629 = vunpack.c.l.b16 %v94
    %v630 = vunpack.c.l.b16 %v95
    %v631 = vunpack.c.l.b16 %v96
    %v632 = vunpack.c.l.b16 %v97
    %v633 = vunpack.c.l.b16 %v98
    %v634 = vunpack.c.l.b16 %v99
    %v635 = vunpack.c.l.b16 %v100
    %v636 = vunpack.c.l.b16 %v101
    %v637 = vunpack.c.l.b16 %v102
    %v638 = vunpack.c.l.b16 %v103
    %v639 = vunpack.c.l.b16 %v104
    %v640 = vunpack.c.l.b16 %v105
    %v641 = vunpack.c.l.b16 %v106
    %v642 = vunpack.c.l.b16 %v107
    %v643 = vunpack.c.l.b16 %v108
    %v644 = vunpack.c.l.b16 %v109
    %v645 = vunpack.c.l.b16 %v110
    %v646 = vunpack.c.l.b16 %v111
    %v647 = vunpack.c.l.b16 %v112
    %v648 = vunpack.c.l.b16 %v113
    %v649 = vunpack.c.l.b16 %v114
    %v650 = vunpack.c.l.b16 %v115
    %v651 = vunpack.c.l.b16 %v116
    %v652 = vunpack.c.l.b16 %v117
    %v653 = vunpack.c.l.b16 %v118
    %v654 = vunpack.c.l.b16 %v119
    %v655 = vunpack.c.l.b16 %v120
    %v656 = vunpack.c.l.b16 %v121
    %v657 = vunpack.c.l.b16 %v122
    %v658 = vunpack.c.l.b16 %v123
    %v659 = vunpack.c.l.b16 %v124
    %v660 = vunpack.c.l.b16 %v125
    %v661 = vunpack.c.l.b16 %v126
    %v662 = vunpack.c.l.b16 %v127
    %v663 = vunpack.c.l.b16 %v128
    %v664 = vunpack.c.l.b16 %v129
    %v665 = vunpack.c.l.b16 %v130
    %v666 = vunpack.c.l.b16 %v131
    %v667 = vunpack.c.l.b16 %v132
    %v668 = vunpack.c.l.b16 %v133
    %v669 = vunpack.c.l.b16 %v134
    %v670 = vunpack.c.l.b16 %v135
    %v671 = vunpack.c.l.b16 %v136
    %v672 = vunpack.c.l.b16 %v137
    %v673 = vunpack.c.l.b16 %v138
    %v674 = vunpack.c.l.b16 %v139
    %v675 = vunpack.c.l.b16 %v140
    %v676 = vunpack.c.l.b16 %v141
    %v677 = vunpack.c.l.b16 %v142
    %v678 = vunpack.c.l.b16 %v143
    %v679 = vunpack.c.l.b16 %v144
    %v680 = vunpack.c.l.b16 %v145
    %v681 = vunpack.c.l.b16 %v146
    %v682 = vunpack.c.l.b16 %v147
    %v683 = vunpack.c.l.b16 %v148
    %v684 = vunpack.c.l.b16 %v149
    %v685 = vunpack.c.l.b16 %v150
    %v686 = vunpack.c.l.b16 %v151
    %v687 = vunpack.c.l.b16 %v152
    %v688 = vunpack.c.l.b16 %v153
    %v689 = vunpack.c.l.b16 %v154
    %v690 = vunpack.c.l.b16 %v155
    %v691 = vunpack.c.l.b16 %v156
    %v692 = vunpack.c.l.b16 %v157
    %v693 = vunpack.c.l.b16 %v158
    %v694 = vunpack.c.l.b16 %v159
    %v695 = vunpack.c.l.b16 %v160
    %v696 = vunpack.c.l.b16 %v161
    %v697 = vunpack.c.l.b16 %v162
    %v698 = vunpack.c.l.b16 %v163
    %v699 = vunpack.c.l.b16 %v164
    %v700 = vunpack.c.l.b16 %v165
    %v701 = vunpack.c.l.b16 %v166
    %v702 = vunpack.c.l.b16 %v167
    %v703 = vunpack.c.l.b16 %v168
    %v704 = vunpack.c.l.b16 %v169
    %v705 = vunpack.c.l.b16 %v170
    %v706 = vunpack.c.l.b16 %v171
    %v707 = vunpack.c.l.b16 %v172
    %v708 = vunpack.c.l.b16 %v173
    %v709 = vunpack.c.l.b16 %v174
    %v710 = vunpack.c.l.b16 %v175
    %v711 = vunpack.c.l.b16 %v176
    %v712 = vunpack.c.l.b16 %v177
    %v713 = vunpack.c.l.b16 %v178
    %v714 = vunpack.c.l.b16 %v179
    %v715 = vunpack.c.l.b16 %v180
    %v716 = vunpack.c.l.b16 %v181
    %v717 = vunpack.c.l.b16 %v182
    %v718 = vunpack.c.l.b16 %v183
    %v719 = vunpack.c.l.b16 %v184
    %v720 = vunpack.c.l.b16 %v185
    %v721 = vunpack.c.l.b16 %v186
    %v722 = vunpack.c.l.b16 %v187
    %v723 = vunpack.c.l.b16 %v188
    %v724 = vunpack.c.l.b16 %v189
    %v725 = vunpack.c.l.b16 %v190
    %v726 = vunpack.c.l.b16 %v191
    %v727 = vunpack.c.l.b16 %v192
    %v728 = vunpack.c.l.b16 %v193
    %v729 = vunpack.c.l.b16 %v194
    %v730 = vunpack.c.l.b16 %v195
    %v731 = vunpack.c.l.b16 %v196
    %v732 = vunpack.c.l.b16 %v197
    %v733 = vunpack.c.l.b16 %v198
    %v734 = vunpack.c.l.b16 %v199
    %v735 = vunpack.c.l.b16 %v200
    %v736 = vunpack.c.l.b16 %v201
    %v737 = vunpack.c.l.b16 %v202
    %v738 = vunpack.c.l.b16 %v203
    %v739 = vunpack.c.l.b16 %v204
    %v740 = vunpack.c.l.b16 %v205
    %v741 = vunpack.c.l.b16 %v206
    %v742 = vunpack.c.l.b16 %v207
    %v743 = vunpack.c.l.b16 %v208
    %v744 = vunpack.c.l.b16 %v209
    %v745 = vunpack.c.l.b16 %v210
    %v746 = vunpack.c.l.b16 %v211
    %v747 = vunpack.c.l.b16 %v212
    %v748 = vunpack.c.l.b16 %v213
    %v749 = vunpack.c.l.b16 %v214
    %v750 = vunpack.c.l.b16 %v215
    %v751 = vunpack.c.l.b16 %v216
    %v752 = vunpack.c.l.b16 %v217
    %v753 = vunpack.c.l.b16 %v218
    %v754 = vunpack.c.l.b16 %v219
    %v755 = vunpack.c.l.b16 %v220
    %v756 = vunpack.c.l.b16 %v221
    %v757 = vunpack.c.l.b16 %v222
    %v758 = vunpack.c.l.b16 %v223
    %v759 = vunpack.c.l.b16 %v224
    %v760 = vunpack.c.l.b16 %v225
    %v761 = vunpack.c.l.b16 %v226
    %v762 = vunpack.c.l.b16 %v227
    %v763 = vunpack.c.l.b16 %v228
    %v764 = vunpack.c.l.b16 %v229
    %v765 = vunpack.c.l.b16 %v230
    %v766 = vunpack.c.l.b16 %v231
    %v767 = vunpack.c.l.b16 %v232
    %v768 = vunpack.c.l.b16 %v233
    %v769 = vunpack.c.l.b16 %v234
    %v770 = vunpack.c.l.b16 %v235
    %v771 = vunpack.c.l.b16 %v236
    %v772 = vunpack.c.l.b16 %v237
    %v773 = vunpack.c.l.b16 %v238
    %v774 = vunpack.c.l.b16 %v239
    %v775 = vunpack.c.l.b16 %v240
    %v776 = vunpack.c.l.b16 %v241
    %v777 = vunpack.c.l.b16 %v242
    %v778 = vunpack.c.l.b16 %v243
    %v779 = vunpack.c.l.b16 %v244
    %v780 = vunpack.c.l.b16 %v245
    %v781 = vunpack.c.l.b16 %v246
    %v782 = vunpack.c.l.b16 %v247
    %v783 = vunpack.c.l.b16 %v248
    %v784 = vunpack.c.l.b16 %v249
    %v785 = vunpack.c.l.b16 %v250
    %v786 = vunpack.c.l.b16 %v251
    %v787 = vunpack.c.l.b16 %v252
    %v788 = vunpack.c.l.b16 %v253
    %v789 = vunpack.c.l.b16 %v254
    %v790 = vunpack.c.l.b16 %v255
    %v791 = vunpack.c.l.b16 %v256
    %v792 = vunpack.c.l.b16 %v257
    %v793 = vunpack.c.l.b16 %v258
    %v794 = vunpack.c.l.b16 %v259
    %v795 = vunpack.c.l.b16 %v260
    %v796 = vunpack.c.l.b16 %v261
    %v797 = vunpack.c.l.b16 %v262
    %v798 = vunpack.c.l.b16 %v263
    %v799 = vunpack.c.l.b16 %v264
    %v800 = vunpack.c.l.b16 %v265
    %v801 = vunpack.c.l.b16 %v266
    %v802 = vunpack.c.l.b16 %v267
    %v803 = vunpack.c.l.b16 %v268
    %v804 = vunpack.c.l.b16 %v269
    %v805 = vunpack.c.l.b16 %v270
    %v806 = vunpack.c.l.b16 %v271
    %v807 = vunpack.c.l.b16 %v272
    %v808 = vunpack.c.l.b16 %v273
    %v809 = vunpack.c.l.b16 %v274
    %v810 = vunpack.c.l.b16 %v275
    %v811 = vunpack.c.l.b16 %v276
    %v812 = vunpack.c.l.b16 %v277
    %v813 = vunpack.c.l.b16 %v278
    %v814 = vunpack.c.l.b16 %v279
    %v815 = vunpack.c.l.b16 %v280
    %v816 = vunpack.c.l.b16 %v281
    %v817 = vunpack.c.l.b16 %v282
    %v818 = vunpack.c.l.b16 %v283
    %v819 = vunpack.c.l.b16 %v284
    %v820 = vunpack.c.l.b16 %v285
    %v821 = vunpack.c.l.b16 %v286
    %v822 = vunpack.c.l.b16 %v287
    %v823 = vunpack.c.l.b16 %v288
    %v824 = vunpack.c.l.b16 %v289
    %v825 = vunpack.c.l.b16 %v290
    %v826 = vunpack.c.l.b16 %v291
    %v827 = vunpack.c.l.b16 %v292
    %v828 = vunpack.c.l.b16 %v293
    %v829 = vunpack.c.l.b16 %v294
    %v830 = vunpack.c.l.b16 %v295
    %v831 = vunpack.c.l.b16 %v296
    %v832 = vunpack.c.l.b16 %v297
    %v833 = vunpack.c.l.b16 %v298
    %v834 = vunpack.c.l.b16 %v299
    %v835 = vunpack.c.l.b16 %v300
    %v836 = vunpack.c.l.b16 %v301
    %v837 = vunpack.c.l.b16 %v302
    %v838 = vunpack.c.l.b16 %v303
    %v839 = vunpack.c.l.b16 %v304
    %v840 = vunpack.c.l.b16 %v305
    %v841 = vunpack.c.l.b16 %v306
    %v842 = vunpack.c.l.b16 %v307
    %v843 = vunpack.c.l.b16 %v308
    %v844 = vunpack.c.l.b16 %v309
    %v845 = vunpack.c.l.b16 %v310
    %v846 = vunpack.c.l.b16 %v311
    %v847 = vunpack.c.l.b16 %v312
    %v848 = vunpack.c.l.b16 %v313
    %v849 = vpack.c.b16 %v594, %v593
    %v850 = vpack.c.b16 %v596, %v595
    %v851 = vpack.c.b16 %v598, %v597
    %v852 = vpack.c.b16 %v600, %v599
    %v853 = vpack.c.b16 %v602, %v601
    %v854 = vpack.c.b16 %v604, %v603
    %v855 = vpack.c.b16 %v606, %v605
    %v856 = vpack.c.b16 %v608, %v607
    %v857 = vpack.c.b16 %v610, %v609
    %v858 = vpack.c.b16 %v612, %v611
    %v859 = vpack.c.b16 %v614, %v613
    %v860 = vpack.c.b16 %v616, %v615
    %v861 = vpack.c.b16 %v618, %v617
    %v862 = vpack.c.b16 %v620, %v619
    %v863 = vpack.c.b16 %v622, %v621
    %v864 = vpack.c.b16 %v624, %v623
    %v865 = vpack.c.b16 %v626, %v625
    %v866 = vpack.c.b16 %v628, %v627
    %v867 = vpack.c.b16 %v630, %v629
    %v868 = vpack.c.b16 %v632, %v631
    %v869 = vpack.c.b16 %v634, %v633
    %v870 = vpack.c.b16 %v636, %v635
    %v871 = vpack.c.b16 %v638, %v637
    %v872 = vpack.c.b16 %v640, %v639
    %v873 = vpack.c.b16 %v642, %v641
    %v874 = vpack.c.b16 %v644, %v643
    %v875 = vpack.c.b16 %v646, %v645
    %v876 = vpack.c.b16 %v648, %v647
    %v877 = vpack.c.b16 %v650, %v649
    %v878 = vpack.c.b16 %v652, %v651
    %v879 = vpack.c.b16 %v654, %v653
    %v880 = vpack.c.b16 %v656, %v655
    %v881 = vpack.c.b16 %v658, %v657
    %v882 = vpack.c.b16 %v660, %v659
    %v883 = vpack.c.b16 %v662, %v661
    %v884 = vpack.c.b16 %v664, %v663
    %v885 = vpack.c.b16 %v666, %v665
    %v886 = vpack.c.b16 %v668, %v667
    %v887 = vpack.c.b16 %v670, %v669
    %v888 = vpack.c.b16 %v672, %v671
    %v889 = vpack.c.b16 %v674, %v673
    %v890 = vpack.c.b16 %v676, %v675
    %v891 = vpack.c.b16 %v678, %v677
    %v892 = vpack.c.b16 %v680, %v679
    %v893 = vpack.c.b16 %v682, %v681
    %v894 = vpack.c.b16 %v684, %v683
    %v895 = vpack.c.b16 %v686, %v685
    %v896 = vpack.c.b16 %v688, %v687
    %v897 = vpack.c.b16 %v690, %v689
    %v898 = vpack.c.b16 %v692, %v691
    %v899 = vpack.c.b16 %v694, %v693
    %v900 = vpack.c.b16 %v696, %v695
    %v901 = vpack.c.b16 %v698, %v697
    %v902 = vpack.c.b16 %v700, %v699
    %v903 = vpack.c.b16 %v702, %v701
    %v904 = vpack.c.b16 %v704, %v703
    %v905 = vpack.c.b16 %v706, %v705
    %v906 = vpack.c.b16 %v708, %v707
    %v907 = vpack.c.b16 %v710, %v709
    %v908 = vpack.c.b16 %v712, %v711
    %v909 = vpack.c.b16 %v714, %v713
    %v910 = vpack.c.b16 %v716, %v715
    %v911 = vpack.c.b16 %v718, %v717
    %v912 = vpack.c.b16 %v720, %v719
    %v913 = vpack.c.b16 %v722, %v721
    %v914 = vpack.c.b16 %v724, %v723
    %v915 = vpack.c.b16 %v726, %v725
    %v916 = vpack.c.b16 %v728, %v727
    %v917 = vpack.c.b16 %v730, %v729
    %v918 = vpack.c.b16 %v732, %v731
    %v919 = vpack.c.b16 %v734, %v733
    %v920 = vpack.c.b16 %v736, %v735
    %v921 = vpack.c.b16 %v738, %v737
    %v922 = vpack.c.b16 %v740, %v739
    %v923 = vpack.c.b16 %v742, %v741
    %v924 = vpack.c.b16 %v744, %v743
    %v925 = vpack.c.b16 %v746, %v745
    %v926 = vpack.c.b16 %v748, %v747
    %v927 = vpack.c.b16 %v750, %v749
    %v928 = vpack.c.b16 %v752, %v751
    %v929 = vpack.c.b16 %v754, %v753
    %v930 = vpack.c.b16 %v756, %v755
    %v931 = vpack.c.b16 %v758, %v757
    %v932 = vpack.c.b16 %v760, %v759
    %v933 = vpack.c.b16 %v762, %v761
    %v934 = vpack.c.b16 %v764, %v763
    %v935 = vpack.c.b16 %v766, %v765
    %v936 = vpack.c.b16 %v768, %v767
    %v937 = vpack.c.b16 %v770, %v769
    %v938 = vpack.c.b16 %v772, %v771
    %v939 = vpack.c.b16 %v774, %v773
    %v940 = vpack.c.b16 %v776, %v775
    %v941 = vpack.c.b16 %v778, %v777
    %v942 = vpack.c.b16 %v780, %v779
    %v943 = vpack.c.b16 %v782, %v781
    %v944 = vpack.c.b16 %v784, %v783
    %v945 = vpack.c.b16 %v786, %v785
    %v946 = vpack.c.b16 %v788, %v787
    %v947 = vpack.c.b16 %v790, %v789
    %v948 = vpack.c.b16 %v792, %v791
    %v949 = vpack.c.b16 %v794, %v793
    %v950 = vpack.c.b16 %v796, %v795
    %v951 = vpack.c.b16 %v798, %v797
    %v952 = vpack.c.b16 %v800, %v799
    %v953 = vpack.c.b16 %v802, %v801
    %v954 = vpack.c.b16 %v804, %v803
    %v955 = vpack.c.b16 %v806, %v805
    %v956 = vpack.c.b16 %v808, %v807
    %v957 = vpack.c.b16 %v810, %v809
    %v958 = vpack.c.b16 %v812, %v811
    %v959 = vpack.c.b16 %v814, %v813
    %v960 = vpack.c.b16 %v816, %v815
    %v961 = vpack.c.b16 %v818, %v817
    %v962 = vpack.c.b16 %v820, %v819
    %v963 = vpack.c.b16 %v822, %v821
    %v964 = vpack.c.b16 %v824, %v823
    %v965 = vpack.c.b16 %v826, %v825
    %v966 = vpack.c.b16 %v828, %v827
    %v967 = vpack.c.b16 %v830, %v829
    %v968 = vpack.c.b16 %v832, %v831
    %v969 = vpack.c.b16 %v834, %v833
    %v970 = vpack.c.b16 %v836, %v835
    %v971 = vpack.c.b16 %v838, %v837
    %v972 = vpack.c.b16 %v840, %v839
    %v973 = vpack.c.b16 %v842, %v841
    %v974 = vpack.c.b16 %v844, %v843
    %v975 = vpack.c.b16 %v846, %v845
    %v976 = vpack.c.b16 %v848, %v847
    %v1121 = vunpack.c.l.b16 %v314
    %v1122 = vunpack.c.l.b16 %v315
    %v1123 = vunpack.c.l.b16 %v316
    %v1124 = vunpack.c.l.b16 %v317
    %v1125 = vunpack.c.l.b16 %v318
    %v1126 = vunpack.c.l.b16 %v319
    %v1127 = vunpack.c.l.b16 %v320
    %v1128 = vunpack.c.l.b16 %v321
    %v1129 = vunpack.c.l.b16 %v322
    %v1130 = vunpack.c.l.b16 %v323
    %v1131 = vunpack.c.l.b16 %v324
    %v1132 = vunpack.c.l.b16 %v325
    %v1133 = vunpack.c.l.b16 %v326
    %v1134 = vunpack.c.l.b16 %v327
    %v1135 = vunpack.c.l.b16 %v328
    %v1136 = vunpack.c.l.b16 %v329
    %v1137 = vpack.c.b16 %v1122, %v1121
    %v1138 = vpack.c.b16 %v1124, %v1123
    %v1139 = vpack.c.b16 %v1126, %v1125
    %v1140 = vpack.c.b16 %v1128, %v1127
    %v1141 = vpack.c.b16 %v1130, %v1129
    %v1142 = vpack.c.b16 %v1132, %v1131
    %v1143 = vpack.c.b16 %v1134, %v1133
    %v1144 = vpack.c.b16 %v1136, %v1135
    %1153 = vmatprep.subr.bf16.mxu0 0
    %1154 = vmatpush1.bf16.msra.mxu0 %v1144
    %1155 = vmatprep.subr.bf16.mxu0 0
    %1156 = vmatpush1.bf16.msra.mxu0 %v1143
    %1157 = vmatprep.subr.bf16.mxu0 0
    %1158 = vmatpush1.bf16.msra.mxu0 %v1142
    %1159 = vmatprep.subr.bf16.mxu0 0
    %1160 = vmatpush1.bf16.msra.mxu0 %v1141
    %1161 = vmatprep.subr.bf16.mxu0 0
    %1162 = vmatpush1.bf16.msra.mxu0 %v1140
    %1163 = vmatprep.subr.bf16.mxu0 0
    %1164 = vmatpush1.bf16.msra.mxu0 %v1139
    %1165 = vmatprep.subr.bf16.mxu0 0
    %1166 = vmatpush1.bf16.msra.mxu0 %v1138
    %1167 = vmatprep.subr.bf16.mxu0 0
    %1168 = vmatpush1.bf16.msra.mxu0 %v1137
    %1169 = vmatprep.subr.bf16.mxu0 0
    %1170 = vmatpush2.bf16.msra.mxu0 0
    %1171 = vmatprep.subr.bf16.mxu0 0
    %1172 = vmatpush2.bf16.msra.mxu0 0
    %1173 = vmatprep.subr.bf16.mxu0 0
    %1174 = vmatpush2.bf16.msra.mxu0 0
    %1175 = vmatprep.subr.bf16.mxu0 0
    %1176 = vmatpush2.bf16.msra.mxu0 0
    %1177 = vmatprep.subr.bf16.mxu0 0
    %1178 = vmatpush2.bf16.msra.mxu0 0
    %1179 = vmatprep.subr.bf16.mxu0 0
    %1180 = vmatpush2.bf16.msra.mxu0 0
    %1181 = vmatprep.subr.bf16.mxu0 0
    %1182 = vmatpush2.bf16.msra.mxu0 0
    %1183 = vmatprep.subr.bf16.mxu0 0
    %1184 = vmatpush2.bf16.msra.mxu0 0
    %1185 = vmatprep.mubr.bf16.mxu0 0
    %1186 = vmatmul.mubr.bf16.gmra.mxu0 %v849
    %v1187 = vpop.f32.mrf.mxu0
    %v1188 = vadd.f32 %v335, %v1187
    %v1189 = vpop.f32.mrf.mxu0
    %v1190 = vpop.f32.mrf.mxu0
    %v1191 = vadd.f32 %v335, %v1190
    %v1192 = vpop.f32.mrf.mxu0
    %1193 = vmatprep.mubr.bf16.mxu0 0
    %1194 = vmatmul.mubr.bf16.gmra.mxu0 %v850
    %v1195 = vpop.f32.mrf.mxu0
    %v1196 = vadd.f32 %v335, %v1195
    %v1197 = vpop.f32.mrf.mxu0
    %v1198 = vpop.f32.mrf.mxu0
    %v1199 = vadd.f32 %v335, %v1198
    %v1200 = vpop.f32.mrf.mxu0
    %1201 = vmatprep.mubr.bf16.mxu0 0
    %1202 = vmatmul.mubr.bf16.gmra.mxu0 %v851
    %v1203 = vpop.f32.mrf.mxu0
    %v1204 = vadd.f32 %v335, %v1203
    %v1205 = vpop.f32.mrf.mxu0
    %v1206 = vpop.f32.mrf.mxu0
    %v1207 = vadd.f32 %v335, %v1206
    %v1208 = vpop.f32.mrf.mxu0
    %1209 = vmatprep.mubr.bf16.mxu0 0
    %1210 = vmatmul.mubr.bf16.gmra.mxu0 %v852
    %v1211 = vpop.f32.mrf.mxu0
    %v1212 = vadd.f32 %v335, %v1211
    %v1213 = vpop.f32.mrf.mxu0
    %v1214 = vpop.f32.mrf.mxu0
    %v1215 = vadd.f32 %v335, %v1214
    %v1216 = vpop.f32.mrf.mxu0
    %1217 = vmatprep.mubr.bf16.mxu0 0
    %1218 = vmatmul.mubr.bf16.gmra.mxu0 %v853
    %v1219 = vpop.f32.mrf.mxu0
    %v1220 = vadd.f32 %v335, %v1219
    %v1221 = vpop.f32.mrf.mxu0
    %v1222 = vpop.f32.mrf.mxu0
    %v1223 = vadd.f32 %v335, %v1222
    %v1224 = vpop.f32.mrf.mxu0
    %1225 = vmatprep.mubr.bf16.mxu0 0
    %1226 = vmatmul.mubr.bf16.gmra.mxu0 %v854
    %v1227 = vpop.f32.mrf.mxu0
    %v1228 = vadd.f32 %v335, %v1227
    %v1229 = vpop.f32.mrf.mxu0
    %v1230 = vpop.f32.mrf.mxu0
    %v1231 = vadd.f32 %v335, %v1230
    %v1232 = vpop.f32.mrf.mxu0
    %1233 = vmatprep.mubr.bf16.mxu0 0
    %1234 = vmatmul.mubr.bf16.gmra.mxu0 %v855
    %v1235 = vpop.f32.mrf.mxu0
    %v1236 = vadd.f32 %v335, %v1235
    %v1237 = vpop.f32.mrf.mxu0
    %v1238 = vpop.f32.mrf.mxu0
    %v1239 = vadd.f32 %v335, %v1238
    %v1240 = vpop.f32.mrf.mxu0
    %1241 = vmatprep.mubr.bf16.mxu0 0
    %1242 = vmatmul.mubr.bf16.gmra.mxu0 %v856
    %v1243 = vpop.f32.mrf.mxu0
    %v1244 = vadd.f32 %v335, %v1243
    %v1245 = vpop.f32.mrf.mxu0
    %v1246 = vpop.f32.mrf.mxu0
    %v1247 = vadd.f32 %v335, %v1246
    %v1248 = vpop.f32.mrf.mxu0
    %1249 = vmatprep.mubr.bf16.mxu0 0
    %1250 = vmatmul.mubr.bf16.gmra.mxu0 %v857
    %v1251 = vpop.f32.mrf.mxu0
    %v1252 = vadd.f32 %v335, %v1251
    %v1253 = vpop.f32.mrf.mxu0
    %v1254 = vpop.f32.mrf.mxu0
    %v1255 = vadd.f32 %v335, %v1254
    %v1256 = vpop.f32.mrf.mxu0
    %1257 = vmatprep.mubr.bf16.mxu0 0
    %1258 = vmatmul.mubr.bf16.gmra.mxu0 %v858
    %v1259 = vpop.f32.mrf.mxu0
    %v1260 = vadd.f32 %v335, %v1259
    %v1261 = vpop.f32.mrf.mxu0
    %v1262 = vpop.f32.mrf.mxu0
    %v1263 = vadd.f32 %v335, %v1262
    %v1264 = vpop.f32.mrf.mxu0
    %1265 = vmatprep.mubr.bf16.mxu0 0
    %1266 = vmatmul.mubr.bf16.gmra.mxu0 %v859
    %v1267 = vpop.f32.mrf.mxu0
    %v1268 = vadd.f32 %v335, %v1267
    %v1269 = vpop.f32.mrf.mxu0
    %v1270 = vpop.f32.mrf.mxu0
    %v1271 = vadd.f32 %v335, %v1270
    %v1272 = vpop.f32.mrf.mxu0
    %1273 = vmatprep.mubr.bf16.mxu0 0
    %1274 = vmatmul.mubr.bf16.gmra.mxu0 %v860
    %v1275 = vpop.f32.mrf.mxu0
    %v1276 = vadd.f32 %v335, %v1275
    %v1277 = vpop.f32.mrf.mxu0
    %v1278 = vpop.f32.mrf.mxu0
    %v1279 = vadd.f32 %v335, %v1278
    %v1280 = vpop.f32.mrf.mxu0
    %1281 = vmatprep.mubr.bf16.mxu0 0
    %1282 = vmatmul.mubr.bf16.gmra.mxu0 %v861
    %v1283 = vpop.f32.mrf.mxu0
    %v1284 = vadd.f32 %v335, %v1283
    %v1285 = vpop.f32.mrf.mxu0
    %v1286 = vpop.f32.mrf.mxu0
    %v1287 = vadd.f32 %v335, %v1286
    %v1288 = vpop.f32.mrf.mxu0
    %1289 = vmatprep.mubr.bf16.mxu0 0
    %1290 = vmatmul.mubr.bf16.gmra.mxu0 %v862
    %v1291 = vpop.f32.mrf.mxu0
    %v1292 = vadd.f32 %v335, %v1291
    %v1293 = vpop.f32.mrf.mxu0
    %v1294 = vpop.f32.mrf.mxu0
    %v1295 = vadd.f32 %v335, %v1294
    %v1296 = vpop.f32.mrf.mxu0
    %1297 = vmatprep.mubr.bf16.mxu0 0
    %1298 = vmatmul.mubr.bf16.gmra.mxu0 %v863
    %v1299 = vpop.f32.mrf.mxu0
    %v1300 = vadd.f32 %v335, %v1299
    %v1301 = vpop.f32.mrf.mxu0
    %v1302 = vpop.f32.mrf.mxu0
    %v1303 = vadd.f32 %v335, %v1302
    %v1304 = vpop.f32.mrf.mxu0
    %1305 = vmatprep.mubr.bf16.mxu0 0
    %1306 = vmatmul.mubr.bf16.gmra.mxu0 %v864
    %v1307 = vpop.f32.mrf.mxu0
    %v1308 = vadd.f32 %v335, %v1307
    %v1309 = vpop.f32.mrf.mxu0
    %v1310 = vpop.f32.mrf.mxu0
    %v1311 = vadd.f32 %v335, %v1310
    %v1312 = vpop.f32.mrf.mxu0
    %1313 = vmatprep.mubr.bf16.mxu0 0
    %1314 = vmatmul.mubr.bf16.gmra.mxu0 %v865
    %v1315 = vpop.f32.mrf.mxu0
    %v1316 = vadd.f32 %v335, %v1315
    %v1317 = vpop.f32.mrf.mxu0
    %v1318 = vpop.f32.mrf.mxu0
    %v1319 = vadd.f32 %v335, %v1318
    %v1320 = vpop.f32.mrf.mxu0
    %1321 = vmatprep.mubr.bf16.mxu0 0
    %1322 = vmatmul.mubr.bf16.gmra.mxu0 %v866
    %v1323 = vpop.f32.mrf.mxu0
    %v1324 = vadd.f32 %v335, %v1323
    %v1325 = vpop.f32.mrf.mxu0
    %v1326 = vpop.f32.mrf.mxu0
    %v1327 = vadd.f32 %v335, %v1326
    %v1328 = vpop.f32.mrf.mxu0
    %1329 = vmatprep.mubr.bf16.mxu0 0
    %1330 = vmatmul.mubr.bf16.gmra.mxu0 %v867
    %v1331 = vpop.f32.mrf.mxu0
    %v1332 = vadd.f32 %v335, %v1331
    %v1333 = vpop.f32.mrf.mxu0
    %v1334 = vpop.f32.mrf.mxu0
    %v1335 = vadd.f32 %v335, %v1334
    %v1336 = vpop.f32.mrf.mxu0
    %1337 = vmatprep.mubr.bf16.mxu0 0
    %1338 = vmatmul.mubr.bf16.gmra.mxu0 %v868
    %v1339 = vpop.f32.mrf.mxu0
    %v1340 = vadd.f32 %v335, %v1339
    %v1341 = vpop.f32.mrf.mxu0
    %v1342 = vpop.f32.mrf.mxu0
    %v1343 = vadd.f32 %v335, %v1342
    %v1344 = vpop.f32.mrf.mxu0
    %1345 = vmatprep.mubr.bf16.mxu0 0
    %1346 = vmatmul.mubr.bf16.gmra.mxu0 %v869
    %v1347 = vpop.f32.mrf.mxu0
    %v1348 = vadd.f32 %v335, %v1347
    %v1349 = vpop.f32.mrf.mxu0
    %v1350 = vpop.f32.mrf.mxu0
    %v1351 = vadd.f32 %v335, %v1350
    %v1352 = vpop.f32.mrf.mxu0
    %1353 = vmatprep.mubr.bf16.mxu0 0
    %1354 = vmatmul.mubr.bf16.gmra.mxu0 %v870
    %v1355 = vpop.f32.mrf.mxu0
    %v1356 = vadd.f32 %v335, %v1355
    %v1357 = vpop.f32.mrf.mxu0
    %v1358 = vpop.f32.mrf.mxu0
    %v1359 = vadd.f32 %v335, %v1358
    %v1360 = vpop.f32.mrf.mxu0
    %1361 = vmatprep.mubr.bf16.mxu0 0
    %1362 = vmatmul.mubr.bf16.gmra.mxu0 %v871
    %v1363 = vpop.f32.mrf.mxu0
    %v1364 = vadd.f32 %v335, %v1363
    %v1365 = vpop.f32.mrf.mxu0
    %v1366 = vpop.f32.mrf.mxu0
    %v1367 = vadd.f32 %v335, %v1366
    %v1368 = vpop.f32.mrf.mxu0
    %1369 = vmatprep.mubr.bf16.mxu0 0
    %1370 = vmatmul.mubr.bf16.gmra.mxu0 %v872
    %v1371 = vpop.f32.mrf.mxu0
    %v1372 = vadd.f32 %v335, %v1371
    %v1373 = vpop.f32.mrf.mxu0
    %v1374 = vpop.f32.mrf.mxu0
    %v1375 = vadd.f32 %v335, %v1374
    %v1376 = vpop.f32.mrf.mxu0
    %1377 = vmatprep.mubr.bf16.mxu0 0
    %1378 = vmatmul.mubr.bf16.gmra.mxu0 %v873
    %v1379 = vpop.f32.mrf.mxu0
    %v1380 = vadd.f32 %v335, %v1379
    %v1381 = vpop.f32.mrf.mxu0
    %v1382 = vpop.f32.mrf.mxu0
    %v1383 = vadd.f32 %v335, %v1382
    %v1384 = vpop.f32.mrf.mxu0
    %1385 = vmatprep.mubr.bf16.mxu0 0
    %1386 = vmatmul.mubr.bf16.gmra.mxu0 %v874
    %v1387 = vpop.f32.mrf.mxu0
    %v1388 = vadd.f32 %v335, %v1387
    %v1389 = vpop.f32.mrf.mxu0
    %v1390 = vpop.f32.mrf.mxu0
    %v1391 = vadd.f32 %v335, %v1390
    %v1392 = vpop.f32.mrf.mxu0
    %1393 = vmatprep.mubr.bf16.mxu0 0
    %1394 = vmatmul.mubr.bf16.gmra.mxu0 %v875
    %v1395 = vpop.f32.mrf.mxu0
    %v1396 = vadd.f32 %v335, %v1395
    %v1397 = vpop.f32.mrf.mxu0
    %v1398 = vpop.f32.mrf.mxu0
    %v1399 = vadd.f32 %v335, %v1398
    %v1400 = vpop.f32.mrf.mxu0
    %1401 = vmatprep.mubr.bf16.mxu0 0
    %1402 = vmatmul.mubr.bf16.gmra.mxu0 %v876
    %v1403 = vpop.f32.mrf.mxu0
    %v1404 = vadd.f32 %v335, %v1403
    %v1405 = vpop.f32.mrf.mxu0
    %v1406 = vpop.f32.mrf.mxu0
    %v1407 = vadd.f32 %v335, %v1406
    %v1408 = vpop.f32.mrf.mxu0
    %1409 = vmatprep.mubr.bf16.mxu0 0
    %1410 = vmatmul.mubr.bf16.gmra.mxu0 %v877
    %v1411 = vpop.f32.mrf.mxu0
    %v1412 = vadd.f32 %v335, %v1411
    %v1413 = vpop.f32.mrf.mxu0
    %v1414 = vpop.f32.mrf.mxu0
    %v1415 = vadd.f32 %v335, %v1414
    %v1416 = vpop.f32.mrf.mxu0
    %1417 = vmatprep.mubr.bf16.mxu0 0
    %1418 = vmatmul.mubr.bf16.gmra.mxu0 %v878
    %v1419 = vpop.f32.mrf.mxu0
    %v1420 = vadd.f32 %v335, %v1419
    %v1421 = vpop.f32.mrf.mxu0
    %v1422 = vpop.f32.mrf.mxu0
    %v1423 = vadd.f32 %v335, %v1422
    %v1424 = vpop.f32.mrf.mxu0
    %1425 = vmatprep.mubr.bf16.mxu0 0
    %1426 = vmatmul.mubr.bf16.gmra.mxu0 %v879
    %v1427 = vpop.f32.mrf.mxu0
    %v1428 = vadd.f32 %v335, %v1427
    %v1429 = vpop.f32.mrf.mxu0
    %v1430 = vpop.f32.mrf.mxu0
    %v1431 = vadd.f32 %v335, %v1430
    %v1432 = vpop.f32.mrf.mxu0
    %1433 = vmatprep.mubr.bf16.mxu0 0
    %1434 = vmatmul.mubr.bf16.gmra.mxu0 %v880
    %v1435 = vpop.f32.mrf.mxu0
    %v1436 = vadd.f32 %v335, %v1435
    %v1437 = vpop.f32.mrf.mxu0
    %v1438 = vpop.f32.mrf.mxu0
    %v1439 = vadd.f32 %v335, %v1438
    %v1440 = vpop.f32.mrf.mxu0
    %1441 = vmatprep.mubr.bf16.mxu0 0
    %1442 = vmatmul.mubr.bf16.gmra.mxu0 %v881
    %v1443 = vpop.f32.mrf.mxu0
    %v1444 = vadd.f32 %v335, %v1443
    %v1445 = vpop.f32.mrf.mxu0
    %v1446 = vpop.f32.mrf.mxu0
    %v1447 = vadd.f32 %v335, %v1446
    %v1448 = vpop.f32.mrf.mxu0
    %1449 = vmatprep.mubr.bf16.mxu0 0
    %1450 = vmatmul.mubr.bf16.gmra.mxu0 %v882
    %v1451 = vpop.f32.mrf.mxu0
    %v1452 = vadd.f32 %v335, %v1451
    %v1453 = vpop.f32.mrf.mxu0
    %v1454 = vpop.f32.mrf.mxu0
    %v1455 = vadd.f32 %v335, %v1454
    %v1456 = vpop.f32.mrf.mxu0
    %1457 = vmatprep.mubr.bf16.mxu0 0
    %1458 = vmatmul.mubr.bf16.gmra.mxu0 %v883
    %v1459 = vpop.f32.mrf.mxu0
    %v1460 = vadd.f32 %v335, %v1459
    %v1461 = vpop.f32.mrf.mxu0
    %v1462 = vpop.f32.mrf.mxu0
    %v1463 = vadd.f32 %v335, %v1462
    %v1464 = vpop.f32.mrf.mxu0
    %1465 = vmatprep.mubr.bf16.mxu0 0
    %1466 = vmatmul.mubr.bf16.gmra.mxu0 %v884
    %v1467 = vpop.f32.mrf.mxu0
    %v1468 = vadd.f32 %v335, %v1467
    %v1469 = vpop.f32.mrf.mxu0
    %v1470 = vpop.f32.mrf.mxu0
    %v1471 = vadd.f32 %v335, %v1470
    %v1472 = vpop.f32.mrf.mxu0
    %1473 = vmatprep.mubr.bf16.mxu0 0
    %1474 = vmatmul.mubr.bf16.gmra.mxu0 %v885
    %v1475 = vpop.f32.mrf.mxu0
    %v1476 = vadd.f32 %v335, %v1475
    %v1477 = vpop.f32.mrf.mxu0
    %v1478 = vpop.f32.mrf.mxu0
    %v1479 = vadd.f32 %v335, %v1478
    %v1480 = vpop.f32.mrf.mxu0
    %1481 = vmatprep.mubr.bf16.mxu0 0
    %1482 = vmatmul.mubr.bf16.gmra.mxu0 %v886
    %v1483 = vpop.f32.mrf.mxu0
    %v1484 = vadd.f32 %v335, %v1483
    %v1485 = vpop.f32.mrf.mxu0
    %v1486 = vpop.f32.mrf.mxu0
    %v1487 = vadd.f32 %v335, %v1486
    %v1488 = vpop.f32.mrf.mxu0
    %1489 = vmatprep.mubr.bf16.mxu0 0
    %1490 = vmatmul.mubr.bf16.gmra.mxu0 %v887
    %v1491 = vpop.f32.mrf.mxu0
    %v1492 = vadd.f32 %v335, %v1491
    %v1493 = vpop.f32.mrf.mxu0
    %v1494 = vpop.f32.mrf.mxu0
    %v1495 = vadd.f32 %v335, %v1494
    %v1496 = vpop.f32.mrf.mxu0
    %1497 = vmatprep.mubr.bf16.mxu0 0
    %1498 = vmatmul.mubr.bf16.gmra.mxu0 %v888
    %v1499 = vpop.f32.mrf.mxu0
    %v1500 = vadd.f32 %v335, %v1499
    %v1501 = vpop.f32.mrf.mxu0
    %v1502 = vpop.f32.mrf.mxu0
    %v1503 = vadd.f32 %v335, %v1502
    %v1504 = vpop.f32.mrf.mxu0
    %1505 = vmatprep.mubr.bf16.mxu0 0
    %1506 = vmatmul.mubr.bf16.gmra.mxu0 %v889
    %v1507 = vpop.f32.mrf.mxu0
    %v1508 = vadd.f32 %v335, %v1507
    %v1509 = vpop.f32.mrf.mxu0
    %v1510 = vpop.f32.mrf.mxu0
    %v1511 = vadd.f32 %v335, %v1510
    %v1512 = vpop.f32.mrf.mxu0
    %1513 = vmatprep.mubr.bf16.mxu0 0
    %1514 = vmatmul.mubr.bf16.gmra.mxu0 %v890
    %v1515 = vpop.f32.mrf.mxu0
    %v1516 = vadd.f32 %v335, %v1515
    %v1517 = vpop.f32.mrf.mxu0
    %v1518 = vpop.f32.mrf.mxu0
    %v1519 = vadd.f32 %v335, %v1518
    %v1520 = vpop.f32.mrf.mxu0
    %1521 = vmatprep.mubr.bf16.mxu0 0
    %1522 = vmatmul.mubr.bf16.gmra.mxu0 %v891
    %v1523 = vpop.f32.mrf.mxu0
    %v1524 = vadd.f32 %v335, %v1523
    %v1525 = vpop.f32.mrf.mxu0
    %v1526 = vpop.f32.mrf.mxu0
    %v1527 = vadd.f32 %v335, %v1526
    %v1528 = vpop.f32.mrf.mxu0
    %1529 = vmatprep.mubr.bf16.mxu0 0
    %1530 = vmatmul.mubr.bf16.gmra.mxu0 %v892
    %v1531 = vpop.f32.mrf.mxu0
    %v1532 = vadd.f32 %v335, %v1531
    %v1533 = vpop.f32.mrf.mxu0
    %v1534 = vpop.f32.mrf.mxu0
    %v1535 = vadd.f32 %v335, %v1534
    %v1536 = vpop.f32.mrf.mxu0
    %1537 = vmatprep.mubr.bf16.mxu0 0
    %1538 = vmatmul.mubr.bf16.gmra.mxu0 %v893
    %v1539 = vpop.f32.mrf.mxu0
    %v1540 = vadd.f32 %v335, %v1539
    %v1541 = vpop.f32.mrf.mxu0
    %v1542 = vpop.f32.mrf.mxu0
    %v1543 = vadd.f32 %v335, %v1542
    %v1544 = vpop.f32.mrf.mxu0
    %1545 = vmatprep.mubr.bf16.mxu0 0
    %1546 = vmatmul.mubr.bf16.gmra.mxu0 %v894
    %v1547 = vpop.f32.mrf.mxu0
    %v1548 = vadd.f32 %v335, %v1547
    %v1549 = vpop.f32.mrf.mxu0
    %v1550 = vpop.f32.mrf.mxu0
    %v1551 = vadd.f32 %v335, %v1550
    %v1552 = vpop.f32.mrf.mxu0
    %1553 = vmatprep.mubr.bf16.mxu0 0
    %1554 = vmatmul.mubr.bf16.gmra.mxu0 %v895
    %v1555 = vpop.f32.mrf.mxu0
    %v1556 = vadd.f32 %v335, %v1555
    %v1557 = vpop.f32.mrf.mxu0
    %v1558 = vpop.f32.mrf.mxu0
    %v1559 = vadd.f32 %v335, %v1558
    %v1560 = vpop.f32.mrf.mxu0
    %1561 = vmatprep.mubr.bf16.mxu0 0
    %1562 = vmatmul.mubr.bf16.gmra.mxu0 %v896
    %v1563 = vpop.f32.mrf.mxu0
    %v1564 = vadd.f32 %v335, %v1563
    %v1565 = vpop.f32.mrf.mxu0
    %v1566 = vpop.f32.mrf.mxu0
    %v1567 = vadd.f32 %v335, %v1566
    %v1568 = vpop.f32.mrf.mxu0
    %1569 = vmatprep.mubr.bf16.mxu0 0
    %1570 = vmatmul.mubr.bf16.gmra.mxu0 %v897
    %v1571 = vpop.f32.mrf.mxu0
    %v1572 = vadd.f32 %v335, %v1571
    %v1573 = vpop.f32.mrf.mxu0
    %v1574 = vpop.f32.mrf.mxu0
    %v1575 = vadd.f32 %v335, %v1574
    %v1576 = vpop.f32.mrf.mxu0
    %1577 = vmatprep.mubr.bf16.mxu0 0
    %1578 = vmatmul.mubr.bf16.gmra.mxu0 %v898
    %v1579 = vpop.f32.mrf.mxu0
    %v1580 = vadd.f32 %v335, %v1579
    %v1581 = vpop.f32.mrf.mxu0
    %v1582 = vpop.f32.mrf.mxu0
    %v1583 = vadd.f32 %v335, %v1582
    %v1584 = vpop.f32.mrf.mxu0
    %1585 = vmatprep.mubr.bf16.mxu0 0
    %1586 = vmatmul.mubr.bf16.gmra.mxu0 %v899
    %v1587 = vpop.f32.mrf.mxu0
    %v1588 = vadd.f32 %v335, %v1587
    %v1589 = vpop.f32.mrf.mxu0
    %v1590 = vpop.f32.mrf.mxu0
    %v1591 = vadd.f32 %v335, %v1590
    %v1592 = vpop.f32.mrf.mxu0
    %1593 = vmatprep.mubr.bf16.mxu0 0
    %1594 = vmatmul.mubr.bf16.gmra.mxu0 %v900
    %v1595 = vpop.f32.mrf.mxu0
    %v1596 = vadd.f32 %v335, %v1595
    %v1597 = vpop.f32.mrf.mxu0
    %v1598 = vpop.f32.mrf.mxu0
    %v1599 = vadd.f32 %v335, %v1598
    %v1600 = vpop.f32.mrf.mxu0
    %1601 = vmatprep.mubr.bf16.mxu0 0
    %1602 = vmatmul.mubr.bf16.gmra.mxu0 %v901
    %v1603 = vpop.f32.mrf.mxu0
    %v1604 = vadd.f32 %v335, %v1603
    %v1605 = vpop.f32.mrf.mxu0
    %v1606 = vpop.f32.mrf.mxu0
    %v1607 = vadd.f32 %v335, %v1606
    %v1608 = vpop.f32.mrf.mxu0
    %1609 = vmatprep.mubr.bf16.mxu0 0
    %1610 = vmatmul.mubr.bf16.gmra.mxu0 %v902
    %v1611 = vpop.f32.mrf.mxu0
    %v1612 = vadd.f32 %v335, %v1611
    %v1613 = vpop.f32.mrf.mxu0
    %v1614 = vpop.f32.mrf.mxu0
    %v1615 = vadd.f32 %v335, %v1614
    %v1616 = vpop.f32.mrf.mxu0
    %1617 = vmatprep.mubr.bf16.mxu0 0
    %1618 = vmatmul.mubr.bf16.gmra.mxu0 %v903
    %v1619 = vpop.f32.mrf.mxu0
    %v1620 = vadd.f32 %v335, %v1619
    %v1621 = vpop.f32.mrf.mxu0
    %v1622 = vpop.f32.mrf.mxu0
    %v1623 = vadd.f32 %v335, %v1622
    %v1624 = vpop.f32.mrf.mxu0
    %1625 = vmatprep.mubr.bf16.mxu0 0
    %1626 = vmatmul.mubr.bf16.gmra.mxu0 %v904
    %v1627 = vpop.f32.mrf.mxu0
    %v1628 = vadd.f32 %v335, %v1627
    %v1629 = vpop.f32.mrf.mxu0
    %v1630 = vpop.f32.mrf.mxu0
    %v1631 = vadd.f32 %v335, %v1630
    %v1632 = vpop.f32.mrf.mxu0
    %1633 = vmatprep.mubr.bf16.mxu0 0
    %1634 = vmatmul.mubr.bf16.gmra.mxu0 %v905
    %v1635 = vpop.f32.mrf.mxu0
    %v1636 = vadd.f32 %v335, %v1635
    %v1637 = vpop.f32.mrf.mxu0
    %v1638 = vpop.f32.mrf.mxu0
    %v1639 = vadd.f32 %v335, %v1638
    %v1640 = vpop.f32.mrf.mxu0
    %1641 = vmatprep.mubr.bf16.mxu0 0
    %1642 = vmatmul.mubr.bf16.gmra.mxu0 %v906
    %v1643 = vpop.f32.mrf.mxu0
    %v1644 = vadd.f32 %v335, %v1643
    %v1645 = vpop.f32.mrf.mxu0
    %v1646 = vpop.f32.mrf.mxu0
    %v1647 = vadd.f32 %v335, %v1646
    %v1648 = vpop.f32.mrf.mxu0
    %1649 = vmatprep.mubr.bf16.mxu0 0
    %1650 = vmatmul.mubr.bf16.gmra.mxu0 %v907
    %v1651 = vpop.f32.mrf.mxu0
    %v1652 = vadd.f32 %v335, %v1651
    %v1653 = vpop.f32.mrf.mxu0
    %v1654 = vpop.f32.mrf.mxu0
    %v1655 = vadd.f32 %v335, %v1654
    %v1656 = vpop.f32.mrf.mxu0
    %1657 = vmatprep.mubr.bf16.mxu0 0
    %1658 = vmatmul.mubr.bf16.gmra.mxu0 %v908
    %v1659 = vpop.f32.mrf.mxu0
    %v1660 = vadd.f32 %v335, %v1659
    %v1661 = vpop.f32.mrf.mxu0
    %v1662 = vpop.f32.mrf.mxu0
    %v1663 = vadd.f32 %v335, %v1662
    %v1664 = vpop.f32.mrf.mxu0
    %1665 = vmatprep.mubr.bf16.mxu0 0
    %1666 = vmatmul.mubr.bf16.gmra.mxu0 %v909
    %v1667 = vpop.f32.mrf.mxu0
    %v1668 = vadd.f32 %v335, %v1667
    %v1669 = vpop.f32.mrf.mxu0
    %v1670 = vpop.f32.mrf.mxu0
    %v1671 = vadd.f32 %v335, %v1670
    %v1672 = vpop.f32.mrf.mxu0
    %1673 = vmatprep.mubr.bf16.mxu0 0
    %1674 = vmatmul.mubr.bf16.gmra.mxu0 %v910
    %v1675 = vpop.f32.mrf.mxu0
    %v1676 = vadd.f32 %v335, %v1675
    %v1677 = vpop.f32.mrf.mxu0
    %v1678 = vpop.f32.mrf.mxu0
    %v1679 = vadd.f32 %v335, %v1678
    %v1680 = vpop.f32.mrf.mxu0
    %1681 = vmatprep.mubr.bf16.mxu0 0
    %1682 = vmatmul.mubr.bf16.gmra.mxu0 %v911
    %v1683 = vpop.f32.mrf.mxu0
    %v1684 = vadd.f32 %v335, %v1683
    %v1685 = vpop.f32.mrf.mxu0
    %v1686 = vpop.f32.mrf.mxu0
    %v1687 = vadd.f32 %v335, %v1686
    %v1688 = vpop.f32.mrf.mxu0
    %1689 = vmatprep.mubr.bf16.mxu0 0
    %1690 = vmatmul.mubr.bf16.gmra.mxu0 %v912
    %v1691 = vpop.f32.mrf.mxu0
    %v1692 = vadd.f32 %v335, %v1691
    %v1693 = vpop.f32.mrf.mxu0
    %v1694 = vpop.f32.mrf.mxu0
    %v1695 = vadd.f32 %v335, %v1694
    %v1696 = vpop.f32.mrf.mxu0
    %1697 = vmatprep.mubr.bf16.mxu0 0
    %1698 = vmatmul.mubr.bf16.gmra.mxu0 %v913
    %v1699 = vpop.f32.mrf.mxu0
    %v1700 = vadd.f32 %v335, %v1699
    %v1701 = vpop.f32.mrf.mxu0
    %v1702 = vpop.f32.mrf.mxu0
    %v1703 = vadd.f32 %v335, %v1702
    %v1704 = vpop.f32.mrf.mxu0
    %1705 = vmatprep.mubr.bf16.mxu0 0
    %1706 = vmatmul.mubr.bf16.gmra.mxu0 %v914
    %v1707 = vpop.f32.mrf.mxu0
    %v1708 = vadd.f32 %v335, %v1707
    %v1709 = vpop.f32.mrf.mxu0
    %v1710 = vpop.f32.mrf.mxu0
    %v1711 = vadd.f32 %v335, %v1710
    %v1712 = vpop.f32.mrf.mxu0
    %1713 = vmatprep.mubr.bf16.mxu0 0
    %1714 = vmatmul.mubr.bf16.gmra.mxu0 %v915
    %v1715 = vpop.f32.mrf.mxu0
    %v1716 = vadd.f32 %v335, %v1715
    %v1717 = vpop.f32.mrf.mxu0
    %v1718 = vpop.f32.mrf.mxu0
    %v1719 = vadd.f32 %v335, %v1718
    %v1720 = vpop.f32.mrf.mxu0
    %1721 = vmatprep.mubr.bf16.mxu0 0
    %1722 = vmatmul.mubr.bf16.gmra.mxu0 %v916
    %v1723 = vpop.f32.mrf.mxu0
    %v1724 = vadd.f32 %v335, %v1723
    %v1725 = vpop.f32.mrf.mxu0
    %v1726 = vpop.f32.mrf.mxu0
    %v1727 = vadd.f32 %v335, %v1726
    %v1728 = vpop.f32.mrf.mxu0
    %1729 = vmatprep.mubr.bf16.mxu0 0
    %1730 = vmatmul.mubr.bf16.gmra.mxu0 %v917
    %v1731 = vpop.f32.mrf.mxu0
    %v1732 = vadd.f32 %v335, %v1731
    %v1733 = vpop.f32.mrf.mxu0
    %v1734 = vpop.f32.mrf.mxu0
    %v1735 = vadd.f32 %v335, %v1734
    %v1736 = vpop.f32.mrf.mxu0
    %1737 = vmatprep.mubr.bf16.mxu0 0
    %1738 = vmatmul.mubr.bf16.gmra.mxu0 %v918
    %v1739 = vpop.f32.mrf.mxu0
    %v1740 = vadd.f32 %v335, %v1739
    %v1741 = vpop.f32.mrf.mxu0
    %v1742 = vpop.f32.mrf.mxu0
    %v1743 = vadd.f32 %v335, %v1742
    %v1744 = vpop.f32.mrf.mxu0
    %1745 = vmatprep.mubr.bf16.mxu0 0
    %1746 = vmatmul.mubr.bf16.gmra.mxu0 %v919
    %v1747 = vpop.f32.mrf.mxu0
    %v1748 = vadd.f32 %v335, %v1747
    %v1749 = vpop.f32.mrf.mxu0
    %v1750 = vpop.f32.mrf.mxu0
    %v1751 = vadd.f32 %v335, %v1750
    %v1752 = vpop.f32.mrf.mxu0
    %1753 = vmatprep.mubr.bf16.mxu0 0
    %1754 = vmatmul.mubr.bf16.gmra.mxu0 %v920
    %v1755 = vpop.f32.mrf.mxu0
    %v1756 = vadd.f32 %v335, %v1755
    %v1757 = vpop.f32.mrf.mxu0
    %v1758 = vpop.f32.mrf.mxu0
    %v1759 = vadd.f32 %v335, %v1758
    %v1760 = vpop.f32.mrf.mxu0
    %1761 = vmatprep.mubr.bf16.mxu0 0
    %1762 = vmatmul.mubr.bf16.gmra.mxu0 %v921
    %v1763 = vpop.f32.mrf.mxu0
    %v1764 = vadd.f32 %v335, %v1763
    %v1765 = vpop.f32.mrf.mxu0
    %v1766 = vpop.f32.mrf.mxu0
    %v1767 = vadd.f32 %v335, %v1766
    %v1768 = vpop.f32.mrf.mxu0
    %1769 = vmatprep.mubr.bf16.mxu0 0
    %1770 = vmatmul.mubr.bf16.gmra.mxu0 %v922
    %v1771 = vpop.f32.mrf.mxu0
    %v1772 = vadd.f32 %v335, %v1771
    %v1773 = vpop.f32.mrf.mxu0
    %v1774 = vpop.f32.mrf.mxu0
    %v1775 = vadd.f32 %v335, %v1774
    %v1776 = vpop.f32.mrf.mxu0
    %1777 = vmatprep.mubr.bf16.mxu0 0
    %1778 = vmatmul.mubr.bf16.gmra.mxu0 %v923
    %v1779 = vpop.f32.mrf.mxu0
    %v1780 = vadd.f32 %v335, %v1779
    %v1781 = vpop.f32.mrf.mxu0
    %v1782 = vpop.f32.mrf.mxu0
    %v1783 = vadd.f32 %v335, %v1782
    %v1784 = vpop.f32.mrf.mxu0
    %1785 = vmatprep.mubr.bf16.mxu0 0
    %1786 = vmatmul.mubr.bf16.gmra.mxu0 %v924
    %v1787 = vpop.f32.mrf.mxu0
    %v1788 = vadd.f32 %v335, %v1787
    %v1789 = vpop.f32.mrf.mxu0
    %v1790 = vpop.f32.mrf.mxu0
    %v1791 = vadd.f32 %v335, %v1790
    %v1792 = vpop.f32.mrf.mxu0
    %1793 = vmatprep.mubr.bf16.mxu0 0
    %1794 = vmatmul.mubr.bf16.gmra.mxu0 %v925
    %v1795 = vpop.f32.mrf.mxu0
    %v1796 = vadd.f32 %v335, %v1795
    %v1797 = vpop.f32.mrf.mxu0
    %v1798 = vpop.f32.mrf.mxu0
    %v1799 = vadd.f32 %v335, %v1798
    %v1800 = vpop.f32.mrf.mxu0
    %1801 = vmatprep.mubr.bf16.mxu0 0
    %1802 = vmatmul.mubr.bf16.gmra.mxu0 %v926
    %v1803 = vpop.f32.mrf.mxu0
    %v1804 = vadd.f32 %v335, %v1803
    %v1805 = vpop.f32.mrf.mxu0
    %v1806 = vpop.f32.mrf.mxu0
    %v1807 = vadd.f32 %v335, %v1806
    %v1808 = vpop.f32.mrf.mxu0
    %1809 = vmatprep.mubr.bf16.mxu0 0
    %1810 = vmatmul.mubr.bf16.gmra.mxu0 %v927
    %v1811 = vpop.f32.mrf.mxu0
    %v1812 = vadd.f32 %v335, %v1811
    %v1813 = vpop.f32.mrf.mxu0
    %v1814 = vpop.f32.mrf.mxu0
    %v1815 = vadd.f32 %v335, %v1814
    %v1816 = vpop.f32.mrf.mxu0
    %1817 = vmatprep.mubr.bf16.mxu0 0
    %1818 = vmatmul.mubr.bf16.gmra.mxu0 %v928
    %v1819 = vpop.f32.mrf.mxu0
    %v1820 = vadd.f32 %v335, %v1819
    %v1821 = vpop.f32.mrf.mxu0
    %v1822 = vpop.f32.mrf.mxu0
    %v1823 = vadd.f32 %v335, %v1822
    %v1824 = vpop.f32.mrf.mxu0
    %1825 = vmatprep.mubr.bf16.mxu0 0
    %1826 = vmatmul.mubr.bf16.gmra.mxu0 %v929
    %v1827 = vpop.f32.mrf.mxu0
    %v1828 = vadd.f32 %v335, %v1827
    %v1829 = vpop.f32.mrf.mxu0
    %v1830 = vpop.f32.mrf.mxu0
    %v1831 = vadd.f32 %v335, %v1830
    %v1832 = vpop.f32.mrf.mxu0
    %1833 = vmatprep.mubr.bf16.mxu0 0
    %1834 = vmatmul.mubr.bf16.gmra.mxu0 %v930
    %v1835 = vpop.f32.mrf.mxu0
    %v1836 = vadd.f32 %v335, %v1835
    %v1837 = vpop.f32.mrf.mxu0
    %v1838 = vpop.f32.mrf.mxu0
    %v1839 = vadd.f32 %v335, %v1838
    %v1840 = vpop.f32.mrf.mxu0
    %1841 = vmatprep.mubr.bf16.mxu0 0
    %1842 = vmatmul.mubr.bf16.gmra.mxu0 %v931
    %v1843 = vpop.f32.mrf.mxu0
    %v1844 = vadd.f32 %v335, %v1843
    %v1845 = vpop.f32.mrf.mxu0
    %v1846 = vpop.f32.mrf.mxu0
    %v1847 = vadd.f32 %v335, %v1846
    %v1848 = vpop.f32.mrf.mxu0
    %1849 = vmatprep.mubr.bf16.mxu0 0
    %1850 = vmatmul.mubr.bf16.gmra.mxu0 %v932
    %v1851 = vpop.f32.mrf.mxu0
    %v1852 = vadd.f32 %v335, %v1851
    %v1853 = vpop.f32.mrf.mxu0
    %v1854 = vpop.f32.mrf.mxu0
    %v1855 = vadd.f32 %v335, %v1854
    %v1856 = vpop.f32.mrf.mxu0
    %1857 = vmatprep.mubr.bf16.mxu0 0
    %1858 = vmatmul.mubr.bf16.gmra.mxu0 %v933
    %v1859 = vpop.f32.mrf.mxu0
    %v1860 = vadd.f32 %v335, %v1859
    %v1861 = vpop.f32.mrf.mxu0
    %v1862 = vpop.f32.mrf.mxu0
    %v1863 = vadd.f32 %v335, %v1862
    %v1864 = vpop.f32.mrf.mxu0
    %1865 = vmatprep.mubr.bf16.mxu0 0
    %1866 = vmatmul.mubr.bf16.gmra.mxu0 %v934
    %v1867 = vpop.f32.mrf.mxu0
    %v1868 = vadd.f32 %v335, %v1867
    %v1869 = vpop.f32.mrf.mxu0
    %v1870 = vpop.f32.mrf.mxu0
    %v1871 = vadd.f32 %v335, %v1870
    %v1872 = vpop.f32.mrf.mxu0
    %1873 = vmatprep.mubr.bf16.mxu0 0
    %1874 = vmatmul.mubr.bf16.gmra.mxu0 %v935
    %v1875 = vpop.f32.mrf.mxu0
    %v1876 = vadd.f32 %v335, %v1875
    %v1877 = vpop.f32.mrf.mxu0
    %v1878 = vpop.f32.mrf.mxu0
    %v1879 = vadd.f32 %v335, %v1878
    %v1880 = vpop.f32.mrf.mxu0
    %1881 = vmatprep.mubr.bf16.mxu0 0
    %1882 = vmatmul.mubr.bf16.gmra.mxu0 %v936
    %v1883 = vpop.f32.mrf.mxu0
    %v1884 = vadd.f32 %v335, %v1883
    %v1885 = vpop.f32.mrf.mxu0
    %v1886 = vpop.f32.mrf.mxu0
    %v1887 = vadd.f32 %v335, %v1886
    %v1888 = vpop.f32.mrf.mxu0
    %1889 = vmatprep.mubr.bf16.mxu0 0
    %1890 = vmatmul.mubr.bf16.gmra.mxu0 %v937
    %v1891 = vpop.f32.mrf.mxu0
    %v1892 = vadd.f32 %v335, %v1891
    %v1893 = vpop.f32.mrf.mxu0
    %v1894 = vpop.f32.mrf.mxu0
    %v1895 = vadd.f32 %v335, %v1894
    %v1896 = vpop.f32.mrf.mxu0
    %1897 = vmatprep.mubr.bf16.mxu0 0
    %1898 = vmatmul.mubr.bf16.gmra.mxu0 %v938
    %v1899 = vpop.f32.mrf.mxu0
    %v1900 = vadd.f32 %v335, %v1899
    %v1901 = vpop.f32.mrf.mxu0
    %v1902 = vpop.f32.mrf.mxu0
    %v1903 = vadd.f32 %v335, %v1902
    %v1904 = vpop.f32.mrf.mxu0
    %1905 = vmatprep.mubr.bf16.mxu0 0
    %1906 = vmatmul.mubr.bf16.gmra.mxu0 %v939
    %v1907 = vpop.f32.mrf.mxu0
    %v1908 = vadd.f32 %v335, %v1907
    %v1909 = vpop.f32.mrf.mxu0
    %v1910 = vpop.f32.mrf.mxu0
    %v1911 = vadd.f32 %v335, %v1910
    %v1912 = vpop.f32.mrf.mxu0
    %1913 = vmatprep.mubr.bf16.mxu0 0
    %1914 = vmatmul.mubr.bf16.gmra.mxu0 %v940
    %v1915 = vpop.f32.mrf.mxu0
    %v1916 = vadd.f32 %v335, %v1915
    %v1917 = vpop.f32.mrf.mxu0
    %v1918 = vpop.f32.mrf.mxu0
    %v1919 = vadd.f32 %v335, %v1918
    %v1920 = vpop.f32.mrf.mxu0
    %1921 = vmatprep.mubr.bf16.mxu0 0
    %1922 = vmatmul.mubr.bf16.gmra.mxu0 %v941
    %v1923 = vpop.f32.mrf.mxu0
    %v1924 = vadd.f32 %v335, %v1923
    %v1925 = vpop.f32.mrf.mxu0
    %v1926 = vpop.f32.mrf.mxu0
    %v1927 = vadd.f32 %v335, %v1926
    %v1928 = vpop.f32.mrf.mxu0
    %1929 = vmatprep.mubr.bf16.mxu0 0
    %1930 = vmatmul.mubr.bf16.gmra.mxu0 %v942
    %v1931 = vpop.f32.mrf.mxu0
    %v1932 = vadd.f32 %v335, %v1931
    %v1933 = vpop.f32.mrf.mxu0
    %v1934 = vpop.f32.mrf.mxu0
    %v1935 = vadd.f32 %v335, %v1934
    %v1936 = vpop.f32.mrf.mxu0
    %1937 = vmatprep.mubr.bf16.mxu0 0
    %1938 = vmatmul.mubr.bf16.gmra.mxu0 %v943
    %v1939 = vpop.f32.mrf.mxu0
    %v1940 = vadd.f32 %v335, %v1939
    %v1941 = vpop.f32.mrf.mxu0
    %v1942 = vpop.f32.mrf.mxu0
    %v1943 = vadd.f32 %v335, %v1942
    %v1944 = vpop.f32.mrf.mxu0
    %1945 = vmatprep.mubr.bf16.mxu0 0
    %1946 = vmatmul.mubr.bf16.gmra.mxu0 %v944
    %v1947 = vpop.f32.mrf.mxu0
    %v1948 = vadd.f32 %v335, %v1947
    %v1949 = vpop.f32.mrf.mxu0
    %v1950 = vpop.f32.mrf.mxu0
    %v1951 = vadd.f32 %v335, %v1950
    %v1952 = vpop.f32.mrf.mxu0
    %1953 = vmatprep.mubr.bf16.mxu0 0
    %1954 = vmatmul.mubr.bf16.gmra.mxu0 %v945
    %v1955 = vpop.f32.mrf.mxu0
    %v1956 = vadd.f32 %v335, %v1955
    %v1957 = vpop.f32.mrf.mxu0
    %v1958 = vpop.f32.mrf.mxu0
    %v1959 = vadd.f32 %v335, %v1958
    %v1960 = vpop.f32.mrf.mxu0
    %1961 = vmatprep.mubr.bf16.mxu0 0
    %1962 = vmatmul.mubr.bf16.gmra.mxu0 %v946
    %v1963 = vpop.f32.mrf.mxu0
    %v1964 = vadd.f32 %v335, %v1963
    %v1965 = vpop.f32.mrf.mxu0
    %v1966 = vpop.f32.mrf.mxu0
    %v1967 = vadd.f32 %v335, %v1966
    %v1968 = vpop.f32.mrf.mxu0
    %1969 = vmatprep.mubr.bf16.mxu0 0
    %1970 = vmatmul.mubr.bf16.gmra.mxu0 %v947
    %v1971 = vpop.f32.mrf.mxu0
    %v1972 = vadd.f32 %v335, %v1971
    %v1973 = vpop.f32.mrf.mxu0
    %v1974 = vpop.f32.mrf.mxu0
    %v1975 = vadd.f32 %v335, %v1974
    %v1976 = vpop.f32.mrf.mxu0
    %1977 = vmatprep.mubr.bf16.mxu0 0
    %1978 = vmatmul.mubr.bf16.gmra.mxu0 %v948
    %v1979 = vpop.f32.mrf.mxu0
    %v1980 = vadd.f32 %v335, %v1979
    %v1981 = vpop.f32.mrf.mxu0
    %v1982 = vpop.f32.mrf.mxu0
    %v1983 = vadd.f32 %v335, %v1982
    %v1984 = vpop.f32.mrf.mxu0
    %1985 = vmatprep.mubr.bf16.mxu0 0
    %1986 = vmatmul.mubr.bf16.gmra.mxu0 %v949
    %v1987 = vpop.f32.mrf.mxu0
    %v1988 = vadd.f32 %v335, %v1987
    %v1989 = vpop.f32.mrf.mxu0
    %v1990 = vpop.f32.mrf.mxu0
    %v1991 = vadd.f32 %v335, %v1990
    %v1992 = vpop.f32.mrf.mxu0
    %1993 = vmatprep.mubr.bf16.mxu0 0
    %1994 = vmatmul.mubr.bf16.gmra.mxu0 %v950
    %v1995 = vpop.f32.mrf.mxu0
    %v1996 = vadd.f32 %v335, %v1995
    %v1997 = vpop.f32.mrf.mxu0
    %v1998 = vpop.f32.mrf.mxu0
    %v1999 = vadd.f32 %v335, %v1998
    %v2000 = vpop.f32.mrf.mxu0
    %2001 = vmatprep.mubr.bf16.mxu0 0
    %2002 = vmatmul.mubr.bf16.gmra.mxu0 %v951
    %v2003 = vpop.f32.mrf.mxu0
    %v2004 = vadd.f32 %v335, %v2003
    %v2005 = vpop.f32.mrf.mxu0
    %v2006 = vpop.f32.mrf.mxu0
    %v2007 = vadd.f32 %v335, %v2006
    %v2008 = vpop.f32.mrf.mxu0
    %2009 = vmatprep.mubr.bf16.mxu0 0
    %2010 = vmatmul.mubr.bf16.gmra.mxu0 %v952
    %v2011 = vpop.f32.mrf.mxu0
    %v2012 = vadd.f32 %v335, %v2011
    %v2013 = vpop.f32.mrf.mxu0
    %v2014 = vpop.f32.mrf.mxu0
    %v2015 = vadd.f32 %v335, %v2014
    %v2016 = vpop.f32.mrf.mxu0
    %2017 = vmatprep.mubr.bf16.mxu0 0
    %2018 = vmatmul.mubr.bf16.gmra.mxu0 %v953
    %v2019 = vpop.f32.mrf.mxu0
    %v2020 = vadd.f32 %v335, %v2019
    %v2021 = vpop.f32.mrf.mxu0
    %v2022 = vpop.f32.mrf.mxu0
    %v2023 = vadd.f32 %v335, %v2022
    %v2024 = vpop.f32.mrf.mxu0
    %2025 = vmatprep.mubr.bf16.mxu0 0
    %2026 = vmatmul.mubr.bf16.gmra.mxu0 %v954
    %v2027 = vpop.f32.mrf.mxu0
    %v2028 = vadd.f32 %v335, %v2027
    %v2029 = vpop.f32.mrf.mxu0
    %v2030 = vpop.f32.mrf.mxu0
    %v2031 = vadd.f32 %v335, %v2030
    %v2032 = vpop.f32.mrf.mxu0
    %2033 = vmatprep.mubr.bf16.mxu0 0
    %2034 = vmatmul.mubr.bf16.gmra.mxu0 %v955
    %v2035 = vpop.f32.mrf.mxu0
    %v2036 = vadd.f32 %v335, %v2035
    %v2037 = vpop.f32.mrf.mxu0
    %v2038 = vpop.f32.mrf.mxu0
    %v2039 = vadd.f32 %v335, %v2038
    %v2040 = vpop.f32.mrf.mxu0
    %2041 = vmatprep.mubr.bf16.mxu0 0
    %2042 = vmatmul.mubr.bf16.gmra.mxu0 %v956
    %v2043 = vpop.f32.mrf.mxu0
    %v2044 = vadd.f32 %v335, %v2043
    %v2045 = vpop.f32.mrf.mxu0
    %v2046 = vpop.f32.mrf.mxu0
    %v2047 = vadd.f32 %v335, %v2046
    %v2048 = vpop.f32.mrf.mxu0
    %2049 = vmatprep.mubr.bf16.mxu0 0
    %2050 = vmatmul.mubr.bf16.gmra.mxu0 %v957
    %v2051 = vpop.f32.mrf.mxu0
    %v2052 = vadd.f32 %v335, %v2051
    %v2053 = vpop.f32.mrf.mxu0
    %v2054 = vpop.f32.mrf.mxu0
    %v2055 = vadd.f32 %v335, %v2054
    %v2056 = vpop.f32.mrf.mxu0
    %2057 = vmatprep.mubr.bf16.mxu0 0
    %2058 = vmatmul.mubr.bf16.gmra.mxu0 %v958
    %v2059 = vpop.f32.mrf.mxu0
    %v2060 = vadd.f32 %v335, %v2059
    %v2061 = vpop.f32.mrf.mxu0
    %v2062 = vpop.f32.mrf.mxu0
    %v2063 = vadd.f32 %v335, %v2062
    %v2064 = vpop.f32.mrf.mxu0
    %2065 = vmatprep.mubr.bf16.mxu0 0
    %2066 = vmatmul.mubr.bf16.gmra.mxu0 %v959
    %v2067 = vpop.f32.mrf.mxu0
    %v2068 = vadd.f32 %v335, %v2067
    %v2069 = vpop.f32.mrf.mxu0
    %v2070 = vpop.f32.mrf.mxu0
    %v2071 = vadd.f32 %v335, %v2070
    %v2072 = vpop.f32.mrf.mxu0
    %2073 = vmatprep.mubr.bf16.mxu0 0
    %2074 = vmatmul.mubr.bf16.gmra.mxu0 %v960
    %v2075 = vpop.f32.mrf.mxu0
    %v2076 = vadd.f32 %v335, %v2075
    %v2077 = vpop.f32.mrf.mxu0
    %v2078 = vpop.f32.mrf.mxu0
    %v2079 = vadd.f32 %v335, %v2078
    %v2080 = vpop.f32.mrf.mxu0
    %2081 = vmatprep.mubr.bf16.mxu0 0
    %2082 = vmatmul.mubr.bf16.gmra.mxu0 %v961
    %v2083 = vpop.f32.mrf.mxu0
    %v2084 = vadd.f32 %v335, %v2083
    %v2085 = vpop.f32.mrf.mxu0
    %v2086 = vpop.f32.mrf.mxu0
    %v2087 = vadd.f32 %v335, %v2086
    %v2088 = vpop.f32.mrf.mxu0
    %2089 = vmatprep.mubr.bf16.mxu0 0
    %2090 = vmatmul.mubr.bf16.gmra.mxu0 %v962
    %v2091 = vpop.f32.mrf.mxu0
    %v2092 = vadd.f32 %v335, %v2091
    %v2093 = vpop.f32.mrf.mxu0
    %v2094 = vpop.f32.mrf.mxu0
    %v2095 = vadd.f32 %v335, %v2094
    %v2096 = vpop.f32.mrf.mxu0
    %2097 = vmatprep.mubr.bf16.mxu0 0
    %2098 = vmatmul.mubr.bf16.gmra.mxu0 %v963
    %v2099 = vpop.f32.mrf.mxu0
    %v2100 = vadd.f32 %v335, %v2099
    %v2101 = vpop.f32.mrf.mxu0
    %v2102 = vpop.f32.mrf.mxu0
    %v2103 = vadd.f32 %v335, %v2102
    %v2104 = vpop.f32.mrf.mxu0
    %2105 = vmatprep.mubr.bf16.mxu0 0
    %2106 = vmatmul.mubr.bf16.gmra.mxu0 %v964
    %v2107 = vpop.f32.mrf.mxu0
    %v2108 = vadd.f32 %v335, %v2107
    %v2109 = vpop.f32.mrf.mxu0
    %v2110 = vpop.f32.mrf.mxu0
    %v2111 = vadd.f32 %v335, %v2110
    %v2112 = vpop.f32.mrf.mxu0
    %2113 = vmatprep.mubr.bf16.mxu0 0
    %2114 = vmatmul.mubr.bf16.gmra.mxu0 %v965
    %v2115 = vpop.f32.mrf.mxu0
    %v2116 = vadd.f32 %v335, %v2115
    %v2117 = vpop.f32.mrf.mxu0
    %v2118 = vpop.f32.mrf.mxu0
    %v2119 = vadd.f32 %v335, %v2118
    %v2120 = vpop.f32.mrf.mxu0
    %2121 = vmatprep.mubr.bf16.mxu0 0
    %2122 = vmatmul.mubr.bf16.gmra.mxu0 %v966
    %v2123 = vpop.f32.mrf.mxu0
    %v2124 = vadd.f32 %v335, %v2123
    %v2125 = vpop.f32.mrf.mxu0
    %v2126 = vpop.f32.mrf.mxu0
    %v2127 = vadd.f32 %v335, %v2126
    %v2128 = vpop.f32.mrf.mxu0
    %2129 = vmatprep.mubr.bf16.mxu0 0
    %2130 = vmatmul.mubr.bf16.gmra.mxu0 %v967
    %v2131 = vpop.f32.mrf.mxu0
    %v2132 = vadd.f32 %v335, %v2131
    %v2133 = vpop.f32.mrf.mxu0
    %v2134 = vpop.f32.mrf.mxu0
    %v2135 = vadd.f32 %v335, %v2134
    %v2136 = vpop.f32.mrf.mxu0
    %2137 = vmatprep.mubr.bf16.mxu0 0
    %2138 = vmatmul.mubr.bf16.gmra.mxu0 %v968
    %v2139 = vpop.f32.mrf.mxu0
    %v2140 = vadd.f32 %v335, %v2139
    %v2141 = vpop.f32.mrf.mxu0
    %v2142 = vpop.f32.mrf.mxu0
    %v2143 = vadd.f32 %v335, %v2142
    %v2144 = vpop.f32.mrf.mxu0
    %2145 = vmatprep.mubr.bf16.mxu0 0
    %2146 = vmatmul.mubr.bf16.gmra.mxu0 %v969
    %v2147 = vpop.f32.mrf.mxu0
    %v2148 = vadd.f32 %v335, %v2147
    %v2149 = vpop.f32.mrf.mxu0
    %v2150 = vpop.f32.mrf.mxu0
    %v2151 = vadd.f32 %v335, %v2150
    %v2152 = vpop.f32.mrf.mxu0
    %2153 = vmatprep.mubr.bf16.mxu0 0
    %2154 = vmatmul.mubr.bf16.gmra.mxu0 %v970
    %v2155 = vpop.f32.mrf.mxu0
    %v2156 = vadd.f32 %v335, %v2155
    %v2157 = vpop.f32.mrf.mxu0
    %v2158 = vpop.f32.mrf.mxu0
    %v2159 = vadd.f32 %v335, %v2158
    %v2160 = vpop.f32.mrf.mxu0
    %2161 = vmatprep.mubr.bf16.mxu0 0
    %2162 = vmatmul.mubr.bf16.gmra.mxu0 %v971
    %v2163 = vpop.f32.mrf.mxu0
    %v2164 = vadd.f32 %v335, %v2163
    %v2165 = vpop.f32.mrf.mxu0
    %v2166 = vpop.f32.mrf.mxu0
    %v2167 = vadd.f32 %v335, %v2166
    %v2168 = vpop.f32.mrf.mxu0
    %2169 = vmatprep.mubr.bf16.mxu0 0
    %2170 = vmatmul.mubr.bf16.gmra.mxu0 %v972
    %v2171 = vpop.f32.mrf.mxu0
    %v2172 = vadd.f32 %v335, %v2171
    %v2173 = vpop.f32.mrf.mxu0
    %v2174 = vpop.f32.mrf.mxu0
    %v2175 = vadd.f32 %v335, %v2174
    %v2176 = vpop.f32.mrf.mxu0
    %2177 = vmatprep.mubr.bf16.mxu0 0
    %2178 = vmatmul.mubr.bf16.gmra.mxu0 %v973
    %v2179 = vpop.f32.mrf.mxu0
    %v2180 = vadd.f32 %v335, %v2179
    %v2181 = vpop.f32.mrf.mxu0
    %v2182 = vpop.f32.mrf.mxu0
    %v2183 = vadd.f32 %v335, %v2182
    %v2184 = vpop.f32.mrf.mxu0
    %2185 = vmatprep.mubr.bf16.mxu0 0
    %2186 = vmatmul.mubr.bf16.gmra.mxu0 %v974
    %v2187 = vpop.f32.mrf.mxu0
    %v2188 = vadd.f32 %v335, %v2187
    %v2189 = vpop.f32.mrf.mxu0
    %v2190 = vpop.f32.mrf.mxu0
    %v2191 = vadd.f32 %v335, %v2190
    %v2192 = vpop.f32.mrf.mxu0
    %2193 = vmatprep.mubr.bf16.mxu0 0
    %2194 = vmatmul.mubr.bf16.gmra.mxu0 %v975
    %v2195 = vpop.f32.mrf.mxu0
    %v2196 = vadd.f32 %v335, %v2195
    %v2197 = vpop.f32.mrf.mxu0
    %v2198 = vpop.f32.mrf.mxu0
    %v2199 = vadd.f32 %v335, %v2198
    %v2200 = vpop.f32.mrf.mxu0
    %2201 = vmatprep.mubr.bf16.mxu0 0
    %2202 = vmatmul.mubr.bf16.gmra.mxu0 %v976
    %v2203 = vpop.f32.mrf.mxu0
    %v2204 = vadd.f32 %v335, %v2203
    %v2205 = vpop.f32.mrf.mxu0
    %v2206 = vpop.f32.mrf.mxu0
    %v2207 = vadd.f32 %v335, %v2206
    %v2208 = vpop.f32.mrf.mxu0
    %2209 = vdwg.mxu0
    %v2210 = vmax.f32 %v1188, 0.0
    %v2211 = vmax.f32 %v1191, 0.0
    %v2212 = vmax.f32 %v1196, 0.0
    %v2213 = vmax.f32 %v1199, 0.0
    %v2214 = vmax.f32 %v1204, 0.0
    %v2215 = vmax.f32 %v1207, 0.0
    %v2216 = vmax.f32 %v1212, 0.0
    %v2217 = vmax.f32 %v1215, 0.0
    %v2218 = vmax.f32 %v1220, 0.0
    %v2219 = vmax.f32 %v1223, 0.0
    %v2220 = vmax.f32 %v1228, 0.0
    %v2221 = vmax.f32 %v1231, 0.0
    %v2222 = vmax.f32 %v1236, 0.0
    %v2223 = vmax.f32 %v1239, 0.0
    %v2224 = vmax.f32 %v1244, 0.0
    %v2225 = vmax.f32 %v1247, 0.0
    %v2226 = vmax.f32 %v1252, 0.0
    %v2227 = vmax.f32 %v1255, 0.0
    %v2228 = vmax.f32 %v1260, 0.0
    %v2229 = vmax.f32 %v1263, 0.0
    %v2230 = vmax.f32 %v1268, 0.0
    %v2231 = vmax.f32 %v1271, 0.0
    %v2232 = vmax.f32 %v1276, 0.0
    %v2233 = vmax.f32 %v1279, 0.0
    %v2234 = vmax.f32 %v1284, 0.0
    %v2235 = vmax.f32 %v1287, 0.0
    %v2236 = vmax.f32 %v1292, 0.0
    %v2237 = vmax.f32 %v1295, 0.0
    %v2238 = vmax.f32 %v1300, 0.0
    %v2239 = vmax.f32 %v1303, 0.0
    %v2240 = vmax.f32 %v1308, 0.0
    %v2241 = vmax.f32 %v1311, 0.0
    %v2242 = vmax.f32 %v1316, 0.0
    %v2243 = vmax.f32 %v1319, 0.0
    %v2244 = vmax.f32 %v1324, 0.0
    %v2245 = vmax.f32 %v1327, 0.0
    %v2246 = vmax.f32 %v1332, 0.0
    %v2247 = vmax.f32 %v1335, 0.0
    %v2248 = vmax.f32 %v1340, 0.0
    %v2249 = vmax.f32 %v1343, 0.0
    %v2250 = vmax.f32 %v1348, 0.0
    %v2251 = vmax.f32 %v1351, 0.0
    %v2252 = vmax.f32 %v1356, 0.0
    %v2253 = vmax.f32 %v1359, 0.0
    %v2254 = vmax.f32 %v1364, 0.0
    %v2255 = vmax.f32 %v1367, 0.0
    %v2256 = vmax.f32 %v1372, 0.0
    %v2257 = vmax.f32 %v1375, 0.0
    %v2258 = vmax.f32 %v1380, 0.0
    %v2259 = vmax.f32 %v1383, 0.0
    %v2260 = vmax.f32 %v1388, 0.0
    %v2261 = vmax.f32 %v1391, 0.0
    %v2262 = vmax.f32 %v1396, 0.0
    %v2263 = vmax.f32 %v1399, 0.0
    %v2264 = vmax.f32 %v1404, 0.0
    %v2265 = vmax.f32 %v1407, 0.0
    %v2266 = vmax.f32 %v1412, 0.0
    %v2267 = vmax.f32 %v1415, 0.0
    %v2268 = vmax.f32 %v1420, 0.0
    %v2269 = vmax.f32 %v1423, 0.0
    %v2270 = vmax.f32 %v1428, 0.0
    %v2271 = vmax.f32 %v1431, 0.0
    %v2272 = vmax.f32 %v1436, 0.0
    %v2273 = vmax.f32 %v1439, 0.0
    %v2274 = vmax.f32 %v1444, 0.0
    %v2275 = vmax.f32 %v1447, 0.0
    %v2276 = vmax.f32 %v1452, 0.0
    %v2277 = vmax.f32 %v1455, 0.0
    %v2278 = vmax.f32 %v1460, 0.0
    %v2279 = vmax.f32 %v1463, 0.0
    %v2280 = vmax.f32 %v1468, 0.0
    %v2281 = vmax.f32 %v1471, 0.0
    %v2282 = vmax.f32 %v1476, 0.0
    %v2283 = vmax.f32 %v1479, 0.0
    %v2284 = vmax.f32 %v1484, 0.0
    %v2285 = vmax.f32 %v1487, 0.0
    %v2286 = vmax.f32 %v1492, 0.0
    %v2287 = vmax.f32 %v1495, 0.0
    %v2288 = vmax.f32 %v1500, 0.0
    %v2289 = vmax.f32 %v1503, 0.0
    %v2290 = vmax.f32 %v1508, 0.0
    %v2291 = vmax.f32 %v1511, 0.0
    %v2292 = vmax.f32 %v1516, 0.0
    %v2293 = vmax.f32 %v1519, 0.0
    %v2294 = vmax.f32 %v1524, 0.0
    %v2295 = vmax.f32 %v1527, 0.0
    %v2296 = vmax.f32 %v1532, 0.0
    %v2297 = vmax.f32 %v1535, 0.0
    %v2298 = vmax.f32 %v1540, 0.0
    %v2299 = vmax.f32 %v1543, 0.0
    %v2300 = vmax.f32 %v1548, 0.0
    %v2301 = vmax.f32 %v1551, 0.0
    %v2302 = vmax.f32 %v1556, 0.0
    %v2303 = vmax.f32 %v1559, 0.0
    %v2304 = vmax.f32 %v1564, 0.0
    %v2305 = vmax.f32 %v1567, 0.0
    %v2306 = vmax.f32 %v1572, 0.0
    %v2307 = vmax.f32 %v1575, 0.0
    %v2308 = vmax.f32 %v1580, 0.0
    %v2309 = vmax.f32 %v1583, 0.0
    %v2310 = vmax.f32 %v1588, 0.0
    %v2311 = vmax.f32 %v1591, 0.0
    %v2312 = vmax.f32 %v1596, 0.0
    %v2313 = vmax.f32 %v1599, 0.0
    %v2314 = vmax.f32 %v1604, 0.0
    %v2315 = vmax.f32 %v1607, 0.0
    %v2316 = vmax.f32 %v1612, 0.0
    %v2317 = vmax.f32 %v1615, 0.0
    %v2318 = vmax.f32 %v1620, 0.0
    %v2319 = vmax.f32 %v1623, 0.0
    %v2320 = vmax.f32 %v1628, 0.0
    %v2321 = vmax.f32 %v1631, 0.0
    %v2322 = vmax.f32 %v1636, 0.0
    %v2323 = vmax.f32 %v1639, 0.0
    %v2324 = vmax.f32 %v1644, 0.0
    %v2325 = vmax.f32 %v1647, 0.0
    %v2326 = vmax.f32 %v1652, 0.0
    %v2327 = vmax.f32 %v1655, 0.0
    %v2328 = vmax.f32 %v1660, 0.0
    %v2329 = vmax.f32 %v1663, 0.0
    %v2330 = vmax.f32 %v1668, 0.0
    %v2331 = vmax.f32 %v1671, 0.0
    %v2332 = vmax.f32 %v1676, 0.0
    %v2333 = vmax.f32 %v1679, 0.0
    %v2334 = vmax.f32 %v1684, 0.0
    %v2335 = vmax.f32 %v1687, 0.0
    %v2336 = vmax.f32 %v1692, 0.0
    %v2337 = vmax.f32 %v1695, 0.0
    %v2338 = vmax.f32 %v1700, 0.0
    %v2339 = vmax.f32 %v1703, 0.0
    %v2340 = vmax.f32 %v1708, 0.0
    %v2341 = vmax.f32 %v1711, 0.0
    %v2342 = vmax.f32 %v1716, 0.0
    %v2343 = vmax.f32 %v1719, 0.0
    %v2344 = vmax.f32 %v1724, 0.0
    %v2345 = vmax.f32 %v1727, 0.0
    %v2346 = vmax.f32 %v1732, 0.0
    %v2347 = vmax.f32 %v1735, 0.0
    %v2348 = vmax.f32 %v1740, 0.0
    %v2349 = vmax.f32 %v1743, 0.0
    %v2350 = vmax.f32 %v1748, 0.0
    %v2351 = vmax.f32 %v1751, 0.0
    %v2352 = vmax.f32 %v1756, 0.0
    %v2353 = vmax.f32 %v1759, 0.0
    %v2354 = vmax.f32 %v1764, 0.0
    %v2355 = vmax.f32 %v1767, 0.0
    %v2356 = vmax.f32 %v1772, 0.0
    %v2357 = vmax.f32 %v1775, 0.0
    %v2358 = vmax.f32 %v1780, 0.0
    %v2359 = vmax.f32 %v1783, 0.0
    %v2360 = vmax.f32 %v1788, 0.0
    %v2361 = vmax.f32 %v1791, 0.0
    %v2362 = vmax.f32 %v1796, 0.0
    %v2363 = vmax.f32 %v1799, 0.0
    %v2364 = vmax.f32 %v1804, 0.0
    %v2365 = vmax.f32 %v1807, 0.0
    %v2366 = vmax.f32 %v1812, 0.0
    %v2367 = vmax.f32 %v1815, 0.0
    %v2368 = vmax.f32 %v1820, 0.0
    %v2369 = vmax.f32 %v1823, 0.0
    %v2370 = vmax.f32 %v1828, 0.0
    %v2371 = vmax.f32 %v1831, 0.0
    %v2372 = vmax.f32 %v1836, 0.0
    %v2373 = vmax.f32 %v1839, 0.0
    %v2374 = vmax.f32 %v1844, 0.0
    %v2375 = vmax.f32 %v1847, 0.0
    %v2376 = vmax.f32 %v1852, 0.0
    %v2377 = vmax.f32 %v1855, 0.0
    %v2378 = vmax.f32 %v1860, 0.0
    %v2379 = vmax.f32 %v1863, 0.0
    %v2380 = vmax.f32 %v1868, 0.0
    %v2381 = vmax.f32 %v1871, 0.0
    %v2382 = vmax.f32 %v1876, 0.0
    %v2383 = vmax.f32 %v1879, 0.0
    %v2384 = vmax.f32 %v1884, 0.0
    %v2385 = vmax.f32 %v1887, 0.0
    %v2386 = vmax.f32 %v1892, 0.0
    %v2387 = vmax.f32 %v1895, 0.0
    %v2388 = vmax.f32 %v1900, 0.0
    %v2389 = vmax.f32 %v1903, 0.0
    %v2390 = vmax.f32 %v1908, 0.0
    %v2391 = vmax.f32 %v1911, 0.0
    %v2392 = vmax.f32 %v1916, 0.0
    %v2393 = vmax.f32 %v1919, 0.0
    %v2394 = vmax.f32 %v1924, 0.0
    %v2395 = vmax.f32 %v1927, 0.0
    %v2396 = vmax.f32 %v1932, 0.0
    %v2397 = vmax.f32 %v1935, 0.0
    %v2398 = vmax.f32 %v1940, 0.0
    %v2399 = vmax.f32 %v1943, 0.0
    %v2400 = vmax.f32 %v1948, 0.0
    %v2401 = vmax.f32 %v1951, 0.0
    %v2402 = vmax.f32 %v1956, 0.0
    %v2403 = vmax.f32 %v1959, 0.0
    %v2404 = vmax.f32 %v1964, 0.0
    %v2405 = vmax.f32 %v1967, 0.0
    %v2406 = vmax.f32 %v1972, 0.0
    %v2407 = vmax.f32 %v1975, 0.0
    %v2408 = vmax.f32 %v1980, 0.0
    %v2409 = vmax.f32 %v1983, 0.0
    %v2410 = vmax.f32 %v1988, 0.0
    %v2411 = vmax.f32 %v1991, 0.0
    %v2412 = vmax.f32 %v1996, 0.0
    %v2413 = vmax.f32 %v1999, 0.0
    %v2414 = vmax.f32 %v2004, 0.0
    %v2415 = vmax.f32 %v2007, 0.0
    %v2416 = vmax.f32 %v2012, 0.0
    %v2417 = vmax.f32 %v2015, 0.0
    %v2418 = vmax.f32 %v2020, 0.0
    %v2419 = vmax.f32 %v2023, 0.0
    %v2420 = vmax.f32 %v2028, 0.0
    %v2421 = vmax.f32 %v2031, 0.0
    %v2422 = vmax.f32 %v2036, 0.0
    %v2423 = vmax.f32 %v2039, 0.0
    %v2424 = vmax.f32 %v2044, 0.0
    %v2425 = vmax.f32 %v2047, 0.0
    %v2426 = vmax.f32 %v2052, 0.0
    %v2427 = vmax.f32 %v2055, 0.0
    %v2428 = vmax.f32 %v2060, 0.0
    %v2429 = vmax.f32 %v2063, 0.0
    %v2430 = vmax.f32 %v2068, 0.0
    %v2431 = vmax.f32 %v2071, 0.0
    %v2432 = vmax.f32 %v2076, 0.0
    %v2433 = vmax.f32 %v2079, 0.0
    %v2434 = vmax.f32 %v2084, 0.0
    %v2435 = vmax.f32 %v2087, 0.0
    %v2436 = vmax.f32 %v2092, 0.0
    %v2437 = vmax.f32 %v2095, 0.0
    %v2438 = vmax.f32 %v2100, 0.0
    %v2439 = vmax.f32 %v2103, 0.0
    %v2440 = vmax.f32 %v2108, 0.0
    %v2441 = vmax.f32 %v2111, 0.0
    %v2442 = vmax.f32 %v2116, 0.0
    %v2443 = vmax.f32 %v2119, 0.0
    %v2444 = vmax.f32 %v2124, 0.0
    %v2445 = vmax.f32 %v2127, 0.0
    %v2446 = vmax.f32 %v2132, 0.0
    %v2447 = vmax.f32 %v2135, 0.0
    %v2448 = vmax.f32 %v2140, 0.0
    %v2449 = vmax.f32 %v2143, 0.0
    %v2450 = vmax.f32 %v2148, 0.0
    %v2451 = vmax.f32 %v2151, 0.0
    %v2452 = vmax.f32 %v2156, 0.0
    %v2453 = vmax.f32 %v2159, 0.0
    %v2454 = vmax.f32 %v2164, 0.0
    %v2455 = vmax.f32 %v2167, 0.0
    %v2456 = vmax.f32 %v2172, 0.0
    %v2457 = vmax.f32 %v2175, 0.0
    %v2458 = vmax.f32 %v2180, 0.0
    %v2459 = vmax.f32 %v2183, 0.0
    %v2460 = vmax.f32 %v2188, 0.0
    %v2461 = vmax.f32 %v2191, 0.0
    %v2462 = vmax.f32 %v2196, 0.0
    %v2463 = vmax.f32 %v2199, 0.0
    %v2464 = vmax.f32 %v2204, 0.0
    %v2465 = vmax.f32 %v2207, 0.0
    %v2466 = vadd.f32 %v2210, %v2211
    %v2467 = vadd.f32 %v2466, %v2212
    %v2468 = vadd.f32 %v2467, %v2213
    %v2469 = vadd.f32 %v2468, %v2214
    %v2470 = vadd.f32 %v2469, %v2215
    %v2471 = vadd.f32 %v2470, %v2216
    %v2472 = vadd.f32 %v2471, %v2217
    %v2473 = vadd.f32 %v2472, %v2218
    %v2474 = vadd.f32 %v2473, %v2219
    %v2475 = vadd.f32 %v2474, %v2220
    %v2476 = vadd.f32 %v2475, %v2221
    %v2477 = vadd.f32 %v2476, %v2222
    %v2478 = vadd.f32 %v2477, %v2223
    %v2479 = vadd.f32 %v2478, %v2224
    %v2480 = vadd.f32 %v2479, %v2225
    %v2481 = vadd.f32 %v2480, %v2226
    %v2482 = vadd.f32 %v2481, %v2227
    %v2483 = vadd.f32 %v2482, %v2228
    %v2484 = vadd.f32 %v2483, %v2229
    %v2485 = vadd.f32 %v2484, %v2230
    %v2486 = vadd.f32 %v2485, %v2231
    %v2487 = vadd.f32 %v2486, %v2232
    %v2488 = vadd.f32 %v2487, %v2233
    %v2489 = vadd.f32 %v2488, %v2234
    %v2490 = vadd.f32 %v2489, %v2235
    %v2491 = vadd.f32 %v2490, %v2236
    %v2492 = vadd.f32 %v2491, %v2237
    %v2493 = vadd.f32 %v2492, %v2238
    %v2494 = vadd.f32 %v2493, %v2239
    %v2495 = vadd.f32 %v2494, %v2240
    %v2496 = vadd.f32 %v2495, %v2241
    %v2497 = vrot.slane %v2496, 4
    %v2498 = vadd.f32 %v2496, %v2497
    %v2499 = vrot.slane %v2498, 2
    %v2500 = vadd.f32 %v2498, %v2499
    %v2501 = vrot.slane %v2500, 1
    %v2502 = vadd.f32 %v2500, %v2501
    %v2503 = vadd.f32 %v2242, %v2243
    %v2504 = vadd.f32 %v2503, %v2244
    %v2505 = vadd.f32 %v2504, %v2245
    %v2506 = vadd.f32 %v2505, %v2246
    %v2507 = vadd.f32 %v2506, %v2247
    %v2508 = vadd.f32 %v2507, %v2248
    %v2509 = vadd.f32 %v2508, %v2249
    %v2510 = vadd.f32 %v2509, %v2250
    %v2511 = vadd.f32 %v2510, %v2251
    %v2512 = vadd.f32 %v2511, %v2252
    %v2513 = vadd.f32 %v2512, %v2253
    %v2514 = vadd.f32 %v2513, %v2254
    %v2515 = vadd.f32 %v2514, %v2255
    %v2516 = vadd.f32 %v2515, %v2256
    %v2517 = vadd.f32 %v2516, %v2257
    %v2518 = vadd.f32 %v2517, %v2258
    %v2519 = vadd.f32 %v2518, %v2259
    %v2520 = vadd.f32 %v2519, %v2260
    %v2521 = vadd.f32 %v2520, %v2261
    %v2522 = vadd.f32 %v2521, %v2262
    %v2523 = vadd.f32 %v2522, %v2263
    %v2524 = vadd.f32 %v2523, %v2264
    %v2525 = vadd.f32 %v2524, %v2265
    %v2526 = vadd.f32 %v2525, %v2266
    %v2527 = vadd.f32 %v2526, %v2267
    %v2528 = vadd.f32 %v2527, %v2268
    %v2529 = vadd.f32 %v2528, %v2269
    %v2530 = vadd.f32 %v2529, %v2270
    %v2531 = vadd.f32 %v2530, %v2271
    %v2532 = vadd.f32 %v2531, %v2272
    %v2533 = vadd.f32 %v2532, %v2273
    %v2534 = vrot.slane %v2533, 4
    %v2535 = vadd.f32 %v2533, %v2534
    %v2536 = vrot.slane %v2535, 2
    %v2537 = vadd.f32 %v2535, %v2536
    %v2538 = vrot.slane %v2537, 1
    %v2539 = vadd.f32 %v2537, %v2538
    %v2540 = vadd.f32 %v2274, %v2275
    %v2541 = vadd.f32 %v2540, %v2276
    %v2542 = vadd.f32 %v2541, %v2277
    %v2543 = vadd.f32 %v2542, %v2278
    %v2544 = vadd.f32 %v2543, %v2279
    %v2545 = vadd.f32 %v2544, %v2280
    %v2546 = vadd.f32 %v2545, %v2281
    %v2547 = vadd.f32 %v2546, %v2282
    %v2548 = vadd.f32 %v2547, %v2283
    %v2549 = vadd.f32 %v2548, %v2284
    %v2550 = vadd.f32 %v2549, %v2285
    %v2551 = vadd.f32 %v2550, %v2286
    %v2552 = vadd.f32 %v2551, %v2287
    %v2553 = vadd.f32 %v2552, %v2288
    %v2554 = vadd.f32 %v2553, %v2289
    %v2555 = vadd.f32 %v2554, %v2290
    %v2556 = vadd.f32 %v2555, %v2291
    %v2557 = vadd.f32 %v2556, %v2292
    %v2558 = vadd.f32 %v2557, %v2293
    %v2559 = vadd.f32 %v2558, %v2294
    %v2560 = vadd.f32 %v2559, %v2295
    %v2561 = vadd.f32 %v2560, %v2296
    %v2562 = vadd.f32 %v2561, %v2297
    %v2563 = vadd.f32 %v2562, %v2298
    %v2564 = vadd.f32 %v2563, %v2299
    %v2565 = vadd.f32 %v2564, %v2300
    %v2566 = vadd.f32 %v2565, %v2301
    %v2567 = vadd.f32 %v2566, %v2302
    %v2568 = vadd.f32 %v2567, %v2303
    %v2569 = vadd.f32 %v2568, %v2304
    %v2570 = vadd.f32 %v2569, %v2305
    %v2571 = vrot.slane %v2570, 4
    %v2572 = vadd.f32 %v2570, %v2571
    %v2573 = vrot.slane %v2572, 2
    %v2574 = vadd.f32 %v2572, %v2573
    %v2575 = vrot.slane %v2574, 1
    %v2576 = vadd.f32 %v2574, %v2575
    %v2577 = vadd.f32 %v2306, %v2307
    %v2578 = vadd.f32 %v2577, %v2308
    %v2579 = vadd.f32 %v2578, %v2309
    %v2580 = vadd.f32 %v2579, %v2310
    %v2581 = vadd.f32 %v2580, %v2311
    %v2582 = vadd.f32 %v2581, %v2312
    %v2583 = vadd.f32 %v2582, %v2313
    %v2584 = vadd.f32 %v2583, %v2314
    %v2585 = vadd.f32 %v2584, %v2315
    %v2586 = vadd.f32 %v2585, %v2316
    %v2587 = vadd.f32 %v2586, %v2317
    %v2588 = vadd.f32 %v2587, %v2318
    %v2589 = vadd.f32 %v2588, %v2319
    %v2590 = vadd.f32 %v2589, %v2320
    %v2591 = vadd.f32 %v2590, %v2321
    %v2592 = vadd.f32 %v2591, %v2322
    %v2593 = vadd.f32 %v2592, %v2323
    %v2594 = vadd.f32 %v2593, %v2324
    %v2595 = vadd.f32 %v2594, %v2325
    %v2596 = vadd.f32 %v2595, %v2326
    %v2597 = vadd.f32 %v2596, %v2327
    %v2598 = vadd.f32 %v2597, %v2328
    %v2599 = vadd.f32 %v2598, %v2329
    %v2600 = vadd.f32 %v2599, %v2330
    %v2601 = vadd.f32 %v2600, %v2331
    %v2602 = vadd.f32 %v2601, %v2332
    %v2603 = vadd.f32 %v2602, %v2333
    %v2604 = vadd.f32 %v2603, %v2334
    %v2605 = vadd.f32 %v2604, %v2335
    %v2606 = vadd.f32 %v2605, %v2336
    %v2607 = vadd.f32 %v2606, %v2337
    %v2608 = vrot.slane %v2607, 4
    %v2609 = vadd.f32 %v2607, %v2608
    %v2610 = vrot.slane %v2609, 2
    %v2611 = vadd.f32 %v2609, %v2610
    %v2612 = vrot.slane %v2611, 1
    %v2613 = vadd.f32 %v2611, %v2612
    %v2614 = vadd.f32 %v2338, %v2339
    %v2615 = vadd.f32 %v2614, %v2340
    %v2616 = vadd.f32 %v2615, %v2341
    %v2617 = vadd.f32 %v2616, %v2342
    %v2618 = vadd.f32 %v2617, %v2343
    %v2619 = vadd.f32 %v2618, %v2344
    %v2620 = vadd.f32 %v2619, %v2345
    %v2621 = vadd.f32 %v2620, %v2346
    %v2622 = vadd.f32 %v2621, %v2347
    %v2623 = vadd.f32 %v2622, %v2348
    %v2624 = vadd.f32 %v2623, %v2349
    %v2625 = vadd.f32 %v2624, %v2350
    %v2626 = vadd.f32 %v2625, %v2351
    %v2627 = vadd.f32 %v2626, %v2352
    %v2628 = vadd.f32 %v2627, %v2353
    %v2629 = vadd.f32 %v2628, %v2354
    %v2630 = vadd.f32 %v2629, %v2355
    %v2631 = vadd.f32 %v2630, %v2356
    %v2632 = vadd.f32 %v2631, %v2357
    %v2633 = vadd.f32 %v2632, %v2358
    %v2634 = vadd.f32 %v2633, %v2359
    %v2635 = vadd.f32 %v2634, %v2360
    %v2636 = vadd.f32 %v2635, %v2361
    %v2637 = vadd.f32 %v2636, %v2362
    %v2638 = vadd.f32 %v2637, %v2363
    %v2639 = vadd.f32 %v2638, %v2364
    %v2640 = vadd.f32 %v2639, %v2365
    %v2641 = vadd.f32 %v2640, %v2366
    %v2642 = vadd.f32 %v2641, %v2367
    %v2643 = vadd.f32 %v2642, %v2368
    %v2644 = vadd.f32 %v2643, %v2369
    %v2645 = vrot.slane %v2644, 4
    %v2646 = vadd.f32 %v2644, %v2645
    %v2647 = vrot.slane %v2646, 2
    %v2648 = vadd.f32 %v2646, %v2647
    %v2649 = vrot.slane %v2648, 1
    %v2650 = vadd.f32 %v2648, %v2649
    %v2651 = vadd.f32 %v2370, %v2371
    %v2652 = vadd.f32 %v2651, %v2372
    %v2653 = vadd.f32 %v2652, %v2373
    %v2654 = vadd.f32 %v2653, %v2374
    %v2655 = vadd.f32 %v2654, %v2375
    %v2656 = vadd.f32 %v2655, %v2376
    %v2657 = vadd.f32 %v2656, %v2377
    %v2658 = vadd.f32 %v2657, %v2378
    %v2659 = vadd.f32 %v2658, %v2379
    %v2660 = vadd.f32 %v2659, %v2380
    %v2661 = vadd.f32 %v2660, %v2381
    %v2662 = vadd.f32 %v2661, %v2382
    %v2663 = vadd.f32 %v2662, %v2383
    %v2664 = vadd.f32 %v2663, %v2384
    %v2665 = vadd.f32 %v2664, %v2385
    %v2666 = vadd.f32 %v2665, %v2386
    %v2667 = vadd.f32 %v2666, %v2387
    %v2668 = vadd.f32 %v2667, %v2388
    %v2669 = vadd.f32 %v2668, %v2389
    %v2670 = vadd.f32 %v2669, %v2390
    %v2671 = vadd.f32 %v2670, %v2391
    %v2672 = vadd.f32 %v2671, %v2392
    %v2673 = vadd.f32 %v2672, %v2393
    %v2674 = vadd.f32 %v2673, %v2394
    %v2675 = vadd.f32 %v2674, %v2395
    %v2676 = vadd.f32 %v2675, %v2396
    %v2677 = vadd.f32 %v2676, %v2397
    %v2678 = vadd.f32 %v2677, %v2398
    %v2679 = vadd.f32 %v2678, %v2399
    %v2680 = vadd.f32 %v2679, %v2400
    %v2681 = vadd.f32 %v2680, %v2401
    %v2682 = vrot.slane %v2681, 4
    %v2683 = vadd.f32 %v2681, %v2682
    %v2684 = vrot.slane %v2683, 2
    %v2685 = vadd.f32 %v2683, %v2684
    %v2686 = vrot.slane %v2685, 1
    %v2687 = vadd.f32 %v2685, %v2686
    %v2688 = vadd.f32 %v2402, %v2403
    %v2689 = vadd.f32 %v2688, %v2404
    %v2690 = vadd.f32 %v2689, %v2405
    %v2691 = vadd.f32 %v2690, %v2406
    %v2692 = vadd.f32 %v2691, %v2407
    %v2693 = vadd.f32 %v2692, %v2408
    %v2694 = vadd.f32 %v2693, %v2409
    %v2695 = vadd.f32 %v2694, %v2410
    %v2696 = vadd.f32 %v2695, %v2411
    %v2697 = vadd.f32 %v2696, %v2412
    %v2698 = vadd.f32 %v2697, %v2413
    %v2699 = vadd.f32 %v2698, %v2414
    %v2700 = vadd.f32 %v2699, %v2415
    %v2701 = vadd.f32 %v2700, %v2416
    %v2702 = vadd.f32 %v2701, %v2417
    %v2703 = vadd.f32 %v2702, %v2418
    %v2704 = vadd.f32 %v2703, %v2419
    %v2705 = vadd.f32 %v2704, %v2420
    %v2706 = vadd.f32 %v2705, %v2421
    %v2707 = vadd.f32 %v2706, %v2422
    %v2708 = vadd.f32 %v2707, %v2423
    %v2709 = vadd.f32 %v2708, %v2424
    %v2710 = vadd.f32 %v2709, %v2425
    %v2711 = vadd.f32 %v2710, %v2426
    %v2712 = vadd.f32 %v2711, %v2427
    %v2713 = vadd.f32 %v2712, %v2428
    %v2714 = vadd.f32 %v2713, %v2429
    %v2715 = vadd.f32 %v2714, %v2430
    %v2716 = vadd.f32 %v2715, %v2431
    %v2717 = vadd.f32 %v2716, %v2432
    %v2718 = vadd.f32 %v2717, %v2433
    %v2719 = vrot.slane %v2718, 4
    %v2720 = vadd.f32 %v2718, %v2719
    %v2721 = vrot.slane %v2720, 2
    %v2722 = vadd.f32 %v2720, %v2721
    %v2723 = vrot.slane %v2722, 1
    %v2724 = vadd.f32 %v2722, %v2723
    %v2725 = vadd.f32 %v2434, %v2435
    %v2726 = vadd.f32 %v2725, %v2436
    %v2727 = vadd.f32 %v2726, %v2437
    %v2728 = vadd.f32 %v2727, %v2438
    %v2729 = vadd.f32 %v2728, %v2439
    %v2730 = vadd.f32 %v2729, %v2440
    %v2731 = vadd.f32 %v2730, %v2441
    %v2732 = vadd.f32 %v2731, %v2442
    %v2733 = vadd.f32 %v2732, %v2443
    %v2734 = vadd.f32 %v2733, %v2444
    %v2735 = vadd.f32 %v2734, %v2445
    %v2736 = vadd.f32 %v2735, %v2446
    %v2737 = vadd.f32 %v2736, %v2447
    %v2738 = vadd.f32 %v2737, %v2448
    %v2739 = vadd.f32 %v2738, %v2449
    %v2740 = vadd.f32 %v2739, %v2450
    %v2741 = vadd.f32 %v2740, %v2451
    %v2742 = vadd.f32 %v2741, %v2452
    %v2743 = vadd.f32 %v2742, %v2453
    %v2744 = vadd.f32 %v2743, %v2454
    %v2745 = vadd.f32 %v2744, %v2455
    %v2746 = vadd.f32 %v2745, %v2456
    %v2747 = vadd.f32 %v2746, %v2457
    %v2748 = vadd.f32 %v2747, %v2458
    %v2749 = vadd.f32 %v2748, %v2459
    %v2750 = vadd.f32 %v2749, %v2460
    %v2751 = vadd.f32 %v2750, %v2461
    %v2752 = vadd.f32 %v2751, %v2462
    %v2753 = vadd.f32 %v2752, %v2463
    %v2754 = vadd.f32 %v2753, %v2464
    %v2755 = vadd.f32 %v2754, %v2465
    %v2756 = vrot.slane %v2755, 4
    %v2757 = vadd.f32 %v2755, %v2756
    %v2758 = vrot.slane %v2757, 2
    %v2759 = vadd.f32 %v2757, %v2758
    %v2760 = vrot.slane %v2759, 1
    %v2761 = vadd.f32 %v2759, %v2760
    %v2762 = vmul.f32 %v2502, 0.00390625
    %v2763 = vmul.f32 %v2539, 0.00390625
    %v2764 = vmul.f32 %v2576, 0.00390625
    %v2765 = vmul.f32 %v2613, 0.00390625
    %v2766 = vmul.f32 %v2650, 0.00390625
    %v2767 = vmul.f32 %v2687, 0.00390625
    %v2768 = vmul.f32 %v2724, 0.00390625
    %v2769 = vmul.f32 %v2761, 0.00390625
    %v2770 = vld [vmem:[%s3] sm:$0xff]
    %v2771 = vld [vmem:[%s3 + $0x8] sm:$0xff]
    %v2772 = vld [vmem:[%s3 + $0x10] sm:$0xff]
    %v2773 = vld [vmem:[%s3 + $0x18] sm:$0xff]
    %v2774 = vld [vmem:[%s3 + $0x20] sm:$0xff]
    %v2775 = vld [vmem:[%s3 + $0x28] sm:$0xff]
    %v2776 = vld [vmem:[%s3 + $0x30] sm:$0xff]
    %v2777 = vld [vmem:[%s3 + $0x38] sm:$0xff]
    %v2778 = vld [vmem:[%s3 + $0x40] sm:$0xff]
    %v2779 = vld [vmem:[%s3 + $0x48] sm:$0xff]
    %v2780 = vld [vmem:[%s3 + $0x50] sm:$0xff]
    %v2781 = vld [vmem:[%s3 + $0x58] sm:$0xff]
    %v2782 = vld [vmem:[%s3 + $0x60] sm:$0xff]
    %v2783 = vld [vmem:[%s3 + $0x68] sm:$0xff]
    %v2784 = vld [vmem:[%s3 + $0x70] sm:$0xff]
    %v2785 = vld [vmem:[%s3 + $0x78] sm:$0xff]
    %vm2794 = vcmask 1041409
    %v2795 = vsel %vm2794, %v2763, %v2762
    %vm2796 = vcmask 1042434
    %v2797 = vsel %vm2796, %v2764, %v2795
    %vm2798 = vcmask 1043459
    %v2799 = vsel %vm2798, %v2765, %v2797
    %vm2800 = vcmask 1044484
    %v2801 = vsel %vm2800, %v2766, %v2799
    %vm2802 = vcmask 1045509
    %v2803 = vsel %vm2802, %v2767, %v2801
    %vm2804 = vcmask 1046534
    %v2805 = vsel %vm2804, %v2768, %v2803
    %vm2806 = vcmask 1047559
    %v2807 = vsel %vm2806, %v2769, %v2805
    %2809 = vmatprep.subr.mxu0 0.0
    %v2810 = vand.u32 %v2785, 4294901760
    %2811 = vmatpush1.msra.mxu0 %v2810
    %2812 = vmatprep.subr.mxu0 0.0
    %v2813 = vand.u32 %v2784, 4294901760
    %2814 = vmatpush1.msra.mxu0 %v2813
    %2815 = vmatprep.subr.mxu0 0.0
    %v2816 = vand.u32 %v2783, 4294901760
    %2817 = vmatpush1.msra.mxu0 %v2816
    %2818 = vmatprep.subr.mxu0 0.0
    %v2819 = vand.u32 %v2782, 4294901760
    %2820 = vmatpush1.msra.mxu0 %v2819
    %2821 = vmatprep.subr.mxu0 0.0
    %v2822 = vand.u32 %v2781, 4294901760
    %2823 = vmatpush1.msra.mxu0 %v2822
    %2824 = vmatprep.subr.mxu0 0.0
    %v2825 = vand.u32 %v2780, 4294901760
    %2826 = vmatpush1.msra.mxu0 %v2825
    %2827 = vmatprep.subr.mxu0 0.0
    %v2828 = vand.u32 %v2779, 4294901760
    %2829 = vmatpush1.msra.mxu0 %v2828
    %2830 = vmatprep.subr.mxu0 0.0
    %v2831 = vand.u32 %v2778, 4294901760
    %2832 = vmatpush1.msra.mxu0 %v2831
    %2833 = vmatprep.subr.mxu0 0.0
    %v2834 = vand.u32 %v2777, 4294901760
    %2835 = vmatpush1.msra.mxu0 %v2834
    %2836 = vmatprep.subr.mxu0 0.0
    %v2837 = vand.u32 %v2776, 4294901760
    %2838 = vmatpush1.msra.mxu0 %v2837
    %2839 = vmatprep.subr.mxu0 0.0
    %v2840 = vand.u32 %v2775, 4294901760
    %2841 = vmatpush1.msra.mxu0 %v2840
    %2842 = vmatprep.subr.mxu0 0.0
    %v2843 = vand.u32 %v2774, 4294901760
    %2844 = vmatpush1.msra.mxu0 %v2843
    %2845 = vmatprep.subr.mxu0 0.0
    %v2846 = vand.u32 %v2773, 4294901760
    %2847 = vmatpush1.msra.mxu0 %v2846
    %2848 = vmatprep.subr.mxu0 0.0
    %v2849 = vand.u32 %v2772, 4294901760
    %2850 = vmatpush1.msra.mxu0 %v2849
    %2851 = vmatprep.subr.mxu0 0.0
    %v2852 = vand.u32 %v2771, 4294901760
    %2853 = vmatpush1.msra.mxu0 %v2852
    %2854 = vmatprep.subr.mxu0 0.0
    %v2855 = vand.u32 %v2770, 4294901760
    %2856 = vmatpush1.msra.mxu0 %v2855
    %2857 = vmatprep.subr.mxu0 0.0
    %2858 = vmatpush2.msra.mxu0 0.0
    %2859 = vmatprep.subr.mxu0 0.0
    %2860 = vmatpush2.msra.mxu0 0.0
    %2861 = vmatprep.subr.mxu0 0.0
    %2862 = vmatpush2.msra.mxu0 0.0
    %2863 = vmatprep.subr.mxu0 0.0
    %2864 = vmatpush2.msra.mxu0 0.0
    %2865 = vmatprep.subr.mxu0 0.0
    %2866 = vmatpush2.msra.mxu0 0.0
    %2867 = vmatprep.subr.mxu0 0.0
    %2868 = vmatpush2.msra.mxu0 0.0
    %2869 = vmatprep.subr.mxu0 0.0
    %2870 = vmatpush2.msra.mxu0 0.0
    %2871 = vmatprep.subr.mxu0 0.0
    %2872 = vmatpush2.msra.mxu0 0.0
    %2873 = vmatprep.subr.mxu0 0.0
    %2874 = vmatpush2.msra.mxu0 0.0
    %2875 = vmatprep.subr.mxu0 0.0
    %2876 = vmatpush2.msra.mxu0 0.0
    %2877 = vmatprep.subr.mxu0 0.0
    %2878 = vmatpush2.msra.mxu0 0.0
    %2879 = vmatprep.subr.mxu0 0.0
    %2880 = vmatpush2.msra.mxu0 0.0
    %2881 = vmatprep.subr.mxu0 0.0
    %2882 = vmatpush2.msra.mxu0 0.0
    %2883 = vmatprep.subr.mxu0 0.0
    %2884 = vmatpush2.msra.mxu0 0.0
    %2885 = vmatprep.subr.mxu0 0.0
    %2886 = vmatpush2.msra.mxu0 0.0
    %2887 = vmatprep.subr.mxu0 0.0
    %2888 = vmatpush2.msra.mxu0 0.0
    %2889 = vmatprep.mubr.f32.mxu0 0.0
    %v2890 = vand.u32 %v2807, 4294901760
    %v2891 = vsub.f32 %v2807, %v2890
    %v2892 = vand.u32 %v2891, 4294901760
    %v2893 = vsub.f32 %v2891, %v2892
    %v2894 = vand.u32 %v2893, 4294901760
    %2895 = vmatmul.mubr.f32.gmra.mxu0 %v2894
    %v2896 = vpop.f32.mrf.mxu0
    %v2897 = vadd.f32 0.0, %v2896
    %v2898 = vpop.f32.mrf.mxu0
    %2899 = vdwg.mxu0
    %2900 = vmatprep.subr.mxu0 0.0
    %v2901 = vand.u32 %v2785, 4294901760
    %v2902 = vsub.f32 %v2785, %v2901
    %v2903 = vand.u32 %v2902, 4294901760
    %v2904 = vsub.f32 %v2902, %v2903
    %v2905 = vand.u32 %v2904, 4294901760
    %2906 = vmatpush1.msra.mxu0 %v2905
    %2907 = vmatprep.subr.mxu0 0.0
    %v2908 = vand.u32 %v2784, 4294901760
    %v2909 = vsub.f32 %v2784, %v2908
    %v2910 = vand.u32 %v2909, 4294901760
    %v2911 = vsub.f32 %v2909, %v2910
    %v2912 = vand.u32 %v2911, 4294901760
    %2913 = vmatpush1.msra.mxu0 %v2912
    %2914 = vmatprep.subr.mxu0 0.0
    %v2915 = vand.u32 %v2783, 4294901760
    %v2916 = vsub.f32 %v2783, %v2915
    %v2917 = vand.u32 %v2916, 4294901760
    %v2918 = vsub.f32 %v2916, %v2917
    %v2919 = vand.u32 %v2918, 4294901760
    %2920 = vmatpush1.msra.mxu0 %v2919
    %2921 = vmatprep.subr.mxu0 0.0
    %v2922 = vand.u32 %v2782, 4294901760
    %v2923 = vsub.f32 %v2782, %v2922
    %v2924 = vand.u32 %v2923, 4294901760
    %v2925 = vsub.f32 %v2923, %v2924
    %v2926 = vand.u32 %v2925, 4294901760
    %2927 = vmatpush1.msra.mxu0 %v2926
    %2928 = vmatprep.subr.mxu0 0.0
    %v2929 = vand.u32 %v2781, 4294901760
    %v2930 = vsub.f32 %v2781, %v2929
    %v2931 = vand.u32 %v2930, 4294901760
    %v2932 = vsub.f32 %v2930, %v2931
    %v2933 = vand.u32 %v2932, 4294901760
    %2934 = vmatpush1.msra.mxu0 %v2933
    %2935 = vmatprep.subr.mxu0 0.0
    %v2936 = vand.u32 %v2780, 4294901760
    %v2937 = vsub.f32 %v2780, %v2936
    %v2938 = vand.u32 %v2937, 4294901760
    %v2939 = vsub.f32 %v2937, %v2938
    %v2940 = vand.u32 %v2939, 4294901760
    %2941 = vmatpush1.msra.mxu0 %v2940
    %2942 = vmatprep.subr.mxu0 0.0
    %v2943 = vand.u32 %v2779, 4294901760
    %v2944 = vsub.f32 %v2779, %v2943
    %v2945 = vand.u32 %v2944, 4294901760
    %v2946 = vsub.f32 %v2944, %v2945
    %v2947 = vand.u32 %v2946, 4294901760
    %2948 = vmatpush1.msra.mxu0 %v2947
    %2949 = vmatprep.subr.mxu0 0.0
    %v2950 = vand.u32 %v2778, 4294901760
    %v2951 = vsub.f32 %v2778, %v2950
    %v2952 = vand.u32 %v2951, 4294901760
    %v2953 = vsub.f32 %v2951, %v2952
    %v2954 = vand.u32 %v2953, 4294901760
    %2955 = vmatpush1.msra.mxu0 %v2954
    %2956 = vmatprep.subr.mxu0 0.0
    %v2957 = vand.u32 %v2777, 4294901760
    %v2958 = vsub.f32 %v2777, %v2957
    %v2959 = vand.u32 %v2958, 4294901760
    %v2960 = vsub.f32 %v2958, %v2959
    %v2961 = vand.u32 %v2960, 4294901760
    %2962 = vmatpush1.msra.mxu0 %v2961
    %2963 = vmatprep.subr.mxu0 0.0
    %v2964 = vand.u32 %v2776, 4294901760
    %v2965 = vsub.f32 %v2776, %v2964
    %v2966 = vand.u32 %v2965, 4294901760
    %v2967 = vsub.f32 %v2965, %v2966
    %v2968 = vand.u32 %v2967, 4294901760
    %2969 = vmatpush1.msra.mxu0 %v2968
    %2970 = vmatprep.subr.mxu0 0.0
    %v2971 = vand.u32 %v2775, 4294901760
    %v2972 = vsub.f32 %v2775, %v2971
    %v2973 = vand.u32 %v2972, 4294901760
    %v2974 = vsub.f32 %v2972, %v2973
    %v2975 = vand.u32 %v2974, 4294901760
    %2976 = vmatpush1.msra.mxu0 %v2975
    %2977 = vmatprep.subr.mxu0 0.0
    %v2978 = vand.u32 %v2774, 4294901760
    %v2979 = vsub.f32 %v2774, %v2978
    %v2980 = vand.u32 %v2979, 4294901760
    %v2981 = vsub.f32 %v2979, %v2980
    %v2982 = vand.u32 %v2981, 4294901760
    %2983 = vmatpush1.msra.mxu0 %v2982
    %2984 = vmatprep.subr.mxu0 0.0
    %v2985 = vand.u32 %v2773, 4294901760
    %v2986 = vsub.f32 %v2773, %v2985
    %v2987 = vand.u32 %v2986, 4294901760
    %v2988 = vsub.f32 %v2986, %v2987
    %v2989 = vand.u32 %v2988, 4294901760
    %2990 = vmatpush1.msra.mxu0 %v2989
    %2991 = vmatprep.subr.mxu0 0.0
    %v2992 = vand.u32 %v2772, 4294901760
    %v2993 = vsub.f32 %v2772, %v2992
    %v2994 = vand.u32 %v2993, 4294901760
    %v2995 = vsub.f32 %v2993, %v2994
    %v2996 = vand.u32 %v2995, 4294901760
    %2997 = vmatpush1.msra.mxu0 %v2996
    %2998 = vmatprep.subr.mxu0 0.0
    %v2999 = vand.u32 %v2771, 4294901760
    %v3000 = vsub.f32 %v2771, %v2999
    %v3001 = vand.u32 %v3000, 4294901760
    %v3002 = vsub.f32 %v3000, %v3001
    %v3003 = vand.u32 %v3002, 4294901760
    %3004 = vmatpush1.msra.mxu0 %v3003
    %3005 = vmatprep.subr.mxu0 0.0
    %v3006 = vand.u32 %v2770, 4294901760
    %v3007 = vsub.f32 %v2770, %v3006
    %v3008 = vand.u32 %v3007, 4294901760
    %v3009 = vsub.f32 %v3007, %v3008
    %v3010 = vand.u32 %v3009, 4294901760
    %3011 = vmatpush1.msra.mxu0 %v3010
    %3012 = vmatprep.subr.mxu0 0.0
    %3013 = vmatpush2.msra.mxu0 0.0
    %3014 = vmatprep.subr.mxu0 0.0
    %3015 = vmatpush2.msra.mxu0 0.0
    %3016 = vmatprep.subr.mxu0 0.0
    %3017 = vmatpush2.msra.mxu0 0.0
    %3018 = vmatprep.subr.mxu0 0.0
    %3019 = vmatpush2.msra.mxu0 0.0
    %3020 = vmatprep.subr.mxu0 0.0
    %3021 = vmatpush2.msra.mxu0 0.0
    %3022 = vmatprep.subr.mxu0 0.0
    %3023 = vmatpush2.msra.mxu0 0.0
    %3024 = vmatprep.subr.mxu0 0.0
    %3025 = vmatpush2.msra.mxu0 0.0
    %3026 = vmatprep.subr.mxu0 0.0
    %3027 = vmatpush2.msra.mxu0 0.0
    %3028 = vmatprep.subr.mxu0 0.0
    %3029 = vmatpush2.msra.mxu0 0.0
    %3030 = vmatprep.subr.mxu0 0.0
    %3031 = vmatpush2.msra.mxu0 0.0
    %3032 = vmatprep.subr.mxu0 0.0
    %3033 = vmatpush2.msra.mxu0 0.0
    %3034 = vmatprep.subr.mxu0 0.0
    %3035 = vmatpush2.msra.mxu0 0.0
    %3036 = vmatprep.subr.mxu0 0.0
    %3037 = vmatpush2.msra.mxu0 0.0
    %3038 = vmatprep.subr.mxu0 0.0
    %3039 = vmatpush2.msra.mxu0 0.0
    %3040 = vmatprep.subr.mxu0 0.0
    %3041 = vmatpush2.msra.mxu0 0.0
    %3042 = vmatprep.subr.mxu0 0.0
    %3043 = vmatpush2.msra.mxu0 0.0
    %3044 = vmatprep.mubr.f32.mxu0 0.0
    %v3045 = vand.u32 %v2807, 4294901760
    %3046 = vmatmul.mubr.f32.gmra.mxu0 %v3045
    %v3047 = vpop.f32.mrf.mxu0
    %v3048 = vadd.f32 %v2897, %v3047
    %v3049 = vpop.f32.mrf.mxu0
    %3050 = vdwg.mxu0
    %3051 = vmatprep.subr.mxu0 0.0
    %v3052 = vand.u32 %v2785, 4294901760
    %v3053 = vsub.f32 %v2785, %v3052
    %3054 = vmatpush1.msra.mxu0 %v3053
    %3055 = vmatprep.subr.mxu0 0.0
    %v3056 = vand.u32 %v2784, 4294901760
    %v3057 = vsub.f32 %v2784, %v3056
    %3058 = vmatpush1.msra.mxu0 %v3057
    %3059 = vmatprep.subr.mxu0 0.0
    %v3060 = vand.u32 %v2783, 4294901760
    %v3061 = vsub.f32 %v2783, %v3060
    %3062 = vmatpush1.msra.mxu0 %v3061
    %3063 = vmatprep.subr.mxu0 0.0
    %v3064 = vand.u32 %v2782, 4294901760
    %v3065 = vsub.f32 %v2782, %v3064
    %3066 = vmatpush1.msra.mxu0 %v3065
    %3067 = vmatprep.subr.mxu0 0.0
    %v3068 = vand.u32 %v2781, 4294901760
    %v3069 = vsub.f32 %v2781, %v3068
    %3070 = vmatpush1.msra.mxu0 %v3069
    %3071 = vmatprep.subr.mxu0 0.0
    %v3072 = vand.u32 %v2780, 4294901760
    %v3073 = vsub.f32 %v2780, %v3072
    %3074 = vmatpush1.msra.mxu0 %v3073
    %3075 = vmatprep.subr.mxu0 0.0
    %v3076 = vand.u32 %v2779, 4294901760
    %v3077 = vsub.f32 %v2779, %v3076
    %3078 = vmatpush1.msra.mxu0 %v3077
    %3079 = vmatprep.subr.mxu0 0.0
    %v3080 = vand.u32 %v2778, 4294901760
    %v3081 = vsub.f32 %v2778, %v3080
    %3082 = vmatpush1.msra.mxu0 %v3081
    %3083 = vmatprep.subr.mxu0 0.0
    %v3084 = vand.u32 %v2777, 4294901760
    %v3085 = vsub.f32 %v2777, %v3084
    %3086 = vmatpush1.msra.mxu0 %v3085
    %3087 = vmatprep.subr.mxu0 0.0
    %v3088 = vand.u32 %v2776, 4294901760
    %v3089 = vsub.f32 %v2776, %v3088
    %3090 = vmatpush1.msra.mxu0 %v3089
    %3091 = vmatprep.subr.mxu0 0.0
    %v3092 = vand.u32 %v2775, 4294901760
    %v3093 = vsub.f32 %v2775, %v3092
    %3094 = vmatpush1.msra.mxu0 %v3093
    %3095 = vmatprep.subr.mxu0 0.0
    %v3096 = vand.u32 %v2774, 4294901760
    %v3097 = vsub.f32 %v2774, %v3096
    %3098 = vmatpush1.msra.mxu0 %v3097
    %3099 = vmatprep.subr.mxu0 0.0
    %v3100 = vand.u32 %v2773, 4294901760
    %v3101 = vsub.f32 %v2773, %v3100
    %3102 = vmatpush1.msra.mxu0 %v3101
    %3103 = vmatprep.subr.mxu0 0.0
    %v3104 = vand.u32 %v2772, 4294901760
    %v3105 = vsub.f32 %v2772, %v3104
    %3106 = vmatpush1.msra.mxu0 %v3105
    %3107 = vmatprep.subr.mxu0 0.0
    %v3108 = vand.u32 %v2771, 4294901760
    %v3109 = vsub.f32 %v2771, %v3108
    %3110 = vmatpush1.msra.mxu0 %v3109
    %3111 = vmatprep.subr.mxu0 0.0
    %v3112 = vand.u32 %v2770, 4294901760
    %v3113 = vsub.f32 %v2770, %v3112
    %3114 = vmatpush1.msra.mxu0 %v3113
    %3115 = vmatprep.subr.mxu0 0.0
    %3116 = vmatpush2.msra.mxu0 0.0
    %3117 = vmatprep.subr.mxu0 0.0
    %3118 = vmatpush2.msra.mxu0 0.0
    %3119 = vmatprep.subr.mxu0 0.0
    %3120 = vmatpush2.msra.mxu0 0.0
    %3121 = vmatprep.subr.mxu0 0.0
    %3122 = vmatpush2.msra.mxu0 0.0
    %3123 = vmatprep.subr.mxu0 0.0
    %3124 = vmatpush2.msra.mxu0 0.0
    %3125 = vmatprep.subr.mxu0 0.0
    %3126 = vmatpush2.msra.mxu0 0.0
    %3127 = vmatprep.subr.mxu0 0.0
    %3128 = vmatpush2.msra.mxu0 0.0
    %3129 = vmatprep.subr.mxu0 0.0
    %3130 = vmatpush2.msra.mxu0 0.0
    %3131 = vmatprep.subr.mxu0 0.0
    %3132 = vmatpush2.msra.mxu0 0.0
    %3133 = vmatprep.subr.mxu0 0.0
    %3134 = vmatpush2.msra.mxu0 0.0
    %3135 = vmatprep.subr.mxu0 0.0
    %3136 = vmatpush2.msra.mxu0 0.0
    %3137 = vmatprep.subr.mxu0 0.0
    %3138 = vmatpush2.msra.mxu0 0.0
    %3139 = vmatprep.subr.mxu0 0.0
    %3140 = vmatpush2.msra.mxu0 0.0
    %3141 = vmatprep.subr.mxu0 0.0
    %3142 = vmatpush2.msra.mxu0 0.0
    %3143 = vmatprep.subr.mxu0 0.0
    %3144 = vmatpush2.msra.mxu0 0.0
    %3145 = vmatprep.subr.mxu0 0.0
    %3146 = vmatpush2.msra.mxu0 0.0
    %3147 = vmatprep.mubr.f32.mxu0 0.0
    %v3148 = vand.u32 %v2807, 4294901760
    %v3149 = vsub.f32 %v2807, %v3148
    %3150 = vmatmul.mubr.f32.gmra.mxu0 %v3149
    %v3151 = vpop.f32.mrf.mxu0
    %v3152 = vadd.f32 %v3048, %v3151
    %v3153 = vpop.f32.mrf.mxu0
    %3154 = vdwg.mxu0
    %3155 = vmatprep.subr.mxu0 0.0
    %v3156 = vand.u32 %v2785, 4294901760
    %3157 = vmatpush1.msra.mxu0 %v3156
    %3158 = vmatprep.subr.mxu0 0.0
    %v3159 = vand.u32 %v2784, 4294901760
    %3160 = vmatpush1.msra.mxu0 %v3159
    %3161 = vmatprep.subr.mxu0 0.0
    %v3162 = vand.u32 %v2783, 4294901760
    %3163 = vmatpush1.msra.mxu0 %v3162
    %3164 = vmatprep.subr.mxu0 0.0
    %v3165 = vand.u32 %v2782, 4294901760
    %3166 = vmatpush1.msra.mxu0 %v3165
    %3167 = vmatprep.subr.mxu0 0.0
    %v3168 = vand.u32 %v2781, 4294901760
    %3169 = vmatpush1.msra.mxu0 %v3168
    %3170 = vmatprep.subr.mxu0 0.0
    %v3171 = vand.u32 %v2780, 4294901760
    %3172 = vmatpush1.msra.mxu0 %v3171
    %3173 = vmatprep.subr.mxu0 0.0
    %v3174 = vand.u32 %v2779, 4294901760
    %3175 = vmatpush1.msra.mxu0 %v3174
    %3176 = vmatprep.subr.mxu0 0.0
    %v3177 = vand.u32 %v2778, 4294901760
    %3178 = vmatpush1.msra.mxu0 %v3177
    %3179 = vmatprep.subr.mxu0 0.0
    %v3180 = vand.u32 %v2777, 4294901760
    %3181 = vmatpush1.msra.mxu0 %v3180
    %3182 = vmatprep.subr.mxu0 0.0
    %v3183 = vand.u32 %v2776, 4294901760
    %3184 = vmatpush1.msra.mxu0 %v3183
    %3185 = vmatprep.subr.mxu0 0.0
    %v3186 = vand.u32 %v2775, 4294901760
    %3187 = vmatpush1.msra.mxu0 %v3186
    %3188 = vmatprep.subr.mxu0 0.0
    %v3189 = vand.u32 %v2774, 4294901760
    %3190 = vmatpush1.msra.mxu0 %v3189
    %3191 = vmatprep.subr.mxu0 0.0
    %v3192 = vand.u32 %v2773, 4294901760
    %3193 = vmatpush1.msra.mxu0 %v3192
    %3194 = vmatprep.subr.mxu0 0.0
    %v3195 = vand.u32 %v2772, 4294901760
    %3196 = vmatpush1.msra.mxu0 %v3195
    %3197 = vmatprep.subr.mxu0 0.0
    %v3198 = vand.u32 %v2771, 4294901760
    %3199 = vmatpush1.msra.mxu0 %v3198
    %3200 = vmatprep.subr.mxu0 0.0
    %v3201 = vand.u32 %v2770, 4294901760
    %3202 = vmatpush1.msra.mxu0 %v3201
    %3203 = vmatprep.subr.mxu0 0.0
    %3204 = vmatpush2.msra.mxu0 0.0
    %3205 = vmatprep.subr.mxu0 0.0
    %3206 = vmatpush2.msra.mxu0 0.0
    %3207 = vmatprep.subr.mxu0 0.0
    %3208 = vmatpush2.msra.mxu0 0.0
    %3209 = vmatprep.subr.mxu0 0.0
    %3210 = vmatpush2.msra.mxu0 0.0
    %3211 = vmatprep.subr.mxu0 0.0
    %3212 = vmatpush2.msra.mxu0 0.0
    %3213 = vmatprep.subr.mxu0 0.0
    %3214 = vmatpush2.msra.mxu0 0.0
    %3215 = vmatprep.subr.mxu0 0.0
    %3216 = vmatpush2.msra.mxu0 0.0
    %3217 = vmatprep.subr.mxu0 0.0
    %3218 = vmatpush2.msra.mxu0 0.0
    %3219 = vmatprep.subr.mxu0 0.0
    %3220 = vmatpush2.msra.mxu0 0.0
    %3221 = vmatprep.subr.mxu0 0.0
    %3222 = vmatpush2.msra.mxu0 0.0
    %3223 = vmatprep.subr.mxu0 0.0
    %3224 = vmatpush2.msra.mxu0 0.0
    %3225 = vmatprep.subr.mxu0 0.0
    %3226 = vmatpush2.msra.mxu0 0.0
    %3227 = vmatprep.subr.mxu0 0.0
    %3228 = vmatpush2.msra.mxu0 0.0
    %3229 = vmatprep.subr.mxu0 0.0
    %3230 = vmatpush2.msra.mxu0 0.0
    %3231 = vmatprep.subr.mxu0 0.0
    %3232 = vmatpush2.msra.mxu0 0.0
    %3233 = vmatprep.subr.mxu0 0.0
    %3234 = vmatpush2.msra.mxu0 0.0
    %3235 = vmatprep.mubr.f32.mxu0 0.0
    %v3236 = vand.u32 %v2807, 4294901760
    %v3237 = vsub.f32 %v2807, %v3236
    %v3238 = vand.u32 %v3237, 4294901760
    %3239 = vmatmul.mubr.f32.gmra.mxu0 %v3238
    %v3240 = vpop.f32.mrf.mxu0
    %v3241 = vadd.f32 %v3152, %v3240
    %v3242 = vpop.f32.mrf.mxu0
    %3243 = vdwg.mxu0
    %3244 = vmatprep.subr.mxu0 0.0
    %v3245 = vand.u32 %v2785, 4294901760
    %v3246 = vsub.f32 %v2785, %v3245
    %v3247 = vand.u32 %v3246, 4294901760
    %3248 = vmatpush1.msra.mxu0 %v3247
    %3249 = vmatprep.subr.mxu0 0.0
    %v3250 = vand.u32 %v2784, 4294901760
    %v3251 = vsub.f32 %v2784, %v3250
    %v3252 = vand.u32 %v3251, 4294901760
    %3253 = vmatpush1.msra.mxu0 %v3252
    %3254 = vmatprep.subr.mxu0 0.0
    %v3255 = vand.u32 %v2783, 4294901760
    %v3256 = vsub.f32 %v2783, %v3255
    %v3257 = vand.u32 %v3256, 4294901760
    %3258 = vmatpush1.msra.mxu0 %v3257
    %3259 = vmatprep.subr.mxu0 0.0
    %v3260 = vand.u32 %v2782, 4294901760
    %v3261 = vsub.f32 %v2782, %v3260
    %v3262 = vand.u32 %v3261, 4294901760
    %3263 = vmatpush1.msra.mxu0 %v3262
    %3264 = vmatprep.subr.mxu0 0.0
    %v3265 = vand.u32 %v2781, 4294901760
    %v3266 = vsub.f32 %v2781, %v3265
    %v3267 = vand.u32 %v3266, 4294901760
    %3268 = vmatpush1.msra.mxu0 %v3267
    %3269 = vmatprep.subr.mxu0 0.0
    %v3270 = vand.u32 %v2780, 4294901760
    %v3271 = vsub.f32 %v2780, %v3270
    %v3272 = vand.u32 %v3271, 4294901760
    %3273 = vmatpush1.msra.mxu0 %v3272
    %3274 = vmatprep.subr.mxu0 0.0
    %v3275 = vand.u32 %v2779, 4294901760
    %v3276 = vsub.f32 %v2779, %v3275
    %v3277 = vand.u32 %v3276, 4294901760
    %3278 = vmatpush1.msra.mxu0 %v3277
    %3279 = vmatprep.subr.mxu0 0.0
    %v3280 = vand.u32 %v2778, 4294901760
    %v3281 = vsub.f32 %v2778, %v3280
    %v3282 = vand.u32 %v3281, 4294901760
    %3283 = vmatpush1.msra.mxu0 %v3282
    %3284 = vmatprep.subr.mxu0 0.0
    %v3285 = vand.u32 %v2777, 4294901760
    %v3286 = vsub.f32 %v2777, %v3285
    %v3287 = vand.u32 %v3286, 4294901760
    %3288 = vmatpush1.msra.mxu0 %v3287
    %3289 = vmatprep.subr.mxu0 0.0
    %v3290 = vand.u32 %v2776, 4294901760
    %v3291 = vsub.f32 %v2776, %v3290
    %v3292 = vand.u32 %v3291, 4294901760
    %3293 = vmatpush1.msra.mxu0 %v3292
    %3294 = vmatprep.subr.mxu0 0.0
    %v3295 = vand.u32 %v2775, 4294901760
    %v3296 = vsub.f32 %v2775, %v3295
    %v3297 = vand.u32 %v3296, 4294901760
    %3298 = vmatpush1.msra.mxu0 %v3297
    %3299 = vmatprep.subr.mxu0 0.0
    %v3300 = vand.u32 %v2774, 4294901760
    %v3301 = vsub.f32 %v2774, %v3300
    %v3302 = vand.u32 %v3301, 4294901760
    %3303 = vmatpush1.msra.mxu0 %v3302
    %3304 = vmatprep.subr.mxu0 0.0
    %v3305 = vand.u32 %v2773, 4294901760
    %v3306 = vsub.f32 %v2773, %v3305
    %v3307 = vand.u32 %v3306, 4294901760
    %3308 = vmatpush1.msra.mxu0 %v3307
    %3309 = vmatprep.subr.mxu0 0.0
    %v3310 = vand.u32 %v2772, 4294901760
    %v3311 = vsub.f32 %v2772, %v3310
    %v3312 = vand.u32 %v3311, 4294901760
    %3313 = vmatpush1.msra.mxu0 %v3312
    %3314 = vmatprep.subr.mxu0 0.0
    %v3315 = vand.u32 %v2771, 4294901760
    %v3316 = vsub.f32 %v2771, %v3315
    %v3317 = vand.u32 %v3316, 4294901760
    %3318 = vmatpush1.msra.mxu0 %v3317
    %3319 = vmatprep.subr.mxu0 0.0
    %v3320 = vand.u32 %v2770, 4294901760
    %v3321 = vsub.f32 %v2770, %v3320
    %v3322 = vand.u32 %v3321, 4294901760
    %3323 = vmatpush1.msra.mxu0 %v3322
    %3324 = vmatprep.subr.mxu0 0.0
    %3325 = vmatpush2.msra.mxu0 0.0
    %3326 = vmatprep.subr.mxu0 0.0
    %3327 = vmatpush2.msra.mxu0 0.0
    %3328 = vmatprep.subr.mxu0 0.0
    %3329 = vmatpush2.msra.mxu0 0.0
    %3330 = vmatprep.subr.mxu0 0.0
    %3331 = vmatpush2.msra.mxu0 0.0
    %3332 = vmatprep.subr.mxu0 0.0
    %3333 = vmatpush2.msra.mxu0 0.0
    %3334 = vmatprep.subr.mxu0 0.0
    %3335 = vmatpush2.msra.mxu0 0.0
    %3336 = vmatprep.subr.mxu0 0.0
    %3337 = vmatpush2.msra.mxu0 0.0
    %3338 = vmatprep.subr.mxu0 0.0
    %3339 = vmatpush2.msra.mxu0 0.0
    %3340 = vmatprep.subr.mxu0 0.0
    %3341 = vmatpush2.msra.mxu0 0.0
    %3342 = vmatprep.subr.mxu0 0.0
    %3343 = vmatpush2.msra.mxu0 0.0
    %3344 = vmatprep.subr.mxu0 0.0
    %3345 = vmatpush2.msra.mxu0 0.0
    %3346 = vmatprep.subr.mxu0 0.0
    %3347 = vmatpush2.msra.mxu0 0.0
    %3348 = vmatprep.subr.mxu0 0.0
    %3349 = vmatpush2.msra.mxu0 0.0
    %3350 = vmatprep.subr.mxu0 0.0
    %3351 = vmatpush2.msra.mxu0 0.0
    %3352 = vmatprep.subr.mxu0 0.0
    %3353 = vmatpush2.msra.mxu0 0.0
    %3354 = vmatprep.subr.mxu0 0.0
    %3355 = vmatpush2.msra.mxu0 0.0
    %3356 = vmatprep.mubr.f32.mxu0 0.0
    %v3357 = vand.u32 %v2807, 4294901760
    %3358 = vmatmul.mubr.f32.gmra.mxu0 %v3357
    %v3359 = vpop.f32.mrf.mxu0
    %v3360 = vadd.f32 %v3241, %v3359
    %v3361 = vpop.f32.mrf.mxu0
    %3362 = vdwg.mxu0
    %3363 = vmatprep.subr.mxu0 0.0
    %v3364 = vand.u32 %v2785, 4294901760
    %3365 = vmatpush1.msra.mxu0 %v3364
    %3366 = vmatprep.subr.mxu0 0.0
    %v3367 = vand.u32 %v2784, 4294901760
    %3368 = vmatpush1.msra.mxu0 %v3367
    %3369 = vmatprep.subr.mxu0 0.0
    %v3370 = vand.u32 %v2783, 4294901760
    %3371 = vmatpush1.msra.mxu0 %v3370
    %3372 = vmatprep.subr.mxu0 0.0
    %v3373 = vand.u32 %v2782, 4294901760
    %3374 = vmatpush1.msra.mxu0 %v3373
    %3375 = vmatprep.subr.mxu0 0.0
    %v3376 = vand.u32 %v2781, 4294901760
    %3377 = vmatpush1.msra.mxu0 %v3376
    %3378 = vmatprep.subr.mxu0 0.0
    %v3379 = vand.u32 %v2780, 4294901760
    %3380 = vmatpush1.msra.mxu0 %v3379
    %3381 = vmatprep.subr.mxu0 0.0
    %v3382 = vand.u32 %v2779, 4294901760
    %3383 = vmatpush1.msra.mxu0 %v3382
    %3384 = vmatprep.subr.mxu0 0.0
    %v3385 = vand.u32 %v2778, 4294901760
    %3386 = vmatpush1.msra.mxu0 %v3385
    %3387 = vmatprep.subr.mxu0 0.0
    %v3388 = vand.u32 %v2777, 4294901760
    %3389 = vmatpush1.msra.mxu0 %v3388
    %3390 = vmatprep.subr.mxu0 0.0
    %v3391 = vand.u32 %v2776, 4294901760
    %3392 = vmatpush1.msra.mxu0 %v3391
    %3393 = vmatprep.subr.mxu0 0.0
    %v3394 = vand.u32 %v2775, 4294901760
    %3395 = vmatpush1.msra.mxu0 %v3394
    %3396 = vmatprep.subr.mxu0 0.0
    %v3397 = vand.u32 %v2774, 4294901760
    %3398 = vmatpush1.msra.mxu0 %v3397
    %3399 = vmatprep.subr.mxu0 0.0
    %v3400 = vand.u32 %v2773, 4294901760
    %3401 = vmatpush1.msra.mxu0 %v3400
    %3402 = vmatprep.subr.mxu0 0.0
    %v3403 = vand.u32 %v2772, 4294901760
    %3404 = vmatpush1.msra.mxu0 %v3403
    %3405 = vmatprep.subr.mxu0 0.0
    %v3406 = vand.u32 %v2771, 4294901760
    %3407 = vmatpush1.msra.mxu0 %v3406
    %3408 = vmatprep.subr.mxu0 0.0
    %v3409 = vand.u32 %v2770, 4294901760
    %3410 = vmatpush1.msra.mxu0 %v3409
    %3411 = vmatprep.subr.mxu0 0.0
    %3412 = vmatpush2.msra.mxu0 0.0
    %3413 = vmatprep.subr.mxu0 0.0
    %3414 = vmatpush2.msra.mxu0 0.0
    %3415 = vmatprep.subr.mxu0 0.0
    %3416 = vmatpush2.msra.mxu0 0.0
    %3417 = vmatprep.subr.mxu0 0.0
    %3418 = vmatpush2.msra.mxu0 0.0
    %3419 = vmatprep.subr.mxu0 0.0
    %3420 = vmatpush2.msra.mxu0 0.0
    %3421 = vmatprep.subr.mxu0 0.0
    %3422 = vmatpush2.msra.mxu0 0.0
    %3423 = vmatprep.subr.mxu0 0.0
    %3424 = vmatpush2.msra.mxu0 0.0
    %3425 = vmatprep.subr.mxu0 0.0
    %3426 = vmatpush2.msra.mxu0 0.0
    %3427 = vmatprep.subr.mxu0 0.0
    %3428 = vmatpush2.msra.mxu0 0.0
    %3429 = vmatprep.subr.mxu0 0.0
    %3430 = vmatpush2.msra.mxu0 0.0
    %3431 = vmatprep.subr.mxu0 0.0
    %3432 = vmatpush2.msra.mxu0 0.0
    %3433 = vmatprep.subr.mxu0 0.0
    %3434 = vmatpush2.msra.mxu0 0.0
    %3435 = vmatprep.subr.mxu0 0.0
    %3436 = vmatpush2.msra.mxu0 0.0
    %3437 = vmatprep.subr.mxu0 0.0
    %3438 = vmatpush2.msra.mxu0 0.0
    %3439 = vmatprep.subr.mxu0 0.0
    %3440 = vmatpush2.msra.mxu0 0.0
    %3441 = vmatprep.subr.mxu0 0.0
    %3442 = vmatpush2.msra.mxu0 0.0
    %3443 = vmatprep.mubr.f32.mxu0 0.0
    %v3444 = vand.u32 %v2807, 4294901760
    %3445 = vmatmul.mubr.f32.gmra.mxu0 %v3444
    %v3446 = vpop.f32.mrf.mxu0
    %v3447 = vadd.f32 %v3360, %v3446
    %v3448 = vpop.f32.mrf.mxu0
    %3449 = vdwg.mxu0
    %v3450 = vld [vmem:[%s4] sm:$0x1]
    %v3451 = vld [vmem:[%s5] sm:$0x1]
    %v3452 = vrot.slane %v3447, 4
    %v3453 = vadd.f32 %v3447, %v3452
    %v3454 = vrot.slane %v3453, 2
    %v3455 = vadd.f32 %v3453, %v3454
    %v3456 = vrot.slane %v3455, 1
    %v3457 = vadd.f32 %v3455, %v3456
    %v3458 = vrcp.pop 8.0
    %v3459 = vmul.f32 %v3457, %v3458
    %v3460 = vsub.f32 %v3447, %v3459
    %v3461 = vmul.f32 %v3460, %v3460
    %v3462 = vrot.slane %v3461, 4
    %v3463 = vadd.f32 %v3461, %v3462
    %v3464 = vrot.slane %v3463, 2
    %v3465 = vadd.f32 %v3463, %v3464
    %v3466 = vrot.slane %v3465, 1
    %v3467 = vadd.f32 %v3465, %v3466
    %v3468 = vmul.f32 %v3467, %v3458
    %v3469 = vadd.f32 %v3468, 1e-05
    %v3470 = vrsqrt.pop %v3469
    %v3471 = vmul.f32 %v3460, %v3470
    %v3473 = vlaneseq
    %v3474 = vshrl.u32 %v3473, 7
    %v3475 = vsub.s32 0, %v3474
    %v3476 = vrot.slane %v3450, %v3475
    %v3478 = vmul.f32 %v3471, %v3476
    %v3480 = vlaneseq
    %v3481 = vshrl.u32 %v3480, 7
    %v3482 = vsub.s32 0, %v3481
    %v3483 = vrot.slane %v3451, %v3482
    %v3485 = vadd.f32 %v3478, %v3483
    %v3486 = vmax.f32 %v3485, 0.0
    %v3487 = vld [vmem:[%s6] sm:$0xff]
    %v3488 = vld [vmem:[%s6 + $0x8] sm:$0xff]
    %v3489 = vld [vmem:[%s6 + $0x10] sm:$0xff]
    %v3490 = vld [vmem:[%s6 + $0x18] sm:$0xff]
    %v3491 = vld [vmem:[%s6 + $0x20] sm:$0xff]
    %v3492 = vld [vmem:[%s6 + $0x28] sm:$0xff]
    %v3493 = vld [vmem:[%s6 + $0x30] sm:$0xff]
    %v3494 = vld [vmem:[%s6 + $0x38] sm:$0xff]
    %v3495 = vld [vmem:[%s6 + $0x40] sm:$0xff]
    %v3496 = vld [vmem:[%s6 + $0x48] sm:$0xff]
    %v3497 = vld [vmem:[%s6 + $0x50] sm:$0xff]
    %v3498 = vld [vmem:[%s6 + $0x58] sm:$0xff]
    %v3499 = vld [vmem:[%s6 + $0x60] sm:$0xff]
    %v3500 = vld [vmem:[%s6 + $0x68] sm:$0xff]
    %v3501 = vld [vmem:[%s6 + $0x70] sm:$0xff]
    %v3502 = vld [vmem:[%s6 + $0x78] sm:$0xff]
    %3503 = vmatprep.subr.mxu0 0.0
    %v3504 = vand.u32 %v3502, 4294901760
    %3505 = vmatpush1.msra.mxu0 %v3504
    %3506 = vmatprep.subr.mxu0 0.0
    %v3507 = vand.u32 %v3501, 4294901760
    %3508 = vmatpush1.msra.mxu0 %v3507
    %3509 = vmatprep.subr.mxu0 0.0
    %v3510 = vand.u32 %v3500, 4294901760
    %3511 = vmatpush1.msra.mxu0 %v3510
    %3512 = vmatprep.subr.mxu0 0.0
    %v3513 = vand.u32 %v3499, 4294901760
    %3514 = vmatpush1.msra.mxu0 %v3513
    %3515 = vmatprep.subr.mxu0 0.0
    %v3516 = vand.u32 %v3498, 4294901760
    %3517 = vmatpush1.msra.mxu0 %v3516
    %3518 = vmatprep.subr.mxu0 0.0
    %v3519 = vand.u32 %v3497, 4294901760
    %3520 = vmatpush1.msra.mxu0 %v3519
    %3521 = vmatprep.subr.mxu0 0.0
    %v3522 = vand.u32 %v3496, 4294901760
    %3523 = vmatpush1.msra.mxu0 %v3522
    %3524 = vmatprep.subr.mxu0 0.0
    %v3525 = vand.u32 %v3495, 4294901760
    %3526 = vmatpush1.msra.mxu0 %v3525
    %3527 = vmatprep.subr.mxu0 0.0
    %v3528 = vand.u32 %v3494, 4294901760
    %3529 = vmatpush1.msra.mxu0 %v3528
    %3530 = vmatprep.subr.mxu0 0.0
    %v3531 = vand.u32 %v3493, 4294901760
    %3532 = vmatpush1.msra.mxu0 %v3531
    %3533 = vmatprep.subr.mxu0 0.0
    %v3534 = vand.u32 %v3492, 4294901760
    %3535 = vmatpush1.msra.mxu0 %v3534
    %3536 = vmatprep.subr.mxu0 0.0
    %v3537 = vand.u32 %v3491, 4294901760
    %3538 = vmatpush1.msra.mxu0 %v3537
    %3539 = vmatprep.subr.mxu0 0.0
    %v3540 = vand.u32 %v3490, 4294901760
    %3541 = vmatpush1.msra.mxu0 %v3540
    %3542 = vmatprep.subr.mxu0 0.0
    %v3543 = vand.u32 %v3489, 4294901760
    %3544 = vmatpush1.msra.mxu0 %v3543
    %3545 = vmatprep.subr.mxu0 0.0
    %v3546 = vand.u32 %v3488, 4294901760
    %3547 = vmatpush1.msra.mxu0 %v3546
    %3548 = vmatprep.subr.mxu0 0.0
    %v3549 = vand.u32 %v3487, 4294901760
    %3550 = vmatpush1.msra.mxu0 %v3549
    %3551 = vmatprep.subr.mxu0 0.0
    %3552 = vmatpush2.msra.mxu0 0.0
    %3553 = vmatprep.subr.mxu0 0.0
    %3554 = vmatpush2.msra.mxu0 0.0
    %3555 = vmatprep.subr.mxu0 0.0
    %3556 = vmatpush2.msra.mxu0 0.0
    %3557 = vmatprep.subr.mxu0 0.0
    %3558 = vmatpush2.msra.mxu0 0.0
    %3559 = vmatprep.subr.mxu0 0.0
    %3560 = vmatpush2.msra.mxu0 0.0
    %3561 = vmatprep.subr.mxu0 0.0
    %3562 = vmatpush2.msra.mxu0 0.0
    %3563 = vmatprep.subr.mxu0 0.0
    %3564 = vmatpush2.msra.mxu0 0.0
    %3565 = vmatprep.subr.mxu0 0.0
    %3566 = vmatpush2.msra.mxu0 0.0
    %3567 = vmatprep.subr.mxu0 0.0
    %3568 = vmatpush2.msra.mxu0 0.0
    %3569 = vmatprep.subr.mxu0 0.0
    %3570 = vmatpush2.msra.mxu0 0.0
    %3571 = vmatprep.subr.mxu0 0.0
    %3572 = vmatpush2.msra.mxu0 0.0
    %3573 = vmatprep.subr.mxu0 0.0
    %3574 = vmatpush2.msra.mxu0 0.0
    %3575 = vmatprep.subr.mxu0 0.0
    %3576 = vmatpush2.msra.mxu0 0.0
    %3577 = vmatprep.subr.mxu0 0.0
    %3578 = vmatpush2.msra.mxu0 0.0
    %3579 = vmatprep.subr.mxu0 0.0
    %3580 = vmatpush2.msra.mxu0 0.0
    %3581 = vmatprep.subr.mxu0 0.0
    %3582 = vmatpush2.msra.mxu0 0.0
    %3583 = vmatprep.mubr.f32.mxu0 0.0
    %v3584 = vand.u32 %v3486, 4294901760
    %v3585 = vsub.f32 %v3486, %v3584
    %v3586 = vand.u32 %v3585, 4294901760
    %v3587 = vsub.f32 %v3585, %v3586
    %v3588 = vand.u32 %v3587, 4294901760
    %3589 = vmatmul.mubr.f32.gmra.mxu0 %v3588
    %v3590 = vpop.f32.mrf.mxu0
    %v3591 = vadd.f32 0.0, %v3590
    %v3592 = vpop.f32.mrf.mxu0
    %3593 = vdwg.mxu0
    %3594 = vmatprep.subr.mxu0 0.0
    %v3595 = vand.u32 %v3502, 4294901760
    %v3596 = vsub.f32 %v3502, %v3595
    %v3597 = vand.u32 %v3596, 4294901760
    %v3598 = vsub.f32 %v3596, %v3597
    %v3599 = vand.u32 %v3598, 4294901760
    %3600 = vmatpush1.msra.mxu0 %v3599
    %3601 = vmatprep.subr.mxu0 0.0
    %v3602 = vand.u32 %v3501, 4294901760
    %v3603 = vsub.f32 %v3501, %v3602
    %v3604 = vand.u32 %v3603, 4294901760
    %v3605 = vsub.f32 %v3603, %v3604
    %v3606 = vand.u32 %v3605, 4294901760
    %3607 = vmatpush1.msra.mxu0 %v3606
    %3608 = vmatprep.subr.mxu0 0.0
    %v3609 = vand.u32 %v3500, 4294901760
    %v3610 = vsub.f32 %v3500, %v3609
    %v3611 = vand.u32 %v3610, 4294901760
    %v3612 = vsub.f32 %v3610, %v3611
    %v3613 = vand.u32 %v3612, 4294901760
    %3614 = vmatpush1.msra.mxu0 %v3613
    %3615 = vmatprep.subr.mxu0 0.0
    %v3616 = vand.u32 %v3499, 4294901760
    %v3617 = vsub.f32 %v3499, %v3616
    %v3618 = vand.u32 %v3617, 4294901760
    %v3619 = vsub.f32 %v3617, %v3618
    %v3620 = vand.u32 %v3619, 4294901760
    %3621 = vmatpush1.msra.mxu0 %v3620
    %3622 = vmatprep.subr.mxu0 0.0
    %v3623 = vand.u32 %v3498, 4294901760
    %v3624 = vsub.f32 %v3498, %v3623
    %v3625 = vand.u32 %v3624, 4294901760
    %v3626 = vsub.f32 %v3624, %v3625
    %v3627 = vand.u32 %v3626, 4294901760
    %3628 = vmatpush1.msra.mxu0 %v3627
    %3629 = vmatprep.subr.mxu0 0.0
    %v3630 = vand.u32 %v3497, 4294901760
    %v3631 = vsub.f32 %v3497, %v3630
    %v3632 = vand.u32 %v3631, 4294901760
    %v3633 = vsub.f32 %v3631, %v3632
    %v3634 = vand.u32 %v3633, 4294901760
    %3635 = vmatpush1.msra.mxu0 %v3634
    %3636 = vmatprep.subr.mxu0 0.0
    %v3637 = vand.u32 %v3496, 4294901760
    %v3638 = vsub.f32 %v3496, %v3637
    %v3639 = vand.u32 %v3638, 4294901760
    %v3640 = vsub.f32 %v3638, %v3639
    %v3641 = vand.u32 %v3640, 4294901760
    %3642 = vmatpush1.msra.mxu0 %v3641
    %3643 = vmatprep.subr.mxu0 0.0
    %v3644 = vand.u32 %v3495, 4294901760
    %v3645 = vsub.f32 %v3495, %v3644
    %v3646 = vand.u32 %v3645, 4294901760
    %v3647 = vsub.f32 %v3645, %v3646
    %v3648 = vand.u32 %v3647, 4294901760
    %3649 = vmatpush1.msra.mxu0 %v3648
    %3650 = vmatprep.subr.mxu0 0.0
    %v3651 = vand.u32 %v3494, 4294901760
    %v3652 = vsub.f32 %v3494, %v3651
    %v3653 = vand.u32 %v3652, 4294901760
    %v3654 = vsub.f32 %v3652, %v3653
    %v3655 = vand.u32 %v3654, 4294901760
    %3656 = vmatpush1.msra.mxu0 %v3655
    %3657 = vmatprep.subr.mxu0 0.0
    %v3658 = vand.u32 %v3493, 4294901760
    %v3659 = vsub.f32 %v3493, %v3658
    %v3660 = vand.u32 %v3659, 4294901760
    %v3661 = vsub.f32 %v3659, %v3660
    %v3662 = vand.u32 %v3661, 4294901760
    %3663 = vmatpush1.msra.mxu0 %v3662
    %3664 = vmatprep.subr.mxu0 0.0
    %v3665 = vand.u32 %v3492, 4294901760
    %v3666 = vsub.f32 %v3492, %v3665
    %v3667 = vand.u32 %v3666, 4294901760
    %v3668 = vsub.f32 %v3666, %v3667
    %v3669 = vand.u32 %v3668, 4294901760
    %3670 = vmatpush1.msra.mxu0 %v3669
    %3671 = vmatprep.subr.mxu0 0.0
    %v3672 = vand.u32 %v3491, 4294901760
    %v3673 = vsub.f32 %v3491, %v3672
    %v3674 = vand.u32 %v3673, 4294901760
    %v3675 = vsub.f32 %v3673, %v3674
    %v3676 = vand.u32 %v3675, 4294901760
    %3677 = vmatpush1.msra.mxu0 %v3676
    %3678 = vmatprep.subr.mxu0 0.0
    %v3679 = vand.u32 %v3490, 4294901760
    %v3680 = vsub.f32 %v3490, %v3679
    %v3681 = vand.u32 %v3680, 4294901760
    %v3682 = vsub.f32 %v3680, %v3681
    %v3683 = vand.u32 %v3682, 4294901760
    %3684 = vmatpush1.msra.mxu0 %v3683
    %3685 = vmatprep.subr.mxu0 0.0
    %v3686 = vand.u32 %v3489, 4294901760
    %v3687 = vsub.f32 %v3489, %v3686
    %v3688 = vand.u32 %v3687, 4294901760
    %v3689 = vsub.f32 %v3687, %v3688
    %v3690 = vand.u32 %v3689, 4294901760
    %3691 = vmatpush1.msra.mxu0 %v3690
    %3692 = vmatprep.subr.mxu0 0.0
    %v3693 = vand.u32 %v3488, 4294901760
    %v3694 = vsub.f32 %v3488, %v3693
    %v3695 = vand.u32 %v3694, 4294901760
    %v3696 = vsub.f32 %v3694, %v3695
    %v3697 = vand.u32 %v3696, 4294901760
    %3698 = vmatpush1.msra.mxu0 %v3697
    %3699 = vmatprep.subr.mxu0 0.0
    %v3700 = vand.u32 %v3487, 4294901760
    %v3701 = vsub.f32 %v3487, %v3700
    %v3702 = vand.u32 %v3701, 4294901760
    %v3703 = vsub.f32 %v3701, %v3702
    %v3704 = vand.u32 %v3703, 4294901760
    %3705 = vmatpush1.msra.mxu0 %v3704
    %3706 = vmatprep.subr.mxu0 0.0
    %3707 = vmatpush2.msra.mxu0 0.0
    %3708 = vmatprep.subr.mxu0 0.0
    %3709 = vmatpush2.msra.mxu0 0.0
    %3710 = vmatprep.subr.mxu0 0.0
    %3711 = vmatpush2.msra.mxu0 0.0
    %3712 = vmatprep.subr.mxu0 0.0
    %3713 = vmatpush2.msra.mxu0 0.0
    %3714 = vmatprep.subr.mxu0 0.0
    %3715 = vmatpush2.msra.mxu0 0.0
    %3716 = vmatprep.subr.mxu0 0.0
    %3717 = vmatpush2.msra.mxu0 0.0
    %3718 = vmatprep.subr.mxu0 0.0
    %3719 = vmatpush2.msra.mxu0 0.0
    %3720 = vmatprep.subr.mxu0 0.0
    %3721 = vmatpush2.msra.mxu0 0.0
    %3722 = vmatprep.subr.mxu0 0.0
    %3723 = vmatpush2.msra.mxu0 0.0
    %3724 = vmatprep.subr.mxu0 0.0
    %3725 = vmatpush2.msra.mxu0 0.0
    %3726 = vmatprep.subr.mxu0 0.0
    %3727 = vmatpush2.msra.mxu0 0.0
    %3728 = vmatprep.subr.mxu0 0.0
    %3729 = vmatpush2.msra.mxu0 0.0
    %3730 = vmatprep.subr.mxu0 0.0
    %3731 = vmatpush2.msra.mxu0 0.0
    %3732 = vmatprep.subr.mxu0 0.0
    %3733 = vmatpush2.msra.mxu0 0.0
    %3734 = vmatprep.subr.mxu0 0.0
    %3735 = vmatpush2.msra.mxu0 0.0
    %3736 = vmatprep.subr.mxu0 0.0
    %3737 = vmatpush2.msra.mxu0 0.0
    %3738 = vmatprep.mubr.f32.mxu0 0.0
    %v3739 = vand.u32 %v3486, 4294901760
    %3740 = vmatmul.mubr.f32.gmra.mxu0 %v3739
    %v3741 = vpop.f32.mrf.mxu0
    %v3742 = vadd.f32 %v3591, %v3741
    %v3743 = vpop.f32.mrf.mxu0
    %3744 = vdwg.mxu0
    %3745 = vmatprep.subr.mxu0 0.0
    %v3746 = vand.u32 %v3502, 4294901760
    %v3747 = vsub.f32 %v3502, %v3746
    %3748 = vmatpush1.msra.mxu0 %v3747
    %3749 = vmatprep.subr.mxu0 0.0
    %v3750 = vand.u32 %v3501, 4294901760
    %v3751 = vsub.f32 %v3501, %v3750
    %3752 = vmatpush1.msra.mxu0 %v3751
    %3753 = vmatprep.subr.mxu0 0.0
    %v3754 = vand.u32 %v3500, 4294901760
    %v3755 = vsub.f32 %v3500, %v3754
    %3756 = vmatpush1.msra.mxu0 %v3755
    %3757 = vmatprep.subr.mxu0 0.0
    %v3758 = vand.u32 %v3499, 4294901760
    %v3759 = vsub.f32 %v3499, %v3758
    %3760 = vmatpush1.msra.mxu0 %v3759
    %3761 = vmatprep.subr.mxu0 0.0
    %v3762 = vand.u32 %v3498, 4294901760
    %v3763 = vsub.f32 %v3498, %v3762
    %3764 = vmatpush1.msra.mxu0 %v3763
    %3765 = vmatprep.subr.mxu0 0.0
    %v3766 = vand.u32 %v3497, 4294901760
    %v3767 = vsub.f32 %v3497, %v3766
    %3768 = vmatpush1.msra.mxu0 %v3767
    %3769 = vmatprep.subr.mxu0 0.0
    %v3770 = vand.u32 %v3496, 4294901760
    %v3771 = vsub.f32 %v3496, %v3770
    %3772 = vmatpush1.msra.mxu0 %v3771
    %3773 = vmatprep.subr.mxu0 0.0
    %v3774 = vand.u32 %v3495, 4294901760
    %v3775 = vsub.f32 %v3495, %v3774
    %3776 = vmatpush1.msra.mxu0 %v3775
    %3777 = vmatprep.subr.mxu0 0.0
    %v3778 = vand.u32 %v3494, 4294901760
    %v3779 = vsub.f32 %v3494, %v3778
    %3780 = vmatpush1.msra.mxu0 %v3779
    %3781 = vmatprep.subr.mxu0 0.0
    %v3782 = vand.u32 %v3493, 4294901760
    %v3783 = vsub.f32 %v3493, %v3782
    %3784 = vmatpush1.msra.mxu0 %v3783
    %3785 = vmatprep.subr.mxu0 0.0
    %v3786 = vand.u32 %v3492, 4294901760
    %v3787 = vsub.f32 %v3492, %v3786
    %3788 = vmatpush1.msra.mxu0 %v3787
    %3789 = vmatprep.subr.mxu0 0.0
    %v3790 = vand.u32 %v3491, 4294901760
    %v3791 = vsub.f32 %v3491, %v3790
    %3792 = vmatpush1.msra.mxu0 %v3791
    %3793 = vmatprep.subr.mxu0 0.0
    %v3794 = vand.u32 %v3490, 4294901760
    %v3795 = vsub.f32 %v3490, %v3794
    %3796 = vmatpush1.msra.mxu0 %v3795
    %3797 = vmatprep.subr.mxu0 0.0
    %v3798 = vand.u32 %v3489, 4294901760
    %v3799 = vsub.f32 %v3489, %v3798
    %3800 = vmatpush1.msra.mxu0 %v3799
    %3801 = vmatprep.subr.mxu0 0.0
    %v3802 = vand.u32 %v3488, 4294901760
    %v3803 = vsub.f32 %v3488, %v3802
    %3804 = vmatpush1.msra.mxu0 %v3803
    %3805 = vmatprep.subr.mxu0 0.0
    %v3806 = vand.u32 %v3487, 4294901760
    %v3807 = vsub.f32 %v3487, %v3806
    %3808 = vmatpush1.msra.mxu0 %v3807
    %3809 = vmatprep.subr.mxu0 0.0
    %3810 = vmatpush2.msra.mxu0 0.0
    %3811 = vmatprep.subr.mxu0 0.0
    %3812 = vmatpush2.msra.mxu0 0.0
    %3813 = vmatprep.subr.mxu0 0.0
    %3814 = vmatpush2.msra.mxu0 0.0
    %3815 = vmatprep.subr.mxu0 0.0
    %3816 = vmatpush2.msra.mxu0 0.0
    %3817 = vmatprep.subr.mxu0 0.0
    %3818 = vmatpush2.msra.mxu0 0.0
    %3819 = vmatprep.subr.mxu0 0.0
    %3820 = vmatpush2.msra.mxu0 0.0
    %3821 = vmatprep.subr.mxu0 0.0
    %3822 = vmatpush2.msra.mxu0 0.0
    %3823 = vmatprep.subr.mxu0 0.0
    %3824 = vmatpush2.msra.mxu0 0.0
    %3825 = vmatprep.subr.mxu0 0.0
    %3826 = vmatpush2.msra.mxu0 0.0
    %3827 = vmatprep.subr.mxu0 0.0
    %3828 = vmatpush2.msra.mxu0 0.0
    %3829 = vmatprep.subr.mxu0 0.0
    %3830 = vmatpush2.msra.mxu0 0.0
    %3831 = vmatprep.subr.mxu0 0.0
    %3832 = vmatpush2.msra.mxu0 0.0
    %3833 = vmatprep.subr.mxu0 0.0
    %3834 = vmatpush2.msra.mxu0 0.0
    %3835 = vmatprep.subr.mxu0 0.0
    %3836 = vmatpush2.msra.mxu0 0.0
    %3837 = vmatprep.subr.mxu0 0.0
    %3838 = vmatpush2.msra.mxu0 0.0
    %3839 = vmatprep.subr.mxu0 0.0
    %3840 = vmatpush2.msra.mxu0 0.0
    %3841 = vmatprep.mubr.f32.mxu0 0.0
    %v3842 = vand.u32 %v3486, 4294901760
    %v3843 = vsub.f32 %v3486, %v3842
    %3844 = vmatmul.mubr.f32.gmra.mxu0 %v3843
    %v3845 = vpop.f32.mrf.mxu0
    %v3846 = vadd.f32 %v3742, %v3845
    %v3847 = vpop.f32.mrf.mxu0
    %3848 = vdwg.mxu0
    %3849 = vmatprep.subr.mxu0 0.0
    %v3850 = vand.u32 %v3502, 4294901760
    %3851 = vmatpush1.msra.mxu0 %v3850
    %3852 = vmatprep.subr.mxu0 0.0
    %v3853 = vand.u32 %v3501, 4294901760
    %3854 = vmatpush1.msra.mxu0 %v3853
    %3855 = vmatprep.subr.mxu0 0.0
    %v3856 = vand.u32 %v3500, 4294901760
    %3857 = vmatpush1.msra.mxu0 %v3856
    %3858 = vmatprep.subr.mxu0 0.0
    %v3859 = vand.u32 %v3499, 4294901760
    %3860 = vmatpush1.msra.mxu0 %v3859
    %3861 = vmatprep.subr.mxu0 0.0
    %v3862 = vand.u32 %v3498, 4294901760
    %3863 = vmatpush1.msra.mxu0 %v3862
    %3864 = vmatprep.subr.mxu0 0.0
    %v3865 = vand.u32 %v3497, 4294901760
    %3866 = vmatpush1.msra.mxu0 %v3865
    %3867 = vmatprep.subr.mxu0 0.0
    %v3868 = vand.u32 %v3496, 4294901760
    %3869 = vmatpush1.msra.mxu0 %v3868
    %3870 = vmatprep.subr.mxu0 0.0
    %v3871 = vand.u32 %v3495, 4294901760
    %3872 = vmatpush1.msra.mxu0 %v3871
    %3873 = vmatprep.subr.mxu0 0.0
    %v3874 = vand.u32 %v3494, 4294901760
    %3875 = vmatpush1.msra.mxu0 %v3874
    %3876 = vmatprep.subr.mxu0 0.0
    %v3877 = vand.u32 %v3493, 4294901760
    %3878 = vmatpush1.msra.mxu0 %v3877
    %3879 = vmatprep.subr.mxu0 0.0
    %v3880 = vand.u32 %v3492, 4294901760
    %3881 = vmatpush1.msra.mxu0 %v3880
    %3882 = vmatprep.subr.mxu0 0.0
    %v3883 = vand.u32 %v3491, 4294901760
    %3884 = vmatpush1.msra.mxu0 %v3883
    %3885 = vmatprep.subr.mxu0 0.0
    %v3886 = vand.u32 %v3490, 4294901760
    %3887 = vmatpush1.msra.mxu0 %v3886
    %3888 = vmatprep.subr.mxu0 0.0
    %v3889 = vand.u32 %v3489, 4294901760
    %3890 = vmatpush1.msra.mxu0 %v3889
    %3891 = vmatprep.subr.mxu0 0.0
    %v3892 = vand.u32 %v3488, 4294901760
    %3893 = vmatpush1.msra.mxu0 %v3892
    %3894 = vmatprep.subr.mxu0 0.0
    %v3895 = vand.u32 %v3487, 4294901760
    %3896 = vmatpush1.msra.mxu0 %v3895
    %3897 = vmatprep.subr.mxu0 0.0
    %3898 = vmatpush2.msra.mxu0 0.0
    %3899 = vmatprep.subr.mxu0 0.0
    %3900 = vmatpush2.msra.mxu0 0.0
    %3901 = vmatprep.subr.mxu0 0.0
    %3902 = vmatpush2.msra.mxu0 0.0
    %3903 = vmatprep.subr.mxu0 0.0
    %3904 = vmatpush2.msra.mxu0 0.0
    %3905 = vmatprep.subr.mxu0 0.0
    %3906 = vmatpush2.msra.mxu0 0.0
    %3907 = vmatprep.subr.mxu0 0.0
    %3908 = vmatpush2.msra.mxu0 0.0
    %3909 = vmatprep.subr.mxu0 0.0
    %3910 = vmatpush2.msra.mxu0 0.0
    %3911 = vmatprep.subr.mxu0 0.0
    %3912 = vmatpush2.msra.mxu0 0.0
    %3913 = vmatprep.subr.mxu0 0.0
    %3914 = vmatpush2.msra.mxu0 0.0
    %3915 = vmatprep.subr.mxu0 0.0
    %3916 = vmatpush2.msra.mxu0 0.0
    %3917 = vmatprep.subr.mxu0 0.0
    %3918 = vmatpush2.msra.mxu0 0.0
    %3919 = vmatprep.subr.mxu0 0.0
    %3920 = vmatpush2.msra.mxu0 0.0
    %3921 = vmatprep.subr.mxu0 0.0
    %3922 = vmatpush2.msra.mxu0 0.0
    %3923 = vmatprep.subr.mxu0 0.0
    %3924 = vmatpush2.msra.mxu0 0.0
    %3925 = vmatprep.subr.mxu0 0.0
    %3926 = vmatpush2.msra.mxu0 0.0
    %3927 = vmatprep.subr.mxu0 0.0
    %3928 = vmatpush2.msra.mxu0 0.0
    %3929 = vmatprep.mubr.f32.mxu0 0.0
    %v3930 = vand.u32 %v3486, 4294901760
    %v3931 = vsub.f32 %v3486, %v3930
    %v3932 = vand.u32 %v3931, 4294901760
    %3933 = vmatmul.mubr.f32.gmra.mxu0 %v3932
    %v3934 = vpop.f32.mrf.mxu0
    %v3935 = vadd.f32 %v3846, %v3934
    %v3936 = vpop.f32.mrf.mxu0
    %3937 = vdwg.mxu0
    %3938 = vmatprep.subr.mxu0 0.0
    %v3939 = vand.u32 %v3502, 4294901760
    %v3940 = vsub.f32 %v3502, %v3939
    %v3941 = vand.u32 %v3940, 4294901760
    %3942 = vmatpush1.msra.mxu0 %v3941
    %3943 = vmatprep.subr.mxu0 0.0
    %v3944 = vand.u32 %v3501, 4294901760
    %v3945 = vsub.f32 %v3501, %v3944
    %v3946 = vand.u32 %v3945, 4294901760
    %3947 = vmatpush1.msra.mxu0 %v3946
    %3948 = vmatprep.subr.mxu0 0.0
    %v3949 = vand.u32 %v3500, 4294901760
    %v3950 = vsub.f32 %v3500, %v3949
    %v3951 = vand.u32 %v3950, 4294901760
    %3952 = vmatpush1.msra.mxu0 %v3951
    %3953 = vmatprep.subr.mxu0 0.0
    %v3954 = vand.u32 %v3499, 4294901760
    %v3955 = vsub.f32 %v3499, %v3954
    %v3956 = vand.u32 %v3955, 4294901760
    %3957 = vmatpush1.msra.mxu0 %v3956
    %3958 = vmatprep.subr.mxu0 0.0
    %v3959 = vand.u32 %v3498, 4294901760
    %v3960 = vsub.f32 %v3498, %v3959
    %v3961 = vand.u32 %v3960, 4294901760
    %3962 = vmatpush1.msra.mxu0 %v3961
    %3963 = vmatprep.subr.mxu0 0.0
    %v3964 = vand.u32 %v3497, 4294901760
    %v3965 = vsub.f32 %v3497, %v3964
    %v3966 = vand.u32 %v3965, 4294901760
    %3967 = vmatpush1.msra.mxu0 %v3966
    %3968 = vmatprep.subr.mxu0 0.0
    %v3969 = vand.u32 %v3496, 4294901760
    %v3970 = vsub.f32 %v3496, %v3969
    %v3971 = vand.u32 %v3970, 4294901760
    %3972 = vmatpush1.msra.mxu0 %v3971
    %3973 = vmatprep.subr.mxu0 0.0
    %v3974 = vand.u32 %v3495, 4294901760
    %v3975 = vsub.f32 %v3495, %v3974
    %v3976 = vand.u32 %v3975, 4294901760
    %3977 = vmatpush1.msra.mxu0 %v3976
    %3978 = vmatprep.subr.mxu0 0.0
    %v3979 = vand.u32 %v3494, 4294901760
    %v3980 = vsub.f32 %v3494, %v3979
    %v3981 = vand.u32 %v3980, 4294901760
    %3982 = vmatpush1.msra.mxu0 %v3981
    %3983 = vmatprep.subr.mxu0 0.0
    %v3984 = vand.u32 %v3493, 4294901760
    %v3985 = vsub.f32 %v3493, %v3984
    %v3986 = vand.u32 %v3985, 4294901760
    %3987 = vmatpush1.msra.mxu0 %v3986
    %3988 = vmatprep.subr.mxu0 0.0
    %v3989 = vand.u32 %v3492, 4294901760
    %v3990 = vsub.f32 %v3492, %v3989
    %v3991 = vand.u32 %v3990, 4294901760
    %3992 = vmatpush1.msra.mxu0 %v3991
    %3993 = vmatprep.subr.mxu0 0.0
    %v3994 = vand.u32 %v3491, 4294901760
    %v3995 = vsub.f32 %v3491, %v3994
    %v3996 = vand.u32 %v3995, 4294901760
    %3997 = vmatpush1.msra.mxu0 %v3996
    %3998 = vmatprep.subr.mxu0 0.0
    %v3999 = vand.u32 %v3490, 4294901760
    %v4000 = vsub.f32 %v3490, %v3999
    %v4001 = vand.u32 %v4000, 4294901760
    %4002 = vmatpush1.msra.mxu0 %v4001
    %4003 = vmatprep.subr.mxu0 0.0
    %v4004 = vand.u32 %v3489, 4294901760
    %v4005 = vsub.f32 %v3489, %v4004
    %v4006 = vand.u32 %v4005, 4294901760
    %4007 = vmatpush1.msra.mxu0 %v4006
    %4008 = vmatprep.subr.mxu0 0.0
    %v4009 = vand.u32 %v3488, 4294901760
    %v4010 = vsub.f32 %v3488, %v4009
    %v4011 = vand.u32 %v4010, 4294901760
    %4012 = vmatpush1.msra.mxu0 %v4011
    %4013 = vmatprep.subr.mxu0 0.0
    %v4014 = vand.u32 %v3487, 4294901760
    %v4015 = vsub.f32 %v3487, %v4014
    %v4016 = vand.u32 %v4015, 4294901760
    %4017 = vmatpush1.msra.mxu0 %v4016
    %4018 = vmatprep.subr.mxu0 0.0
    %4019 = vmatpush2.msra.mxu0 0.0
    %4020 = vmatprep.subr.mxu0 0.0
    %4021 = vmatpush2.msra.mxu0 0.0
    %4022 = vmatprep.subr.mxu0 0.0
    %4023 = vmatpush2.msra.mxu0 0.0
    %4024 = vmatprep.subr.mxu0 0.0
    %4025 = vmatpush2.msra.mxu0 0.0
    %4026 = vmatprep.subr.mxu0 0.0
    %4027 = vmatpush2.msra.mxu0 0.0
    %4028 = vmatprep.subr.mxu0 0.0
    %4029 = vmatpush2.msra.mxu0 0.0
    %4030 = vmatprep.subr.mxu0 0.0
    %4031 = vmatpush2.msra.mxu0 0.0
    %4032 = vmatprep.subr.mxu0 0.0
    %4033 = vmatpush2.msra.mxu0 0.0
    %4034 = vmatprep.subr.mxu0 0.0
    %4035 = vmatpush2.msra.mxu0 0.0
    %4036 = vmatprep.subr.mxu0 0.0
    %4037 = vmatpush2.msra.mxu0 0.0
    %4038 = vmatprep.subr.mxu0 0.0
    %4039 = vmatpush2.msra.mxu0 0.0
    %4040 = vmatprep.subr.mxu0 0.0
    %4041 = vmatpush2.msra.mxu0 0.0
    %4042 = vmatprep.subr.mxu0 0.0
    %4043 = vmatpush2.msra.mxu0 0.0
    %4044 = vmatprep.subr.mxu0 0.0
    %4045 = vmatpush2.msra.mxu0 0.0
    %4046 = vmatprep.subr.mxu0 0.0
    %4047 = vmatpush2.msra.mxu0 0.0
    %4048 = vmatprep.subr.mxu0 0.0
    %4049 = vmatpush2.msra.mxu0 0.0
    %4050 = vmatprep.mubr.f32.mxu0 0.0
    %v4051 = vand.u32 %v3486, 4294901760
    %4052 = vmatmul.mubr.f32.gmra.mxu0 %v4051
    %v4053 = vpop.f32.mrf.mxu0
    %v4054 = vadd.f32 %v3935, %v4053
    %v4055 = vpop.f32.mrf.mxu0
    %4056 = vdwg.mxu0
    %4057 = vmatprep.subr.mxu0 0.0
    %v4058 = vand.u32 %v3502, 4294901760
    %4059 = vmatpush1.msra.mxu0 %v4058
    %4060 = vmatprep.subr.mxu0 0.0
    %v4061 = vand.u32 %v3501, 4294901760
    %4062 = vmatpush1.msra.mxu0 %v4061
    %4063 = vmatprep.subr.mxu0 0.0
    %v4064 = vand.u32 %v3500, 4294901760
    %4065 = vmatpush1.msra.mxu0 %v4064
    %4066 = vmatprep.subr.mxu0 0.0
    %v4067 = vand.u32 %v3499, 4294901760
    %4068 = vmatpush1.msra.mxu0 %v4067
    %4069 = vmatprep.subr.mxu0 0.0
    %v4070 = vand.u32 %v3498, 4294901760
    %4071 = vmatpush1.msra.mxu0 %v4070
    %4072 = vmatprep.subr.mxu0 0.0
    %v4073 = vand.u32 %v3497, 4294901760
    %4074 = vmatpush1.msra.mxu0 %v4073
    %4075 = vmatprep.subr.mxu0 0.0
    %v4076 = vand.u32 %v3496, 4294901760
    %4077 = vmatpush1.msra.mxu0 %v4076
    %4078 = vmatprep.subr.mxu0 0.0
    %v4079 = vand.u32 %v3495, 4294901760
    %4080 = vmatpush1.msra.mxu0 %v4079
    %4081 = vmatprep.subr.mxu0 0.0
    %v4082 = vand.u32 %v3494, 4294901760
    %4083 = vmatpush1.msra.mxu0 %v4082
    %4084 = vmatprep.subr.mxu0 0.0
    %v4085 = vand.u32 %v3493, 4294901760
    %4086 = vmatpush1.msra.mxu0 %v4085
    %4087 = vmatprep.subr.mxu0 0.0
    %v4088 = vand.u32 %v3492, 4294901760
    %4089 = vmatpush1.msra.mxu0 %v4088
    %4090 = vmatprep.subr.mxu0 0.0
    %v4091 = vand.u32 %v3491, 4294901760
    %4092 = vmatpush1.msra.mxu0 %v4091
    %4093 = vmatprep.subr.mxu0 0.0
    %v4094 = vand.u32 %v3490, 4294901760
    %4095 = vmatpush1.msra.mxu0 %v4094
    %4096 = vmatprep.subr.mxu0 0.0
    %v4097 = vand.u32 %v3489, 4294901760
    %4098 = vmatpush1.msra.mxu0 %v4097
    %4099 = vmatprep.subr.mxu0 0.0
    %v4100 = vand.u32 %v3488, 4294901760
    %4101 = vmatpush1.msra.mxu0 %v4100
    %4102 = vmatprep.subr.mxu0 0.0
    %v4103 = vand.u32 %v3487, 4294901760
    %4104 = vmatpush1.msra.mxu0 %v4103
    %4105 = vmatprep.subr.mxu0 0.0
    %4106 = vmatpush2.msra.mxu0 0.0
    %4107 = vmatprep.subr.mxu0 0.0
    %4108 = vmatpush2.msra.mxu0 0.0
    %4109 = vmatprep.subr.mxu0 0.0
    %4110 = vmatpush2.msra.mxu0 0.0
    %4111 = vmatprep.subr.mxu0 0.0
    %4112 = vmatpush2.msra.mxu0 0.0
    %4113 = vmatprep.subr.mxu0 0.0
    %4114 = vmatpush2.msra.mxu0 0.0
    %4115 = vmatprep.subr.mxu0 0.0
    %4116 = vmatpush2.msra.mxu0 0.0
    %4117 = vmatprep.subr.mxu0 0.0
    %4118 = vmatpush2.msra.mxu0 0.0
    %4119 = vmatprep.subr.mxu0 0.0
    %4120 = vmatpush2.msra.mxu0 0.0
    %4121 = vmatprep.subr.mxu0 0.0
    %4122 = vmatpush2.msra.mxu0 0.0
    %4123 = vmatprep.subr.mxu0 0.0
    %4124 = vmatpush2.msra.mxu0 0.0
    %4125 = vmatprep.subr.mxu0 0.0
    %4126 = vmatpush2.msra.mxu0 0.0
    %4127 = vmatprep.subr.mxu0 0.0
    %4128 = vmatpush2.msra.mxu0 0.0
    %4129 = vmatprep.subr.mxu0 0.0
    %4130 = vmatpush2.msra.mxu0 0.0
    %4131 = vmatprep.subr.mxu0 0.0
    %4132 = vmatpush2.msra.mxu0 0.0
    %4133 = vmatprep.subr.mxu0 0.0
    %4134 = vmatpush2.msra.mxu0 0.0
    %4135 = vmatprep.subr.mxu0 0.0
    %4136 = vmatpush2.msra.mxu0 0.0
    %4137 = vmatprep.mubr.f32.mxu0 0.0
    %v4138 = vand.u32 %v3486, 4294901760
    %4139 = vmatmul.mubr.f32.gmra.mxu0 %v4138
    %v4140 = vpop.f32.mrf.mxu0
    %v4141 = vadd.f32 %v4054, %v4140
    %v4142 = vpop.f32.mrf.mxu0
    %4143 = vdwg.mxu0
    %v4144 = vld [vmem:[%s7] sm:$0x1]
    %v4145 = vld [vmem:[%s8] sm:$0x1]
    %v4146 = vrot.slane %v4141, 4
    %v4147 = vadd.f32 %v4141, %v4146
    %v4148 = vrot.slane %v4147, 2
    %v4149 = vadd.f32 %v4147, %v4148
    %v4150 = vrot.slane %v4149, 1
    %v4151 = vadd.f32 %v4149, %v4150
    %v4152 = vmul.f32 %v4151, %v3458
    %v4153 = vsub.f32 %v4141, %v4152
    %v4154 = vmul.f32 %v4153, %v4153
    %v4155 = vrot.slane %v4154, 4
    %v4156 = vadd.f32 %v4154, %v4155
    %v4157 = vrot.slane %v4156, 2
    %v4158 = vadd.f32 %v4156, %v4157
    %v4159 = vrot.slane %v4158, 1
    %v4160 = vadd.f32 %v4158, %v4159
    %v4161 = vmul.f32 %v4160, %v3458
    %v4162 = vadd.f32 %v4161, 1e-05
    %v4163 = vrsqrt.pop %v4162
    %v4164 = vmul.f32 %v4153, %v4163
    %v4166 = vlaneseq
    %v4167 = vshrl.u32 %v4166, 7
    %v4168 = vsub.s32 0, %v4167
    %v4169 = vrot.slane %v4144, %v4168
    %v4171 = vmul.f32 %v4164, %v4169
    %v4173 = vlaneseq
    %v4174 = vshrl.u32 %v4173, 7
    %v4175 = vsub.s32 0, %v4174
    %v4176 = vrot.slane %v4145, %v4175
    %v4178 = vadd.f32 %v4171, %v4176
    %v4179 = vmax.f32 %v4178, 0.0
    %v4180 = vld [vmem:[%s9] sm:$0xff]
    %v4181 = vld [vmem:[%s9 + $0x8] sm:$0xff]
    %v4182 = vld [vmem:[%s9 + $0x10] sm:$0xff]
    %v4183 = vld [vmem:[%s9 + $0x18] sm:$0xff]
    %v4184 = vld [vmem:[%s9 + $0x20] sm:$0xff]
    %v4185 = vld [vmem:[%s9 + $0x28] sm:$0xff]
    %v4186 = vld [vmem:[%s9 + $0x30] sm:$0xff]
    %v4187 = vld [vmem:[%s9 + $0x38] sm:$0xff]
    %v4188 = vld [vmem:[%s9 + $0x40] sm:$0xff]
    %v4189 = vld [vmem:[%s9 + $0x48] sm:$0xff]
    %v4190 = vld [vmem:[%s9 + $0x50] sm:$0xff]
    %v4191 = vld [vmem:[%s9 + $0x58] sm:$0xff]
    %v4192 = vld [vmem:[%s9 + $0x60] sm:$0xff]
    %v4193 = vld [vmem:[%s9 + $0x68] sm:$0xff]
    %v4194 = vld [vmem:[%s9 + $0x70] sm:$0xff]
    %v4195 = vld [vmem:[%s9 + $0x78] sm:$0xff]
    %v4196 = vld [vmem:[%s10] sm:$0x1]
    %v4198 = vlaneseq
    %v4199 = vshrl.u32 %v4198, 7
    %v4200 = vsub.s32 0, %v4199
    %v4201 = vrot.slane %v4196, %v4200
    %4203 = vmatprep.subr.mxu0 0.0
    %v4204 = vand.u32 %v4195, 4294901760
    %4205 = vmatpush1.msra.mxu0 %v4204
    %4206 = vmatprep.subr.mxu0 0.0
    %v4207 = vand.u32 %v4194, 4294901760
    %4208 = vmatpush1.msra.mxu0 %v4207
    %4209 = vmatprep.subr.mxu0 0.0
    %v4210 = vand.u32 %v4193, 4294901760
    %4211 = vmatpush1.msra.mxu0 %v4210
    %4212 = vmatprep.subr.mxu0 0.0
    %v4213 = vand.u32 %v4192, 4294901760
    %4214 = vmatpush1.msra.mxu0 %v4213
    %4215 = vmatprep.subr.mxu0 0.0
    %v4216 = vand.u32 %v4191, 4294901760
    %4217 = vmatpush1.msra.mxu0 %v4216
    %4218 = vmatprep.subr.mxu0 0.0
    %v4219 = vand.u32 %v4190, 4294901760
    %4220 = vmatpush1.msra.mxu0 %v4219
    %4221 = vmatprep.subr.mxu0 0.0
    %v4222 = vand.u32 %v4189, 4294901760
    %4223 = vmatpush1.msra.mxu0 %v4222
    %4224 = vmatprep.subr.mxu0 0.0
    %v4225 = vand.u32 %v4188, 4294901760
    %4226 = vmatpush1.msra.mxu0 %v4225
    %4227 = vmatprep.subr.mxu0 0.0
    %v4228 = vand.u32 %v4187, 4294901760
    %4229 = vmatpush1.msra.mxu0 %v4228
    %4230 = vmatprep.subr.mxu0 0.0
    %v4231 = vand.u32 %v4186, 4294901760
    %4232 = vmatpush1.msra.mxu0 %v4231
    %4233 = vmatprep.subr.mxu0 0.0
    %v4234 = vand.u32 %v4185, 4294901760
    %4235 = vmatpush1.msra.mxu0 %v4234
    %4236 = vmatprep.subr.mxu0 0.0
    %v4237 = vand.u32 %v4184, 4294901760
    %4238 = vmatpush1.msra.mxu0 %v4237
    %4239 = vmatprep.subr.mxu0 0.0
    %v4240 = vand.u32 %v4183, 4294901760
    %4241 = vmatpush1.msra.mxu0 %v4240
    %4242 = vmatprep.subr.mxu0 0.0
    %v4243 = vand.u32 %v4182, 4294901760
    %4244 = vmatpush1.msra.mxu0 %v4243
    %4245 = vmatprep.subr.mxu0 0.0
    %v4246 = vand.u32 %v4181, 4294901760
    %4247 = vmatpush1.msra.mxu0 %v4246
    %4248 = vmatprep.subr.mxu0 0.0
    %v4249 = vand.u32 %v4180, 4294901760
    %4250 = vmatpush1.msra.mxu0 %v4249
    %4251 = vmatprep.subr.mxu0 0.0
    %4252 = vmatpush2.msra.mxu0 0.0
    %4253 = vmatprep.subr.mxu0 0.0
    %4254 = vmatpush2.msra.mxu0 0.0
    %4255 = vmatprep.subr.mxu0 0.0
    %4256 = vmatpush2.msra.mxu0 0.0
    %4257 = vmatprep.subr.mxu0 0.0
    %4258 = vmatpush2.msra.mxu0 0.0
    %4259 = vmatprep.subr.mxu0 0.0
    %4260 = vmatpush2.msra.mxu0 0.0
    %4261 = vmatprep.subr.mxu0 0.0
    %4262 = vmatpush2.msra.mxu0 0.0
    %4263 = vmatprep.subr.mxu0 0.0
    %4264 = vmatpush2.msra.mxu0 0.0
    %4265 = vmatprep.subr.mxu0 0.0
    %4266 = vmatpush2.msra.mxu0 0.0
    %4267 = vmatprep.subr.mxu0 0.0
    %4268 = vmatpush2.msra.mxu0 0.0
    %4269 = vmatprep.subr.mxu0 0.0
    %4270 = vmatpush2.msra.mxu0 0.0
    %4271 = vmatprep.subr.mxu0 0.0
    %4272 = vmatpush2.msra.mxu0 0.0
    %4273 = vmatprep.subr.mxu0 0.0
    %4274 = vmatpush2.msra.mxu0 0.0
    %4275 = vmatprep.subr.mxu0 0.0
    %4276 = vmatpush2.msra.mxu0 0.0
    %4277 = vmatprep.subr.mxu0 0.0
    %4278 = vmatpush2.msra.mxu0 0.0
    %4279 = vmatprep.subr.mxu0 0.0
    %4280 = vmatpush2.msra.mxu0 0.0
    %4281 = vmatprep.subr.mxu0 0.0
    %4282 = vmatpush2.msra.mxu0 0.0
    %4283 = vmatprep.mubr.f32.mxu0 0.0
    %v4284 = vand.u32 %v4179, 4294901760
    %v4285 = vsub.f32 %v4179, %v4284
    %v4286 = vand.u32 %v4285, 4294901760
    %v4287 = vsub.f32 %v4285, %v4286
    %v4288 = vand.u32 %v4287, 4294901760
    %4289 = vmatmul.mubr.f32.gmra.mxu0 %v4288
    %v4290 = vpop.f32.mrf.mxu0
    %v4291 = vadd.f32 %v4201, %v4290
    %v4292 = vpop.f32.mrf.mxu0
    %4293 = vdwg.mxu0
    %4294 = vmatprep.subr.mxu0 0.0
    %v4295 = vand.u32 %v4195, 4294901760
    %v4296 = vsub.f32 %v4195, %v4295
    %v4297 = vand.u32 %v4296, 4294901760
    %v4298 = vsub.f32 %v4296, %v4297
    %v4299 = vand.u32 %v4298, 4294901760
    %4300 = vmatpush1.msra.mxu0 %v4299
    %4301 = vmatprep.subr.mxu0 0.0
    %v4302 = vand.u32 %v4194, 4294901760
    %v4303 = vsub.f32 %v4194, %v4302
    %v4304 = vand.u32 %v4303, 4294901760
    %v4305 = vsub.f32 %v4303, %v4304
    %v4306 = vand.u32 %v4305, 4294901760
    %4307 = vmatpush1.msra.mxu0 %v4306
    %4308 = vmatprep.subr.mxu0 0.0
    %v4309 = vand.u32 %v4193, 4294901760
    %v4310 = vsub.f32 %v4193, %v4309
    %v4311 = vand.u32 %v4310, 4294901760
    %v4312 = vsub.f32 %v4310, %v4311
    %v4313 = vand.u32 %v4312, 4294901760
    %4314 = vmatpush1.msra.mxu0 %v4313
    %4315 = vmatprep.subr.mxu0 0.0
    %v4316 = vand.u32 %v4192, 4294901760
    %v4317 = vsub.f32 %v4192, %v4316
    %v4318 = vand.u32 %v4317, 4294901760
    %v4319 = vsub.f32 %v4317, %v4318
    %v4320 = vand.u32 %v4319, 4294901760
    %4321 = vmatpush1.msra.mxu0 %v4320
    %4322 = vmatprep.subr.mxu0 0.0
    %v4323 = vand.u32 %v4191, 4294901760
    %v4324 = vsub.f32 %v4191, %v4323
    %v4325 = vand.u32 %v4324, 4294901760
    %v4326 = vsub.f32 %v4324, %v4325
    %v4327 = vand.u32 %v4326, 4294901760
    %4328 = vmatpush1.msra.mxu0 %v4327
    %4329 = vmatprep.subr.mxu0 0.0
    %v4330 = vand.u32 %v4190, 4294901760
    %v4331 = vsub.f32 %v4190, %v4330
    %v4332 = vand.u32 %v4331, 4294901760
    %v4333 = vsub.f32 %v4331, %v4332
    %v4334 = vand.u32 %v4333, 4294901760
    %4335 = vmatpush1.msra.mxu0 %v4334
    %4336 = vmatprep.subr.mxu0 0.0
    %v4337 = vand.u32 %v4189, 4294901760
    %v4338 = vsub.f32 %v4189, %v4337
    %v4339 = vand.u32 %v4338, 4294901760
    %v4340 = vsub.f32 %v4338, %v4339
    %v4341 = vand.u32 %v4340, 4294901760
    %4342 = vmatpush1.msra.mxu0 %v4341
    %4343 = vmatprep.subr.mxu0 0.0
    %v4344 = vand.u32 %v4188, 4294901760
    %v4345 = vsub.f32 %v4188, %v4344
    %v4346 = vand.u32 %v4345, 4294901760
    %v4347 = vsub.f32 %v4345, %v4346
    %v4348 = vand.u32 %v4347, 4294901760
    %4349 = vmatpush1.msra.mxu0 %v4348
    %4350 = vmatprep.subr.mxu0 0.0
    %v4351 = vand.u32 %v4187, 4294901760
    %v4352 = vsub.f32 %v4187, %v4351
    %v4353 = vand.u32 %v4352, 4294901760
    %v4354 = vsub.f32 %v4352, %v4353
    %v4355 = vand.u32 %v4354, 4294901760
    %4356 = vmatpush1.msra.mxu0 %v4355
    %4357 = vmatprep.subr.mxu0 0.0
    %v4358 = vand.u32 %v4186, 4294901760
    %v4359 = vsub.f32 %v4186, %v4358
    %v4360 = vand.u32 %v4359, 4294901760
    %v4361 = vsub.f32 %v4359, %v4360
    %v4362 = vand.u32 %v4361, 4294901760
    %4363 = vmatpush1.msra.mxu0 %v4362
    %4364 = vmatprep.subr.mxu0 0.0
    %v4365 = vand.u32 %v4185, 4294901760
    %v4366 = vsub.f32 %v4185, %v4365
    %v4367 = vand.u32 %v4366, 4294901760
    %v4368 = vsub.f32 %v4366, %v4367
    %v4369 = vand.u32 %v4368, 4294901760
    %4370 = vmatpush1.msra.mxu0 %v4369
    %4371 = vmatprep.subr.mxu0 0.0
    %v4372 = vand.u32 %v4184, 4294901760
    %v4373 = vsub.f32 %v4184, %v4372
    %v4374 = vand.u32 %v4373, 4294901760
    %v4375 = vsub.f32 %v4373, %v4374
    %v4376 = vand.u32 %v4375, 4294901760
    %4377 = vmatpush1.msra.mxu0 %v4376
    %4378 = vmatprep.subr.mxu0 0.0
    %v4379 = vand.u32 %v4183, 4294901760
    %v4380 = vsub.f32 %v4183, %v4379
    %v4381 = vand.u32 %v4380, 4294901760
    %v4382 = vsub.f32 %v4380, %v4381
    %v4383 = vand.u32 %v4382, 4294901760
    %4384 = vmatpush1.msra.mxu0 %v4383
    %4385 = vmatprep.subr.mxu0 0.0
    %v4386 = vand.u32 %v4182, 4294901760
    %v4387 = vsub.f32 %v4182, %v4386
    %v4388 = vand.u32 %v4387, 4294901760
    %v4389 = vsub.f32 %v4387, %v4388
    %v4390 = vand.u32 %v4389, 4294901760
    %4391 = vmatpush1.msra.mxu0 %v4390
    %4392 = vmatprep.subr.mxu0 0.0
    %v4393 = vand.u32 %v4181, 4294901760
    %v4394 = vsub.f32 %v4181, %v4393
    %v4395 = vand.u32 %v4394, 4294901760
    %v4396 = vsub.f32 %v4394, %v4395
    %v4397 = vand.u32 %v4396, 4294901760
    %4398 = vmatpush1.msra.mxu0 %v4397
    %4399 = vmatprep.subr.mxu0 0.0
    %v4400 = vand.u32 %v4180, 4294901760
    %v4401 = vsub.f32 %v4180, %v4400
    %v4402 = vand.u32 %v4401, 4294901760
    %v4403 = vsub.f32 %v4401, %v4402
    %v4404 = vand.u32 %v4403, 4294901760
    %4405 = vmatpush1.msra.mxu0 %v4404
    %4406 = vmatprep.subr.mxu0 0.0
    %4407 = vmatpush2.msra.mxu0 0.0
    %4408 = vmatprep.subr.mxu0 0.0
    %4409 = vmatpush2.msra.mxu0 0.0
    %4410 = vmatprep.subr.mxu0 0.0
    %4411 = vmatpush2.msra.mxu0 0.0
    %4412 = vmatprep.subr.mxu0 0.0
    %4413 = vmatpush2.msra.mxu0 0.0
    %4414 = vmatprep.subr.mxu0 0.0
    %4415 = vmatpush2.msra.mxu0 0.0
    %4416 = vmatprep.subr.mxu0 0.0
    %4417 = vmatpush2.msra.mxu0 0.0
    %4418 = vmatprep.subr.mxu0 0.0
    %4419 = vmatpush2.msra.mxu0 0.0
    %4420 = vmatprep.subr.mxu0 0.0
    %4421 = vmatpush2.msra.mxu0 0.0
    %4422 = vmatprep.subr.mxu0 0.0
    %4423 = vmatpush2.msra.mxu0 0.0
    %4424 = vmatprep.subr.mxu0 0.0
    %4425 = vmatpush2.msra.mxu0 0.0
    %4426 = vmatprep.subr.mxu0 0.0
    %4427 = vmatpush2.msra.mxu0 0.0
    %4428 = vmatprep.subr.mxu0 0.0
    %4429 = vmatpush2.msra.mxu0 0.0
    %4430 = vmatprep.subr.mxu0 0.0
    %4431 = vmatpush2.msra.mxu0 0.0
    %4432 = vmatprep.subr.mxu0 0.0
    %4433 = vmatpush2.msra.mxu0 0.0
    %4434 = vmatprep.subr.mxu0 0.0
    %4435 = vmatpush2.msra.mxu0 0.0
    %4436 = vmatprep.subr.mxu0 0.0
    %4437 = vmatpush2.msra.mxu0 0.0
    %4438 = vmatprep.mubr.f32.mxu0 0.0
    %v4439 = vand.u32 %v4179, 4294901760
    %4440 = vmatmul.mubr.f32.gmra.mxu0 %v4439
    %v4441 = vpop.f32.mrf.mxu0
    %v4442 = vadd.f32 %v4291, %v4441
    %v4443 = vpop.f32.mrf.mxu0
    %4444 = vdwg.mxu0
    %4445 = vmatprep.subr.mxu0 0.0
    %v4446 = vand.u32 %v4195, 4294901760
    %v4447 = vsub.f32 %v4195, %v4446
    %4448 = vmatpush1.msra.mxu0 %v4447
    %4449 = vmatprep.subr.mxu0 0.0
    %v4450 = vand.u32 %v4194, 4294901760
    %v4451 = vsub.f32 %v4194, %v4450
    %4452 = vmatpush1.msra.mxu0 %v4451
    %4453 = vmatprep.subr.mxu0 0.0
    %v4454 = vand.u32 %v4193, 4294901760
    %v4455 = vsub.f32 %v4193, %v4454
    %4456 = vmatpush1.msra.mxu0 %v4455
    %4457 = vmatprep.subr.mxu0 0.0
    %v4458 = vand.u32 %v4192, 4294901760
    %v4459 = vsub.f32 %v4192, %v4458
    %4460 = vmatpush1.msra.mxu0 %v4459
    %4461 = vmatprep.subr.mxu0 0.0
    %v4462 = vand.u32 %v4191, 4294901760
    %v4463 = vsub.f32 %v4191, %v4462
    %4464 = vmatpush1.msra.mxu0 %v4463
    %4465 = vmatprep.subr.mxu0 0.0
    %v4466 = vand.u32 %v4190, 4294901760
    %v4467 = vsub.f32 %v4190, %v4466
    %4468 = vmatpush1.msra.mxu0 %v4467
    %4469 = vmatprep.subr.mxu0 0.0
    %v4470 = vand.u32 %v4189, 4294901760
    %v4471 = vsub.f32 %v4189, %v4470
    %4472 = vmatpush1.msra.mxu0 %v4471
    %4473 = vmatprep.subr.mxu0 0.0
    %v4474 = vand.u32 %v4188, 4294901760
    %v4475 = vsub.f32 %v4188, %v4474
    %4476 = vmatpush1.msra.mxu0 %v4475
    %4477 = vmatprep.subr.mxu0 0.0
    %v4478 = vand.u32 %v4187, 4294901760
    %v4479 = vsub.f32 %v4187, %v4478
    %4480 = vmatpush1.msra.mxu0 %v4479
    %4481 = vmatprep.subr.mxu0 0.0
    %v4482 = vand.u32 %v4186, 4294901760
    %v4483 = vsub.f32 %v4186, %v4482
    %4484 = vmatpush1.msra.mxu0 %v4483
    %4485 = vmatprep.subr.mxu0 0.0
    %v4486 = vand.u32 %v4185, 4294901760
    %v4487 = vsub.f32 %v4185, %v4486
    %4488 = vmatpush1.msra.mxu0 %v4487
    %4489 = vmatprep.subr.mxu0 0.0
    %v4490 = vand.u32 %v4184, 4294901760
    %v4491 = vsub.f32 %v4184, %v4490
    %4492 = vmatpush1.msra.mxu0 %v4491
    %4493 = vmatprep.subr.mxu0 0.0
    %v4494 = vand.u32 %v4183, 4294901760
    %v4495 = vsub.f32 %v4183, %v4494
    %4496 = vmatpush1.msra.mxu0 %v4495
    %4497 = vmatprep.subr.mxu0 0.0
    %v4498 = vand.u32 %v4182, 4294901760
    %v4499 = vsub.f32 %v4182, %v4498
    %4500 = vmatpush1.msra.mxu0 %v4499
    %4501 = vmatprep.subr.mxu0 0.0
    %v4502 = vand.u32 %v4181, 4294901760
    %v4503 = vsub.f32 %v4181, %v4502
    %4504 = vmatpush1.msra.mxu0 %v4503
    %4505 = vmatprep.subr.mxu0 0.0
    %v4506 = vand.u32 %v4180, 4294901760
    %v4507 = vsub.f32 %v4180, %v4506
    %4508 = vmatpush1.msra.mxu0 %v4507
    %4509 = vmatprep.subr.mxu0 0.0
    %4510 = vmatpush2.msra.mxu0 0.0
    %4511 = vmatprep.subr.mxu0 0.0
    %4512 = vmatpush2.msra.mxu0 0.0
    %4513 = vmatprep.subr.mxu0 0.0
    %4514 = vmatpush2.msra.mxu0 0.0
    %4515 = vmatprep.subr.mxu0 0.0
    %4516 = vmatpush2.msra.mxu0 0.0
    %4517 = vmatprep.subr.mxu0 0.0
    %4518 = vmatpush2.msra.mxu0 0.0
    %4519 = vmatprep.subr.mxu0 0.0
    %4520 = vmatpush2.msra.mxu0 0.0
    %4521 = vmatprep.subr.mxu0 0.0
    %4522 = vmatpush2.msra.mxu0 0.0
    %4523 = vmatprep.subr.mxu0 0.0
    %4524 = vmatpush2.msra.mxu0 0.0
    %4525 = vmatprep.subr.mxu0 0.0
    %4526 = vmatpush2.msra.mxu0 0.0
    %4527 = vmatprep.subr.mxu0 0.0
    %4528 = vmatpush2.msra.mxu0 0.0
    %4529 = vmatprep.subr.mxu0 0.0
    %4530 = vmatpush2.msra.mxu0 0.0
    %4531 = vmatprep.subr.mxu0 0.0
    %4532 = vmatpush2.msra.mxu0 0.0
    %4533 = vmatprep.subr.mxu0 0.0
    %4534 = vmatpush2.msra.mxu0 0.0
    %4535 = vmatprep.subr.mxu0 0.0
    %4536 = vmatpush2.msra.mxu0 0.0
    %4537 = vmatprep.subr.mxu0 0.0
    %4538 = vmatpush2.msra.mxu0 0.0
    %4539 = vmatprep.subr.mxu0 0.0
    %4540 = vmatpush2.msra.mxu0 0.0
    %4541 = vmatprep.mubr.f32.mxu0 0.0
    %v4542 = vand.u32 %v4179, 4294901760
    %v4543 = vsub.f32 %v4179, %v4542
    %4544 = vmatmul.mubr.f32.gmra.mxu0 %v4543
    %v4545 = vpop.f32.mrf.mxu0
    %v4546 = vadd.f32 %v4442, %v4545
    %v4547 = vpop.f32.mrf.mxu0
    %4548 = vdwg.mxu0
    %4549 = vmatprep.subr.mxu0 0.0
    %v4550 = vand.u32 %v4195, 4294901760
    %4551 = vmatpush1.msra.mxu0 %v4550
    %4552 = vmatprep.subr.mxu0 0.0
    %v4553 = vand.u32 %v4194, 4294901760
    %4554 = vmatpush1.msra.mxu0 %v4553
    %4555 = vmatprep.subr.mxu0 0.0
    %v4556 = vand.u32 %v4193, 4294901760
    %4557 = vmatpush1.msra.mxu0 %v4556
    %4558 = vmatprep.subr.mxu0 0.0
    %v4559 = vand.u32 %v4192, 4294901760
    %4560 = vmatpush1.msra.mxu0 %v4559
    %4561 = vmatprep.subr.mxu0 0.0
    %v4562 = vand.u32 %v4191, 4294901760
    %4563 = vmatpush1.msra.mxu0 %v4562
    %4564 = vmatprep.subr.mxu0 0.0
    %v4565 = vand.u32 %v4190, 4294901760
    %4566 = vmatpush1.msra.mxu0 %v4565
    %4567 = vmatprep.subr.mxu0 0.0
    %v4568 = vand.u32 %v4189, 4294901760
    %4569 = vmatpush1.msra.mxu0 %v4568
    %4570 = vmatprep.subr.mxu0 0.0
    %v4571 = vand.u32 %v4188, 4294901760
    %4572 = vmatpush1.msra.mxu0 %v4571
    %4573 = vmatprep.subr.mxu0 0.0
    %v4574 = vand.u32 %v4187, 4294901760
    %4575 = vmatpush1.msra.mxu0 %v4574
    %4576 = vmatprep.subr.mxu0 0.0
    %v4577 = vand.u32 %v4186, 4294901760
    %4578 = vmatpush1.msra.mxu0 %v4577
    %4579 = vmatprep.subr.mxu0 0.0
    %v4580 = vand.u32 %v4185, 4294901760
    %4581 = vmatpush1.msra.mxu0 %v4580
    %4582 = vmatprep.subr.mxu0 0.0
    %v4583 = vand.u32 %v4184, 4294901760
    %4584 = vmatpush1.msra.mxu0 %v4583
    %4585 = vmatprep.subr.mxu0 0.0
    %v4586 = vand.u32 %v4183, 4294901760
    %4587 = vmatpush1.msra.mxu0 %v4586
    %4588 = vmatprep.subr.mxu0 0.0
    %v4589 = vand.u32 %v4182, 4294901760
    %4590 = vmatpush1.msra.mxu0 %v4589
    %4591 = vmatprep.subr.mxu0 0.0
    %v4592 = vand.u32 %v4181, 4294901760
    %4593 = vmatpush1.msra.mxu0 %v4592
    %4594 = vmatprep.subr.mxu0 0.0
    %v4595 = vand.u32 %v4180, 4294901760
    %4596 = vmatpush1.msra.mxu0 %v4595
    %4597 = vmatprep.subr.mxu0 0.0
    %4598 = vmatpush2.msra.mxu0 0.0
    %4599 = vmatprep.subr.mxu0 0.0
    %4600 = vmatpush2.msra.mxu0 0.0
    %4601 = vmatprep.subr.mxu0 0.0
    %4602 = vmatpush2.msra.mxu0 0.0
    %4603 = vmatprep.subr.mxu0 0.0
    %4604 = vmatpush2.msra.mxu0 0.0
    %4605 = vmatprep.subr.mxu0 0.0
    %4606 = vmatpush2.msra.mxu0 0.0
    %4607 = vmatprep.subr.mxu0 0.0
    %4608 = vmatpush2.msra.mxu0 0.0
    %4609 = vmatprep.subr.mxu0 0.0
    %4610 = vmatpush2.msra.mxu0 0.0
    %4611 = vmatprep.subr.mxu0 0.0
    %4612 = vmatpush2.msra.mxu0 0.0
    %4613 = vmatprep.subr.mxu0 0.0
    %4614 = vmatpush2.msra.mxu0 0.0
    %4615 = vmatprep.subr.mxu0 0.0
    %4616 = vmatpush2.msra.mxu0 0.0
    %4617 = vmatprep.subr.mxu0 0.0
    %4618 = vmatpush2.msra.mxu0 0.0
    %4619 = vmatprep.subr.mxu0 0.0
    %4620 = vmatpush2.msra.mxu0 0.0
    %4621 = vmatprep.subr.mxu0 0.0
    %4622 = vmatpush2.msra.mxu0 0.0
    %4623 = vmatprep.subr.mxu0 0.0
    %4624 = vmatpush2.msra.mxu0 0.0
    %4625 = vmatprep.subr.mxu0 0.0
    %4626 = vmatpush2.msra.mxu0 0.0
    %4627 = vmatprep.subr.mxu0 0.0
    %4628 = vmatpush2.msra.mxu0 0.0
    %4629 = vmatprep.mubr.f32.mxu0 0.0
    %v4630 = vand.u32 %v4179, 4294901760
    %v4631 = vsub.f32 %v4179, %v4630
    %v4632 = vand.u32 %v4631, 4294901760
    %4633 = vmatmul.mubr.f32.gmra.mxu0 %v4632
    %v4634 = vpop.f32.mrf.mxu0
    %v4635 = vadd.f32 %v4546, %v4634
    %v4636 = vpop.f32.mrf.mxu0
    %4637 = vdwg.mxu0
    %4638 = vmatprep.subr.mxu0 0.0
    %v4639 = vand.u32 %v4195, 4294901760
    %v4640 = vsub.f32 %v4195, %v4639
    %v4641 = vand.u32 %v4640, 4294901760
    %4642 = vmatpush1.msra.mxu0 %v4641
    %4643 = vmatprep.subr.mxu0 0.0
    %v4644 = vand.u32 %v4194, 4294901760
    %v4645 = vsub.f32 %v4194, %v4644
    %v4646 = vand.u32 %v4645, 4294901760
    %4647 = vmatpush1.msra.mxu0 %v4646
    %4648 = vmatprep.subr.mxu0 0.0
    %v4649 = vand.u32 %v4193, 4294901760
    %v4650 = vsub.f32 %v4193, %v4649
    %v4651 = vand.u32 %v4650, 4294901760
    %4652 = vmatpush1.msra.mxu0 %v4651
    %4653 = vmatprep.subr.mxu0 0.0
    %v4654 = vand.u32 %v4192, 4294901760
    %v4655 = vsub.f32 %v4192, %v4654
    %v4656 = vand.u32 %v4655, 4294901760
    %4657 = vmatpush1.msra.mxu0 %v4656
    %4658 = vmatprep.subr.mxu0 0.0
    %v4659 = vand.u32 %v4191, 4294901760
    %v4660 = vsub.f32 %v4191, %v4659
    %v4661 = vand.u32 %v4660, 4294901760
    %4662 = vmatpush1.msra.mxu0 %v4661
    %4663 = vmatprep.subr.mxu0 0.0
    %v4664 = vand.u32 %v4190, 4294901760
    %v4665 = vsub.f32 %v4190, %v4664
    %v4666 = vand.u32 %v4665, 4294901760
    %4667 = vmatpush1.msra.mxu0 %v4666
    %4668 = vmatprep.subr.mxu0 0.0
    %v4669 = vand.u32 %v4189, 4294901760
    %v4670 = vsub.f32 %v4189, %v4669
    %v4671 = vand.u32 %v4670, 4294901760
    %4672 = vmatpush1.msra.mxu0 %v4671
    %4673 = vmatprep.subr.mxu0 0.0
    %v4674 = vand.u32 %v4188, 4294901760
    %v4675 = vsub.f32 %v4188, %v4674
    %v4676 = vand.u32 %v4675, 4294901760
    %4677 = vmatpush1.msra.mxu0 %v4676
    %4678 = vmatprep.subr.mxu0 0.0
    %v4679 = vand.u32 %v4187, 4294901760
    %v4680 = vsub.f32 %v4187, %v4679
    %v4681 = vand.u32 %v4680, 4294901760
    %4682 = vmatpush1.msra.mxu0 %v4681
    %4683 = vmatprep.subr.mxu0 0.0
    %v4684 = vand.u32 %v4186, 4294901760
    %v4685 = vsub.f32 %v4186, %v4684
    %v4686 = vand.u32 %v4685, 4294901760
    %4687 = vmatpush1.msra.mxu0 %v4686
    %4688 = vmatprep.subr.mxu0 0.0
    %v4689 = vand.u32 %v4185, 4294901760
    %v4690 = vsub.f32 %v4185, %v4689
    %v4691 = vand.u32 %v4690, 4294901760
    %4692 = vmatpush1.msra.mxu0 %v4691
    %4693 = vmatprep.subr.mxu0 0.0
    %v4694 = vand.u32 %v4184, 4294901760
    %v4695 = vsub.f32 %v4184, %v4694
    %v4696 = vand.u32 %v4695, 4294901760
    %4697 = vmatpush1.msra.mxu0 %v4696
    %4698 = vmatprep.subr.mxu0 0.0
    %v4699 = vand.u32 %v4183, 4294901760
    %v4700 = vsub.f32 %v4183, %v4699
    %v4701 = vand.u32 %v4700, 4294901760
    %4702 = vmatpush1.msra.mxu0 %v4701
    %4703 = vmatprep.subr.mxu0 0.0
    %v4704 = vand.u32 %v4182, 4294901760
    %v4705 = vsub.f32 %v4182, %v4704
    %v4706 = vand.u32 %v4705, 4294901760
    %4707 = vmatpush1.msra.mxu0 %v4706
    %4708 = vmatprep.subr.mxu0 0.0
    %v4709 = vand.u32 %v4181, 4294901760
    %v4710 = vsub.f32 %v4181, %v4709
    %v4711 = vand.u32 %v4710, 4294901760
    %4712 = vmatpush1.msra.mxu0 %v4711
    %4713 = vmatprep.subr.mxu0 0.0
    %v4714 = vand.u32 %v4180, 4294901760
    %v4715 = vsub.f32 %v4180, %v4714
    %v4716 = vand.u32 %v4715, 4294901760
    %4717 = vmatpush1.msra.mxu0 %v4716
    %4718 = vmatprep.subr.mxu0 0.0
    %4719 = vmatpush2.msra.mxu0 0.0
    %4720 = vmatprep.subr.mxu0 0.0
    %4721 = vmatpush2.msra.mxu0 0.0
    %4722 = vmatprep.subr.mxu0 0.0
    %4723 = vmatpush2.msra.mxu0 0.0
    %4724 = vmatprep.subr.mxu0 0.0
    %4725 = vmatpush2.msra.mxu0 0.0
    %4726 = vmatprep.subr.mxu0 0.0
    %4727 = vmatpush2.msra.mxu0 0.0
    %4728 = vmatprep.subr.mxu0 0.0
    %4729 = vmatpush2.msra.mxu0 0.0
    %4730 = vmatprep.subr.mxu0 0.0
    %4731 = vmatpush2.msra.mxu0 0.0
    %4732 = vmatprep.subr.mxu0 0.0
    %4733 = vmatpush2.msra.mxu0 0.0
    %4734 = vmatprep.subr.mxu0 0.0
    %4735 = vmatpush2.msra.mxu0 0.0
    %4736 = vmatprep.subr.mxu0 0.0
    %4737 = vmatpush2.msra.mxu0 0.0
    %4738 = vmatprep.subr.mxu0 0.0
    %4739 = vmatpush2.msra.mxu0 0.0
    %4740 = vmatprep.subr.mxu0 0.0
    %4741 = vmatpush2.msra.mxu0 0.0
    %4742 = vmatprep.subr.mxu0 0.0
    %4743 = vmatpush2.msra.mxu0 0.0
    %4744 = vmatprep.subr.mxu0 0.0
    %4745 = vmatpush2.msra.mxu0 0.0
    %4746 = vmatprep.subr.mxu0 0.0
    %4747 = vmatpush2.msra.mxu0 0.0
    %4748 = vmatprep.subr.mxu0 0.0
    %4749 = vmatpush2.msra.mxu0 0.0
    %4750 = vmatprep.mubr.f32.mxu0 0.0
    %v4751 = vand.u32 %v4179, 4294901760
    %4752 = vmatmul.mubr.f32.gmra.mxu0 %v4751
    %v4753 = vpop.f32.mrf.mxu0
    %v4754 = vadd.f32 %v4635, %v4753
    %v4755 = vpop.f32.mrf.mxu0
    %4756 = vdwg.mxu0
    %4757 = vmatprep.subr.mxu0 0.0
    %v4758 = vand.u32 %v4195, 4294901760
    %4759 = vmatpush1.msra.mxu0 %v4758
    %4760 = vmatprep.subr.mxu0 0.0
    %v4761 = vand.u32 %v4194, 4294901760
    %4762 = vmatpush1.msra.mxu0 %v4761
    %4763 = vmatprep.subr.mxu0 0.0
    %v4764 = vand.u32 %v4193, 4294901760
    %4765 = vmatpush1.msra.mxu0 %v4764
    %4766 = vmatprep.subr.mxu0 0.0
    %v4767 = vand.u32 %v4192, 4294901760
    %4768 = vmatpush1.msra.mxu0 %v4767
    %4769 = vmatprep.subr.mxu0 0.0
    %v4770 = vand.u32 %v4191, 4294901760
    %4771 = vmatpush1.msra.mxu0 %v4770
    %4772 = vmatprep.subr.mxu0 0.0
    %v4773 = vand.u32 %v4190, 4294901760
    %4774 = vmatpush1.msra.mxu0 %v4773
    %4775 = vmatprep.subr.mxu0 0.0
    %v4776 = vand.u32 %v4189, 4294901760
    %4777 = vmatpush1.msra.mxu0 %v4776
    %4778 = vmatprep.subr.mxu0 0.0
    %v4779 = vand.u32 %v4188, 4294901760
    %4780 = vmatpush1.msra.mxu0 %v4779
    %4781 = vmatprep.subr.mxu0 0.0
    %v4782 = vand.u32 %v4187, 4294901760
    %4783 = vmatpush1.msra.mxu0 %v4782
    %4784 = vmatprep.subr.mxu0 0.0
    %v4785 = vand.u32 %v4186, 4294901760
    %4786 = vmatpush1.msra.mxu0 %v4785
    %4787 = vmatprep.subr.mxu0 0.0
    %v4788 = vand.u32 %v4185, 4294901760
    %4789 = vmatpush1.msra.mxu0 %v4788
    %4790 = vmatprep.subr.mxu0 0.0
    %v4791 = vand.u32 %v4184, 4294901760
    %4792 = vmatpush1.msra.mxu0 %v4791
    %4793 = vmatprep.subr.mxu0 0.0
    %v4794 = vand.u32 %v4183, 4294901760
    %4795 = vmatpush1.msra.mxu0 %v4794
    %4796 = vmatprep.subr.mxu0 0.0
    %v4797 = vand.u32 %v4182, 4294901760
    %4798 = vmatpush1.msra.mxu0 %v4797
    %4799 = vmatprep.subr.mxu0 0.0
    %v4800 = vand.u32 %v4181, 4294901760
    %4801 = vmatpush1.msra.mxu0 %v4800
    %4802 = vmatprep.subr.mxu0 0.0
    %v4803 = vand.u32 %v4180, 4294901760
    %4804 = vmatpush1.msra.mxu0 %v4803
    %4805 = vmatprep.subr.mxu0 0.0
    %4806 = vmatpush2.msra.mxu0 0.0
    %4807 = vmatprep.subr.mxu0 0.0
    %4808 = vmatpush2.msra.mxu0 0.0
    %4809 = vmatprep.subr.mxu0 0.0
    %4810 = vmatpush2.msra.mxu0 0.0
    %4811 = vmatprep.subr.mxu0 0.0
    %4812 = vmatpush2.msra.mxu0 0.0
    %4813 = vmatprep.subr.mxu0 0.0
    %4814 = vmatpush2.msra.mxu0 0.0
    %4815 = vmatprep.subr.mxu0 0.0
    %4816 = vmatpush2.msra.mxu0 0.0
    %4817 = vmatprep.subr.mxu0 0.0
    %4818 = vmatpush2.msra.mxu0 0.0
    %4819 = vmatprep.subr.mxu0 0.0
    %4820 = vmatpush2.msra.mxu0 0.0
    %4821 = vmatprep.subr.mxu0 0.0
    %4822 = vmatpush2.msra.mxu0 0.0
    %4823 = vmatprep.subr.mxu0 0.0
    %4824 = vmatpush2.msra.mxu0 0.0
    %4825 = vmatprep.subr.mxu0 0.0
    %4826 = vmatpush2.msra.mxu0 0.0
    %4827 = vmatprep.subr.mxu0 0.0
    %4828 = vmatpush2.msra.mxu0 0.0
    %4829 = vmatprep.subr.mxu0 0.0
    %4830 = vmatpush2.msra.mxu0 0.0
    %4831 = vmatprep.subr.mxu0 0.0
    %4832 = vmatpush2.msra.mxu0 0.0
    %4833 = vmatprep.subr.mxu0 0.0
    %4834 = vmatpush2.msra.mxu0 0.0
    %4835 = vmatprep.subr.mxu0 0.0
    %4836 = vmatpush2.msra.mxu0 0.0
    %4837 = vmatprep.mubr.f32.mxu0 0.0
    %v4838 = vand.u32 %v4179, 4294901760
    %4839 = vmatmul.mubr.f32.gmra.mxu0 %v4838
    %v4840 = vpop.f32.mrf.mxu0
    %v4841 = vadd.f32 %v4754, %v4840
    %v4842 = vpop.f32.mrf.mxu0
    %4843 = vdwg.mxu0
    %v4844 = vrot.slane %v4841, 4
    %v4845 = vadd.f32 %v4841, %v4844
    %v4846 = vrot.slane %v4845, 2
    %v4847 = vadd.f32 %v4845, %v4846
    %v4848 = vrot.slane %v4847, 1
    %v4849 = vadd.f32 %v4847, %v4848
    %v4850 = vmul.f32 %v4849, %v3458
    %v4851 = vsub.f32 %v4841, %v4850
    %v4852 = vmul.f32 %v4851, %v4851
    %v4853 = vrot.slane %v4852, 4
    %v4854 = vadd.f32 %v4852, %v4853
    %v4855 = vrot.slane %v4854, 2
    %v4856 = vadd.f32 %v4854, %v4855
    %v4857 = vrot.slane %v4856, 1
    %v4858 = vadd.f32 %v4856, %v4857
    %v4859 = vmul.f32 %v4858, %v3458
    %v4860 = vadd.f32 %v4859, 1e-05
    %v4861 = vrsqrt.pop %v4860
    %v4862 = vmul.f32 %v4851, %v4861
    %4863 = vst [vmem:[#allocation2] sm:$0xff] %v4862
    %v4864 = vld [vmem:[%s11] sm:$0xff]
    %v4865 = vld [vmem:[%s11 + $0x8] sm:$0xff]
    %v4866 = vld [vmem:[%s11 + $0x10] sm:$0xff]
    %v4867 = vld [vmem:[%s11 + $0x18] sm:$0xff]
    %v4868 = vld [vmem:[%s11 + $0x20] sm:$0xff]
    %v4869 = vld [vmem:[%s11 + $0x28] sm:$0xff]
    %v4870 = vld [vmem:[%s11 + $0x30] sm:$0xff]
    %v4871 = vld [vmem:[%s11 + $0x38] sm:$0xff]
    %v4872 = vld [vmem:[%s11 + $0x40] sm:$0xff]
    %v4873 = vld [vmem:[%s11 + $0x48] sm:$0xff]
    %v4874 = vld [vmem:[%s11 + $0x50] sm:$0xff]
    %v4875 = vld [vmem:[%s11 + $0x58] sm:$0xff]
    %v4876 = vld [vmem:[%s11 + $0x60] sm:$0xff]
    %v4877 = vld [vmem:[%s11 + $0x68] sm:$0xff]
    %v4878 = vld [vmem:[%s11 + $0x70] sm:$0xff]
    %v4879 = vld [vmem:[%s11 + $0x78] sm:$0xff]
    %4880 = vmatprep.subr.mxu0 0.0
    %v4881 = vand.u32 %v4879, 4294901760
    %4882 = vmatpush1.msra.mxu0 %v4881
    %4883 = vmatprep.subr.mxu0 0.0
    %v4884 = vand.u32 %v4878, 4294901760
    %4885 = vmatpush1.msra.mxu0 %v4884
    %4886 = vmatprep.subr.mxu0 0.0
    %v4887 = vand.u32 %v4877, 4294901760
    %4888 = vmatpush1.msra.mxu0 %v4887
    %4889 = vmatprep.subr.mxu0 0.0
    %v4890 = vand.u32 %v4876, 4294901760
    %4891 = vmatpush1.msra.mxu0 %v4890
    %4892 = vmatprep.subr.mxu0 0.0
    %v4893 = vand.u32 %v4875, 4294901760
    %4894 = vmatpush1.msra.mxu0 %v4893
    %4895 = vmatprep.subr.mxu0 0.0
    %v4896 = vand.u32 %v4874, 4294901760
    %4897 = vmatpush1.msra.mxu0 %v4896
    %4898 = vmatprep.subr.mxu0 0.0
    %v4899 = vand.u32 %v4873, 4294901760
    %4900 = vmatpush1.msra.mxu0 %v4899
    %4901 = vmatprep.subr.mxu0 0.0
    %v4902 = vand.u32 %v4872, 4294901760
    %4903 = vmatpush1.msra.mxu0 %v4902
    %4904 = vmatprep.subr.mxu0 0.0
    %v4905 = vand.u32 %v4871, 4294901760
    %4906 = vmatpush1.msra.mxu0 %v4905
    %4907 = vmatprep.subr.mxu0 0.0
    %v4908 = vand.u32 %v4870, 4294901760
    %4909 = vmatpush1.msra.mxu0 %v4908
    %4910 = vmatprep.subr.mxu0 0.0
    %v4911 = vand.u32 %v4869, 4294901760
    %4912 = vmatpush1.msra.mxu0 %v4911
    %4913 = vmatprep.subr.mxu0 0.0
    %v4914 = vand.u32 %v4868, 4294901760
    %4915 = vmatpush1.msra.mxu0 %v4914
    %4916 = vmatprep.subr.mxu0 0.0
    %v4917 = vand.u32 %v4867, 4294901760
    %4918 = vmatpush1.msra.mxu0 %v4917
    %4919 = vmatprep.subr.mxu0 0.0
    %v4920 = vand.u32 %v4866, 4294901760
    %4921 = vmatpush1.msra.mxu0 %v4920
    %4922 = vmatprep.subr.mxu0 0.0
    %v4923 = vand.u32 %v4865, 4294901760
    %4924 = vmatpush1.msra.mxu0 %v4923
    %4925 = vmatprep.subr.mxu0 0.0
    %v4926 = vand.u32 %v4864, 4294901760
    %4927 = vmatpush1.msra.mxu0 %v4926
    %4928 = vmatprep.subr.mxu0 0.0
    %4929 = vmatpush2.msra.mxu0 0.0
    %4930 = vmatprep.subr.mxu0 0.0
    %4931 = vmatpush2.msra.mxu0 0.0
    %4932 = vmatprep.subr.mxu0 0.0
    %4933 = vmatpush2.msra.mxu0 0.0
    %4934 = vmatprep.subr.mxu0 0.0
    %4935 = vmatpush2.msra.mxu0 0.0
    %4936 = vmatprep.subr.mxu0 0.0
    %4937 = vmatpush2.msra.mxu0 0.0
    %4938 = vmatprep.subr.mxu0 0.0
    %4939 = vmatpush2.msra.mxu0 0.0
    %4940 = vmatprep.subr.mxu0 0.0
    %4941 = vmatpush2.msra.mxu0 0.0
    %4942 = vmatprep.subr.mxu0 0.0
    %4943 = vmatpush2.msra.mxu0 0.0
    %4944 = vmatprep.subr.mxu0 0.0
    %4945 = vmatpush2.msra.mxu0 0.0
    %4946 = vmatprep.subr.mxu0 0.0
    %4947 = vmatpush2.msra.mxu0 0.0
    %4948 = vmatprep.subr.mxu0 0.0
    %4949 = vmatpush2.msra.mxu0 0.0
    %4950 = vmatprep.subr.mxu0 0.0
    %4951 = vmatpush2.msra.mxu0 0.0
    %4952 = vmatprep.subr.mxu0 0.0
    %4953 = vmatpush2.msra.mxu0 0.0
    %4954 = vmatprep.subr.mxu0 0.0
    %4955 = vmatpush2.msra.mxu0 0.0
    %4956 = vmatprep.subr.mxu0 0.0
    %4957 = vmatpush2.msra.mxu0 0.0
    %4958 = vmatprep.subr.mxu0 0.0
    %4959 = vmatpush2.msra.mxu0 0.0
    %4960 = vmatprep.mubr.f32.mxu0 0.0
    %v4961 = vand.u32 %v4862, 4294901760
    %v4962 = vsub.f32 %v4862, %v4961
    %v4963 = vand.u32 %v4962, 4294901760
    %v4964 = vsub.f32 %v4962, %v4963
    %v4965 = vand.u32 %v4964, 4294901760
    %4966 = vmatmul.mubr.f32.gmra.mxu0 %v4965
    %v4967 = vpop.f32.mrf.mxu0
    %v4968 = vadd.f32 0.0, %v4967
    %v4969 = vpop.f32.mrf.mxu0
    %4970 = vdwg.mxu0
    %4971 = vmatprep.subr.mxu0 0.0
    %v4972 = vand.u32 %v4879, 4294901760
    %v4973 = vsub.f32 %v4879, %v4972
    %v4974 = vand.u32 %v4973, 4294901760
    %v4975 = vsub.f32 %v4973, %v4974
    %v4976 = vand.u32 %v4975, 4294901760
    %4977 = vmatpush1.msra.mxu0 %v4976
    %4978 = vmatprep.subr.mxu0 0.0
    %v4979 = vand.u32 %v4878, 4294901760
    %v4980 = vsub.f32 %v4878, %v4979
    %v4981 = vand.u32 %v4980, 4294901760
    %v4982 = vsub.f32 %v4980, %v4981
    %v4983 = vand.u32 %v4982, 4294901760
    %4984 = vmatpush1.msra.mxu0 %v4983
    %4985 = vmatprep.subr.mxu0 0.0
    %v4986 = vand.u32 %v4877, 4294901760
    %v4987 = vsub.f32 %v4877, %v4986
    %v4988 = vand.u32 %v4987, 4294901760
    %v4989 = vsub.f32 %v4987, %v4988
    %v4990 = vand.u32 %v4989, 4294901760
    %4991 = vmatpush1.msra.mxu0 %v4990
    %4992 = vmatprep.subr.mxu0 0.0
    %v4993 = vand.u32 %v4876, 4294901760
    %v4994 = vsub.f32 %v4876, %v4993
    %v4995 = vand.u32 %v4994, 4294901760
    %v4996 = vsub.f32 %v4994, %v4995
    %v4997 = vand.u32 %v4996, 4294901760
    %4998 = vmatpush1.msra.mxu0 %v4997
    %4999 = vmatprep.subr.mxu0 0.0
    %v5000 = vand.u32 %v4875, 4294901760
    %v5001 = vsub.f32 %v4875, %v5000
    %v5002 = vand.u32 %v5001, 4294901760
    %v5003 = vsub.f32 %v5001, %v5002
    %v5004 = vand.u32 %v5003, 4294901760
    %5005 = vmatpush1.msra.mxu0 %v5004
    %5006 = vmatprep.subr.mxu0 0.0
    %v5007 = vand.u32 %v4874, 4294901760
    %v5008 = vsub.f32 %v4874, %v5007
    %v5009 = vand.u32 %v5008, 4294901760
    %v5010 = vsub.f32 %v5008, %v5009
    %v5011 = vand.u32 %v5010, 4294901760
    %5012 = vmatpush1.msra.mxu0 %v5011
    %5013 = vmatprep.subr.mxu0 0.0
    %v5014 = vand.u32 %v4873, 4294901760
    %v5015 = vsub.f32 %v4873, %v5014
    %v5016 = vand.u32 %v5015, 4294901760
    %v5017 = vsub.f32 %v5015, %v5016
    %v5018 = vand.u32 %v5017, 4294901760
    %5019 = vmatpush1.msra.mxu0 %v5018
    %5020 = vmatprep.subr.mxu0 0.0
    %v5021 = vand.u32 %v4872, 4294901760
    %v5022 = vsub.f32 %v4872, %v5021
    %v5023 = vand.u32 %v5022, 4294901760
    %v5024 = vsub.f32 %v5022, %v5023
    %v5025 = vand.u32 %v5024, 4294901760
    %5026 = vmatpush1.msra.mxu0 %v5025
    %5027 = vmatprep.subr.mxu0 0.0
    %v5028 = vand.u32 %v4871, 4294901760
    %v5029 = vsub.f32 %v4871, %v5028
    %v5030 = vand.u32 %v5029, 4294901760
    %v5031 = vsub.f32 %v5029, %v5030
    %v5032 = vand.u32 %v5031, 4294901760
    %5033 = vmatpush1.msra.mxu0 %v5032
    %5034 = vmatprep.subr.mxu0 0.0
    %v5035 = vand.u32 %v4870, 4294901760
    %v5036 = vsub.f32 %v4870, %v5035
    %v5037 = vand.u32 %v5036, 4294901760
    %v5038 = vsub.f32 %v5036, %v5037
    %v5039 = vand.u32 %v5038, 4294901760
    %5040 = vmatpush1.msra.mxu0 %v5039
    %5041 = vmatprep.subr.mxu0 0.0
    %v5042 = vand.u32 %v4869, 4294901760
    %v5043 = vsub.f32 %v4869, %v5042
    %v5044 = vand.u32 %v5043, 4294901760
    %v5045 = vsub.f32 %v5043, %v5044
    %v5046 = vand.u32 %v5045, 4294901760
    %5047 = vmatpush1.msra.mxu0 %v5046
    %5048 = vmatprep.subr.mxu0 0.0
    %v5049 = vand.u32 %v4868, 4294901760
    %v5050 = vsub.f32 %v4868, %v5049
    %v5051 = vand.u32 %v5050, 4294901760
    %v5052 = vsub.f32 %v5050, %v5051
    %v5053 = vand.u32 %v5052, 4294901760
    %5054 = vmatpush1.msra.mxu0 %v5053
    %5055 = vmatprep.subr.mxu0 0.0
    %v5056 = vand.u32 %v4867, 4294901760
    %v5057 = vsub.f32 %v4867, %v5056
    %v5058 = vand.u32 %v5057, 4294901760
    %v5059 = vsub.f32 %v5057, %v5058
    %v5060 = vand.u32 %v5059, 4294901760
    %5061 = vmatpush1.msra.mxu0 %v5060
    %5062 = vmatprep.subr.mxu0 0.0
    %v5063 = vand.u32 %v4866, 4294901760
    %v5064 = vsub.f32 %v4866, %v5063
    %v5065 = vand.u32 %v5064, 4294901760
    %v5066 = vsub.f32 %v5064, %v5065
    %v5067 = vand.u32 %v5066, 4294901760
    %5068 = vmatpush1.msra.mxu0 %v5067
    %5069 = vmatprep.subr.mxu0 0.0
    %v5070 = vand.u32 %v4865, 4294901760
    %v5071 = vsub.f32 %v4865, %v5070
    %v5072 = vand.u32 %v5071, 4294901760
    %v5073 = vsub.f32 %v5071, %v5072
    %v5074 = vand.u32 %v5073, 4294901760
    %5075 = vmatpush1.msra.mxu0 %v5074
    %5076 = vmatprep.subr.mxu0 0.0
    %v5077 = vand.u32 %v4864, 4294901760
    %v5078 = vsub.f32 %v4864, %v5077
    %v5079 = vand.u32 %v5078, 4294901760
    %v5080 = vsub.f32 %v5078, %v5079
    %v5081 = vand.u32 %v5080, 4294901760
    %5082 = vmatpush1.msra.mxu0 %v5081
    %5083 = vmatprep.subr.mxu0 0.0
    %5084 = vmatpush2.msra.mxu0 0.0
    %5085 = vmatprep.subr.mxu0 0.0
    %5086 = vmatpush2.msra.mxu0 0.0
    %5087 = vmatprep.subr.mxu0 0.0
    %5088 = vmatpush2.msra.mxu0 0.0
    %5089 = vmatprep.subr.mxu0 0.0
    %5090 = vmatpush2.msra.mxu0 0.0
    %5091 = vmatprep.subr.mxu0 0.0
    %5092 = vmatpush2.msra.mxu0 0.0
    %5093 = vmatprep.subr.mxu0 0.0
    %5094 = vmatpush2.msra.mxu0 0.0
    %5095 = vmatprep.subr.mxu0 0.0
    %5096 = vmatpush2.msra.mxu0 0.0
    %5097 = vmatprep.subr.mxu0 0.0
    %5098 = vmatpush2.msra.mxu0 0.0
    %5099 = vmatprep.subr.mxu0 0.0
    %5100 = vmatpush2.msra.mxu0 0.0
    %5101 = vmatprep.subr.mxu0 0.0
    %5102 = vmatpush2.msra.mxu0 0.0
    %5103 = vmatprep.subr.mxu0 0.0
    %5104 = vmatpush2.msra.mxu0 0.0
    %5105 = vmatprep.subr.mxu0 0.0
    %5106 = vmatpush2.msra.mxu0 0.0
    %5107 = vmatprep.subr.mxu0 0.0
    %5108 = vmatpush2.msra.mxu0 0.0
    %5109 = vmatprep.subr.mxu0 0.0
    %5110 = vmatpush2.msra.mxu0 0.0
    %5111 = vmatprep.subr.mxu0 0.0
    %5112 = vmatpush2.msra.mxu0 0.0
    %5113 = vmatprep.subr.mxu0 0.0
    %5114 = vmatpush2.msra.mxu0 0.0
    %5115 = vmatprep.mubr.f32.mxu0 0.0
    %v5116 = vand.u32 %v4862, 4294901760
    %5117 = vmatmul.mubr.f32.gmra.mxu0 %v5116
    %v5118 = vpop.f32.mrf.mxu0
    %v5119 = vadd.f32 %v4968, %v5118
    %v5120 = vpop.f32.mrf.mxu0
    %5121 = vdwg.mxu0
    %5122 = vmatprep.subr.mxu0 0.0
    %v5123 = vand.u32 %v4879, 4294901760
    %v5124 = vsub.f32 %v4879, %v5123
    %5125 = vmatpush1.msra.mxu0 %v5124
    %5126 = vmatprep.subr.mxu0 0.0
    %v5127 = vand.u32 %v4878, 4294901760
    %v5128 = vsub.f32 %v4878, %v5127
    %5129 = vmatpush1.msra.mxu0 %v5128
    %5130 = vmatprep.subr.mxu0 0.0
    %v5131 = vand.u32 %v4877, 4294901760
    %v5132 = vsub.f32 %v4877, %v5131
    %5133 = vmatpush1.msra.mxu0 %v5132
    %5134 = vmatprep.subr.mxu0 0.0
    %v5135 = vand.u32 %v4876, 4294901760
    %v5136 = vsub.f32 %v4876, %v5135
    %5137 = vmatpush1.msra.mxu0 %v5136
    %5138 = vmatprep.subr.mxu0 0.0
    %v5139 = vand.u32 %v4875, 4294901760
    %v5140 = vsub.f32 %v4875, %v5139
    %5141 = vmatpush1.msra.mxu0 %v5140
    %5142 = vmatprep.subr.mxu0 0.0
    %v5143 = vand.u32 %v4874, 4294901760
    %v5144 = vsub.f32 %v4874, %v5143
    %5145 = vmatpush1.msra.mxu0 %v5144
    %5146 = vmatprep.subr.mxu0 0.0
    %v5147 = vand.u32 %v4873, 4294901760
    %v5148 = vsub.f32 %v4873, %v5147
    %5149 = vmatpush1.msra.mxu0 %v5148
    %5150 = vmatprep.subr.mxu0 0.0
    %v5151 = vand.u32 %v4872, 4294901760
    %v5152 = vsub.f32 %v4872, %v5151
    %5153 = vmatpush1.msra.mxu0 %v5152
    %5154 = vmatprep.subr.mxu0 0.0
    %v5155 = vand.u32 %v4871, 4294901760
    %v5156 = vsub.f32 %v4871, %v5155
    %5157 = vmatpush1.msra.mxu0 %v5156
    %5158 = vmatprep.subr.mxu0 0.0
    %v5159 = vand.u32 %v4870, 4294901760
    %v5160 = vsub.f32 %v4870, %v5159
    %5161 = vmatpush1.msra.mxu0 %v5160
    %5162 = vmatprep.subr.mxu0 0.0
    %v5163 = vand.u32 %v4869, 4294901760
    %v5164 = vsub.f32 %v4869, %v5163
    %5165 = vmatpush1.msra.mxu0 %v5164
    %5166 = vmatprep.subr.mxu0 0.0
    %v5167 = vand.u32 %v4868, 4294901760
    %v5168 = vsub.f32 %v4868, %v5167
    %5169 = vmatpush1.msra.mxu0 %v5168
    %5170 = vmatprep.subr.mxu0 0.0
    %v5171 = vand.u32 %v4867, 4294901760
    %v5172 = vsub.f32 %v4867, %v5171
    %5173 = vmatpush1.msra.mxu0 %v5172
    %5174 = vmatprep.subr.mxu0 0.0
    %v5175 = vand.u32 %v4866, 4294901760
    %v5176 = vsub.f32 %v4866, %v5175
    %5177 = vmatpush1.msra.mxu0 %v5176
    %5178 = vmatprep.subr.mxu0 0.0
    %v5179 = vand.u32 %v4865, 4294901760
    %v5180 = vsub.f32 %v4865, %v5179
    %5181 = vmatpush1.msra.mxu0 %v5180
    %5182 = vmatprep.subr.mxu0 0.0
    %v5183 = vand.u32 %v4864, 4294901760
    %v5184 = vsub.f32 %v4864, %v5183
    %5185 = vmatpush1.msra.mxu0 %v5184
    %5186 = vmatprep.subr.mxu0 0.0
    %5187 = vmatpush2.msra.mxu0 0.0
    %5188 = vmatprep.subr.mxu0 0.0
    %5189 = vmatpush2.msra.mxu0 0.0
    %5190 = vmatprep.subr.mxu0 0.0
    %5191 = vmatpush2.msra.mxu0 0.0
    %5192 = vmatprep.subr.mxu0 0.0
    %5193 = vmatpush2.msra.mxu0 0.0
    %5194 = vmatprep.subr.mxu0 0.0
    %5195 = vmatpush2.msra.mxu0 0.0
    %5196 = vmatprep.subr.mxu0 0.0
    %5197 = vmatpush2.msra.mxu0 0.0
    %5198 = vmatprep.subr.mxu0 0.0
    %5199 = vmatpush2.msra.mxu0 0.0
    %5200 = vmatprep.subr.mxu0 0.0
    %5201 = vmatpush2.msra.mxu0 0.0
    %5202 = vmatprep.subr.mxu0 0.0
    %5203 = vmatpush2.msra.mxu0 0.0
    %5204 = vmatprep.subr.mxu0 0.0
    %5205 = vmatpush2.msra.mxu0 0.0
    %5206 = vmatprep.subr.mxu0 0.0
    %5207 = vmatpush2.msra.mxu0 0.0
    %5208 = vmatprep.subr.mxu0 0.0
    %5209 = vmatpush2.msra.mxu0 0.0
    %5210 = vmatprep.subr.mxu0 0.0
    %5211 = vmatpush2.msra.mxu0 0.0
    %5212 = vmatprep.subr.mxu0 0.0
    %5213 = vmatpush2.msra.mxu0 0.0
    %5214 = vmatprep.subr.mxu0 0.0
    %5215 = vmatpush2.msra.mxu0 0.0
    %5216 = vmatprep.subr.mxu0 0.0
    %5217 = vmatpush2.msra.mxu0 0.0
    %5218 = vmatprep.mubr.f32.mxu0 0.0
    %v5219 = vand.u32 %v4862, 4294901760
    %v5220 = vsub.f32 %v4862, %v5219
    %5221 = vmatmul.mubr.f32.gmra.mxu0 %v5220
    %v5222 = vpop.f32.mrf.mxu0
    %v5223 = vadd.f32 %v5119, %v5222
    %v5224 = vpop.f32.mrf.mxu0
    %5225 = vdwg.mxu0
    %5226 = vmatprep.subr.mxu0 0.0
    %v5227 = vand.u32 %v4879, 4294901760
    %5228 = vmatpush1.msra.mxu0 %v5227
    %5229 = vmatprep.subr.mxu0 0.0
    %v5230 = vand.u32 %v4878, 4294901760
    %5231 = vmatpush1.msra.mxu0 %v5230
    %5232 = vmatprep.subr.mxu0 0.0
    %v5233 = vand.u32 %v4877, 4294901760
    %5234 = vmatpush1.msra.mxu0 %v5233
    %5235 = vmatprep.subr.mxu0 0.0
    %v5236 = vand.u32 %v4876, 4294901760
    %5237 = vmatpush1.msra.mxu0 %v5236
    %5238 = vmatprep.subr.mxu0 0.0
    %v5239 = vand.u32 %v4875, 4294901760
    %5240 = vmatpush1.msra.mxu0 %v5239
    %5241 = vmatprep.subr.mxu0 0.0
    %v5242 = vand.u32 %v4874, 4294901760
    %5243 = vmatpush1.msra.mxu0 %v5242
    %5244 = vmatprep.subr.mxu0 0.0
    %v5245 = vand.u32 %v4873, 4294901760
    %5246 = vmatpush1.msra.mxu0 %v5245
    %5247 = vmatprep.subr.mxu0 0.0
    %v5248 = vand.u32 %v4872, 4294901760
    %5249 = vmatpush1.msra.mxu0 %v5248
    %5250 = vmatprep.subr.mxu0 0.0
    %v5251 = vand.u32 %v4871, 4294901760
    %5252 = vmatpush1.msra.mxu0 %v5251
    %5253 = vmatprep.subr.mxu0 0.0
    %v5254 = vand.u32 %v4870, 4294901760
    %5255 = vmatpush1.msra.mxu0 %v5254
    %5256 = vmatprep.subr.mxu0 0.0
    %v5257 = vand.u32 %v4869, 4294901760
    %5258 = vmatpush1.msra.mxu0 %v5257
    %5259 = vmatprep.subr.mxu0 0.0
    %v5260 = vand.u32 %v4868, 4294901760
    %5261 = vmatpush1.msra.mxu0 %v5260
    %5262 = vmatprep.subr.mxu0 0.0
    %v5263 = vand.u32 %v4867, 4294901760
    %5264 = vmatpush1.msra.mxu0 %v5263
    %5265 = vmatprep.subr.mxu0 0.0
    %v5266 = vand.u32 %v4866, 4294901760
    %5267 = vmatpush1.msra.mxu0 %v5266
    %5268 = vmatprep.subr.mxu0 0.0
    %v5269 = vand.u32 %v4865, 4294901760
    %5270 = vmatpush1.msra.mxu0 %v5269
    %5271 = vmatprep.subr.mxu0 0.0
    %v5272 = vand.u32 %v4864, 4294901760
    %5273 = vmatpush1.msra.mxu0 %v5272
    %5274 = vmatprep.subr.mxu0 0.0
    %5275 = vmatpush2.msra.mxu0 0.0
    %5276 = vmatprep.subr.mxu0 0.0
    %5277 = vmatpush2.msra.mxu0 0.0
    %5278 = vmatprep.subr.mxu0 0.0
    %5279 = vmatpush2.msra.mxu0 0.0
    %5280 = vmatprep.subr.mxu0 0.0
    %5281 = vmatpush2.msra.mxu0 0.0
    %5282 = vmatprep.subr.mxu0 0.0
    %5283 = vmatpush2.msra.mxu0 0.0
    %5284 = vmatprep.subr.mxu0 0.0
    %5285 = vmatpush2.msra.mxu0 0.0
    %5286 = vmatprep.subr.mxu0 0.0
    %5287 = vmatpush2.msra.mxu0 0.0
    %5288 = vmatprep.subr.mxu0 0.0
    %5289 = vmatpush2.msra.mxu0 0.0
    %5290 = vmatprep.subr.mxu0 0.0
    %5291 = vmatpush2.msra.mxu0 0.0
    %5292 = vmatprep.subr.mxu0 0.0
    %5293 = vmatpush2.msra.mxu0 0.0
    %5294 = vmatprep.subr.mxu0 0.0
    %5295 = vmatpush2.msra.mxu0 0.0
    %5296 = vmatprep.subr.mxu0 0.0
    %5297 = vmatpush2.msra.mxu0 0.0
    %5298 = vmatprep.subr.mxu0 0.0
    %5299 = vmatpush2.msra.mxu0 0.0
    %5300 = vmatprep.subr.mxu0 0.0
    %5301 = vmatpush2.msra.mxu0 0.0
    %5302 = vmatprep.subr.mxu0 0.0
    %5303 = vmatpush2.msra.mxu0 0.0
    %5304 = vmatprep.subr.mxu0 0.0
    %5305 = vmatpush2.msra.mxu0 0.0
    %5306 = vmatprep.mubr.f32.mxu0 0.0
    %v5307 = vand.u32 %v4862, 4294901760
    %v5308 = vsub.f32 %v4862, %v5307
    %v5309 = vand.u32 %v5308, 4294901760
    %5310 = vmatmul.mubr.f32.gmra.mxu0 %v5309
    %v5311 = vpop.f32.mrf.mxu0
    %v5312 = vadd.f32 %v5223, %v5311
    %v5313 = vpop.f32.mrf.mxu0
    %5314 = vdwg.mxu0
    %5315 = vmatprep.subr.mxu0 0.0
    %v5316 = vand.u32 %v4879, 4294901760
    %v5317 = vsub.f32 %v4879, %v5316
    %v5318 = vand.u32 %v5317, 4294901760
    %5319 = vmatpush1.msra.mxu0 %v5318
    %5320 = vmatprep.subr.mxu0 0.0
    %v5321 = vand.u32 %v4878, 4294901760
    %v5322 = vsub.f32 %v4878, %v5321
    %v5323 = vand.u32 %v5322, 4294901760
    %5324 = vmatpush1.msra.mxu0 %v5323
    %5325 = vmatprep.subr.mxu0 0.0
    %v5326 = vand.u32 %v4877, 4294901760
    %v5327 = vsub.f32 %v4877, %v5326
    %v5328 = vand.u32 %v5327, 4294901760
    %5329 = vmatpush1.msra.mxu0 %v5328
    %5330 = vmatprep.subr.mxu0 0.0
    %v5331 = vand.u32 %v4876, 4294901760
    %v5332 = vsub.f32 %v4876, %v5331
    %v5333 = vand.u32 %v5332, 4294901760
    %5334 = vmatpush1.msra.mxu0 %v5333
    %5335 = vmatprep.subr.mxu0 0.0
    %v5336 = vand.u32 %v4875, 4294901760
    %v5337 = vsub.f32 %v4875, %v5336
    %v5338 = vand.u32 %v5337, 4294901760
    %5339 = vmatpush1.msra.mxu0 %v5338
    %5340 = vmatprep.subr.mxu0 0.0
    %v5341 = vand.u32 %v4874, 4294901760
    %v5342 = vsub.f32 %v4874, %v5341
    %v5343 = vand.u32 %v5342, 4294901760
    %5344 = vmatpush1.msra.mxu0 %v5343
    %5345 = vmatprep.subr.mxu0 0.0
    %v5346 = vand.u32 %v4873, 4294901760
    %v5347 = vsub.f32 %v4873, %v5346
    %v5348 = vand.u32 %v5347, 4294901760
    %5349 = vmatpush1.msra.mxu0 %v5348
    %5350 = vmatprep.subr.mxu0 0.0
    %v5351 = vand.u32 %v4872, 4294901760
    %v5352 = vsub.f32 %v4872, %v5351
    %v5353 = vand.u32 %v5352, 4294901760
    %5354 = vmatpush1.msra.mxu0 %v5353
    %5355 = vmatprep.subr.mxu0 0.0
    %v5356 = vand.u32 %v4871, 4294901760
    %v5357 = vsub.f32 %v4871, %v5356
    %v5358 = vand.u32 %v5357, 4294901760
    %5359 = vmatpush1.msra.mxu0 %v5358
    %5360 = vmatprep.subr.mxu0 0.0
    %v5361 = vand.u32 %v4870, 4294901760
    %v5362 = vsub.f32 %v4870, %v5361
    %v5363 = vand.u32 %v5362, 4294901760
    %5364 = vmatpush1.msra.mxu0 %v5363
    %5365 = vmatprep.subr.mxu0 0.0
    %v5366 = vand.u32 %v4869, 4294901760
    %v5367 = vsub.f32 %v4869, %v5366
    %v5368 = vand.u32 %v5367, 4294901760
    %5369 = vmatpush1.msra.mxu0 %v5368
    %5370 = vmatprep.subr.mxu0 0.0
    %v5371 = vand.u32 %v4868, 4294901760
    %v5372 = vsub.f32 %v4868, %v5371
    %v5373 = vand.u32 %v5372, 4294901760
    %5374 = vmatpush1.msra.mxu0 %v5373
    %5375 = vmatprep.subr.mxu0 0.0
    %v5376 = vand.u32 %v4867, 4294901760
    %v5377 = vsub.f32 %v4867, %v5376
    %v5378 = vand.u32 %v5377, 4294901760
    %5379 = vmatpush1.msra.mxu0 %v5378
    %5380 = vmatprep.subr.mxu0 0.0
    %v5381 = vand.u32 %v4866, 4294901760
    %v5382 = vsub.f32 %v4866, %v5381
    %v5383 = vand.u32 %v5382, 4294901760
    %5384 = vmatpush1.msra.mxu0 %v5383
    %5385 = vmatprep.subr.mxu0 0.0
    %v5386 = vand.u32 %v4865, 4294901760
    %v5387 = vsub.f32 %v4865, %v5386
    %v5388 = vand.u32 %v5387, 4294901760
    %5389 = vmatpush1.msra.mxu0 %v5388
    %5390 = vmatprep.subr.mxu0 0.0
    %v5391 = vand.u32 %v4864, 4294901760
    %v5392 = vsub.f32 %v4864, %v5391
    %v5393 = vand.u32 %v5392, 4294901760
    %5394 = vmatpush1.msra.mxu0 %v5393
    %5395 = vmatprep.subr.mxu0 0.0
    %5396 = vmatpush2.msra.mxu0 0.0
    %5397 = vmatprep.subr.mxu0 0.0
    %5398 = vmatpush2.msra.mxu0 0.0
    %5399 = vmatprep.subr.mxu0 0.0
    %5400 = vmatpush2.msra.mxu0 0.0
    %5401 = vmatprep.subr.mxu0 0.0
    %5402 = vmatpush2.msra.mxu0 0.0
    %5403 = vmatprep.subr.mxu0 0.0
    %5404 = vmatpush2.msra.mxu0 0.0
    %5405 = vmatprep.subr.mxu0 0.0
    %5406 = vmatpush2.msra.mxu0 0.0
    %5407 = vmatprep.subr.mxu0 0.0
    %5408 = vmatpush2.msra.mxu0 0.0
    %5409 = vmatprep.subr.mxu0 0.0
    %5410 = vmatpush2.msra.mxu0 0.0
    %5411 = vmatprep.subr.mxu0 0.0
    %5412 = vmatpush2.msra.mxu0 0.0
    %5413 = vmatprep.subr.mxu0 0.0
    %5414 = vmatpush2.msra.mxu0 0.0
    %5415 = vmatprep.subr.mxu0 0.0
    %5416 = vmatpush2.msra.mxu0 0.0
    %5417 = vmatprep.subr.mxu0 0.0
    %5418 = vmatpush2.msra.mxu0 0.0
    %5419 = vmatprep.subr.mxu0 0.0
    %5420 = vmatpush2.msra.mxu0 0.0
    %5421 = vmatprep.subr.mxu0 0.0
    %5422 = vmatpush2.msra.mxu0 0.0
    %5423 = vmatprep.subr.mxu0 0.0
    %5424 = vmatpush2.msra.mxu0 0.0
    %5425 = vmatprep.subr.mxu0 0.0
    %5426 = vmatpush2.msra.mxu0 0.0
    %5427 = vmatprep.mubr.f32.mxu0 0.0
    %v5428 = vand.u32 %v4862, 4294901760
    %5429 = vmatmul.mubr.f32.gmra.mxu0 %v5428
    %v5430 = vpop.f32.mrf.mxu0
    %v5431 = vadd.f32 %v5312, %v5430
    %v5432 = vpop.f32.mrf.mxu0
    %5433 = vdwg.mxu0
    %5434 = vmatprep.subr.mxu0 0.0
    %v5435 = vand.u32 %v4879, 4294901760
    %5436 = vmatpush1.msra.mxu0 %v5435
    %5437 = vmatprep.subr.mxu0 0.0
    %v5438 = vand.u32 %v4878, 4294901760
    %5439 = vmatpush1.msra.mxu0 %v5438
    %5440 = vmatprep.subr.mxu0 0.0
    %v5441 = vand.u32 %v4877, 4294901760
    %5442 = vmatpush1.msra.mxu0 %v5441
    %5443 = vmatprep.subr.mxu0 0.0
    %v5444 = vand.u32 %v4876, 4294901760
    %5445 = vmatpush1.msra.mxu0 %v5444
    %5446 = vmatprep.subr.mxu0 0.0
    %v5447 = vand.u32 %v4875, 4294901760
    %5448 = vmatpush1.msra.mxu0 %v5447
    %5449 = vmatprep.subr.mxu0 0.0
    %v5450 = vand.u32 %v4874, 4294901760
    %5451 = vmatpush1.msra.mxu0 %v5450
    %5452 = vmatprep.subr.mxu0 0.0
    %v5453 = vand.u32 %v4873, 4294901760
    %5454 = vmatpush1.msra.mxu0 %v5453
    %5455 = vmatprep.subr.mxu0 0.0
    %v5456 = vand.u32 %v4872, 4294901760
    %5457 = vmatpush1.msra.mxu0 %v5456
    %5458 = vmatprep.subr.mxu0 0.0
    %v5459 = vand.u32 %v4871, 4294901760
    %5460 = vmatpush1.msra.mxu0 %v5459
    %5461 = vmatprep.subr.mxu0 0.0
    %v5462 = vand.u32 %v4870, 4294901760
    %5463 = vmatpush1.msra.mxu0 %v5462
    %5464 = vmatprep.subr.mxu0 0.0
    %v5465 = vand.u32 %v4869, 4294901760
    %5466 = vmatpush1.msra.mxu0 %v5465
    %5467 = vmatprep.subr.mxu0 0.0
    %v5468 = vand.u32 %v4868, 4294901760
    %5469 = vmatpush1.msra.mxu0 %v5468
    %5470 = vmatprep.subr.mxu0 0.0
    %v5471 = vand.u32 %v4867, 4294901760
    %5472 = vmatpush1.msra.mxu0 %v5471
    %5473 = vmatprep.subr.mxu0 0.0
    %v5474 = vand.u32 %v4866, 4294901760
    %5475 = vmatpush1.msra.mxu0 %v5474
    %5476 = vmatprep.subr.mxu0 0.0
    %v5477 = vand.u32 %v4865, 4294901760
    %5478 = vmatpush1.msra.mxu0 %v5477
    %5479 = vmatprep.subr.mxu0 0.0
    %v5480 = vand.u32 %v4864, 4294901760
    %5481 = vmatpush1.msra.mxu0 %v5480
    %5482 = vmatprep.subr.mxu0 0.0
    %5483 = vmatpush2.msra.mxu0 0.0
    %5484 = vmatprep.subr.mxu0 0.0
    %5485 = vmatpush2.msra.mxu0 0.0
    %5486 = vmatprep.subr.mxu0 0.0
    %5487 = vmatpush2.msra.mxu0 0.0
    %5488 = vmatprep.subr.mxu0 0.0
    %5489 = vmatpush2.msra.mxu0 0.0
    %5490 = vmatprep.subr.mxu0 0.0
    %5491 = vmatpush2.msra.mxu0 0.0
    %5492 = vmatprep.subr.mxu0 0.0
    %5493 = vmatpush2.msra.mxu0 0.0
    %5494 = vmatprep.subr.mxu0 0.0
    %5495 = vmatpush2.msra.mxu0 0.0
    %5496 = vmatprep.subr.mxu0 0.0
    %5497 = vmatpush2.msra.mxu0 0.0
    %5498 = vmatprep.subr.mxu0 0.0
    %5499 = vmatpush2.msra.mxu0 0.0
    %5500 = vmatprep.subr.mxu0 0.0
    %5501 = vmatpush2.msra.mxu0 0.0
    %5502 = vmatprep.subr.mxu0 0.0
    %5503 = vmatpush2.msra.mxu0 0.0
    %5504 = vmatprep.subr.mxu0 0.0
    %5505 = vmatpush2.msra.mxu0 0.0
    %5506 = vmatprep.subr.mxu0 0.0
    %5507 = vmatpush2.msra.mxu0 0.0
    %5508 = vmatprep.subr.mxu0 0.0
    %5509 = vmatpush2.msra.mxu0 0.0
    %5510 = vmatprep.subr.mxu0 0.0
    %5511 = vmatpush2.msra.mxu0 0.0
    %5512 = vmatprep.subr.mxu0 0.0
    %5513 = vmatpush2.msra.mxu0 0.0
    %5514 = vmatprep.mubr.f32.mxu0 0.0
    %v5515 = vand.u32 %v4862, 4294901760
    %5516 = vmatmul.mubr.f32.gmra.mxu0 %v5515
    %v5517 = vpop.f32.mrf.mxu0
    %v5518 = vadd.f32 %v5431, %v5517
    %v5519 = vpop.f32.mrf.mxu0
    %5520 = vdwg.mxu0
    %v5521 = vld [vmem:[%s12] sm:$0x1]
    %v5522 = vld [vmem:[%s13] sm:$0x1]
    %v5523 = vrot.slane %v5518, 4
    %v5524 = vadd.f32 %v5518, %v5523
    %v5525 = vrot.slane %v5524, 2
    %v5526 = vadd.f32 %v5524, %v5525
    %v5527 = vrot.slane %v5526, 1
    %v5528 = vadd.f32 %v5526, %v5527
    %v5529 = vmul.f32 %v5528, %v3458
    %v5530 = vsub.f32 %v5518, %v5529
    %v5531 = vmul.f32 %v5530, %v5530
    %v5532 = vrot.slane %v5531, 4
    %v5533 = vadd.f32 %v5531, %v5532
    %v5534 = vrot.slane %v5533, 2
    %v5535 = vadd.f32 %v5533, %v5534
    %v5536 = vrot.slane %v5535, 1
    %v5537 = vadd.f32 %v5535, %v5536
    %v5538 = vmul.f32 %v5537, %v3458
    %v5539 = vadd.f32 %v5538, 1e-05
    %v5540 = vrsqrt.pop %v5539
    %v5541 = vmul.f32 %v5530, %v5540
    %v5543 = vlaneseq
    %v5544 = vshrl.u32 %v5543, 7
    %v5545 = vsub.s32 0, %v5544
    %v5546 = vrot.slane %v5521, %v5545
    %v5548 = vmul.f32 %v5541, %v5546
    %v5550 = vlaneseq
    %v5551 = vshrl.u32 %v5550, 7
    %v5552 = vsub.s32 0, %v5551
    %v5553 = vrot.slane %v5522, %v5552
    %v5555 = vadd.f32 %v5548, %v5553
    %v5556 = vmax.f32 %v5555, 0.0
    %v5557 = vld [vmem:[%s14] sm:$0xff]
    %v5558 = vld [vmem:[%s14 + $0x8] sm:$0xff]
    %v5559 = vld [vmem:[%s14 + $0x10] sm:$0xff]
    %v5560 = vld [vmem:[%s14 + $0x18] sm:$0xff]
    %v5561 = vld [vmem:[%s14 + $0x20] sm:$0xff]
    %v5562 = vld [vmem:[%s14 + $0x28] sm:$0xff]
    %v5563 = vld [vmem:[%s14 + $0x30] sm:$0xff]
    %v5564 = vld [vmem:[%s14 + $0x38] sm:$0xff]
    %v5565 = vld [vmem:[%s14 + $0x40] sm:$0xff]
    %v5566 = vld [vmem:[%s14 + $0x48] sm:$0xff]
    %v5567 = vld [vmem:[%s14 + $0x50] sm:$0xff]
    %v5568 = vld [vmem:[%s14 + $0x58] sm:$0xff]
    %v5569 = vld [vmem:[%s14 + $0x60] sm:$0xff]
    %v5570 = vld [vmem:[%s14 + $0x68] sm:$0xff]
    %v5571 = vld [vmem:[%s14 + $0x70] sm:$0xff]
    %v5572 = vld [vmem:[%s14 + $0x78] sm:$0xff]
    %v5573 = vld [vmem:[%s15] sm:$0x1]
    %v5575 = vlaneseq
    %v5576 = vshrl.u32 %v5575, 7
    %v5577 = vsub.s32 0, %v5576
    %v5578 = vrot.slane %v5573, %v5577
    %5580 = vmatprep.subr.mxu0 0.0
    %v5581 = vand.u32 %v5572, 4294901760
    %5582 = vmatpush1.msra.mxu0 %v5581
    %5583 = vmatprep.subr.mxu0 0.0
    %v5584 = vand.u32 %v5571, 4294901760
    %5585 = vmatpush1.msra.mxu0 %v5584
    %5586 = vmatprep.subr.mxu0 0.0
    %v5587 = vand.u32 %v5570, 4294901760
    %5588 = vmatpush1.msra.mxu0 %v5587
    %5589 = vmatprep.subr.mxu0 0.0
    %v5590 = vand.u32 %v5569, 4294901760
    %5591 = vmatpush1.msra.mxu0 %v5590
    %5592 = vmatprep.subr.mxu0 0.0
    %v5593 = vand.u32 %v5568, 4294901760
    %5594 = vmatpush1.msra.mxu0 %v5593
    %5595 = vmatprep.subr.mxu0 0.0
    %v5596 = vand.u32 %v5567, 4294901760
    %5597 = vmatpush1.msra.mxu0 %v5596
    %5598 = vmatprep.subr.mxu0 0.0
    %v5599 = vand.u32 %v5566, 4294901760
    %5600 = vmatpush1.msra.mxu0 %v5599
    %5601 = vmatprep.subr.mxu0 0.0
    %v5602 = vand.u32 %v5565, 4294901760
    %5603 = vmatpush1.msra.mxu0 %v5602
    %5604 = vmatprep.subr.mxu0 0.0
    %v5605 = vand.u32 %v5564, 4294901760
    %5606 = vmatpush1.msra.mxu0 %v5605
    %5607 = vmatprep.subr.mxu0 0.0
    %v5608 = vand.u32 %v5563, 4294901760
    %5609 = vmatpush1.msra.mxu0 %v5608
    %5610 = vmatprep.subr.mxu0 0.0
    %v5611 = vand.u32 %v5562, 4294901760
    %5612 = vmatpush1.msra.mxu0 %v5611
    %5613 = vmatprep.subr.mxu0 0.0
    %v5614 = vand.u32 %v5561, 4294901760
    %5615 = vmatpush1.msra.mxu0 %v5614
    %5616 = vmatprep.subr.mxu0 0.0
    %v5617 = vand.u32 %v5560, 4294901760
    %5618 = vmatpush1.msra.mxu0 %v5617
    %5619 = vmatprep.subr.mxu0 0.0
    %v5620 = vand.u32 %v5559, 4294901760
    %5621 = vmatpush1.msra.mxu0 %v5620
    %5622 = vmatprep.subr.mxu0 0.0
    %v5623 = vand.u32 %v5558, 4294901760
    %5624 = vmatpush1.msra.mxu0 %v5623
    %5625 = vmatprep.subr.mxu0 0.0
    %v5626 = vand.u32 %v5557, 4294901760
    %5627 = vmatpush1.msra.mxu0 %v5626
    %5628 = vmatprep.subr.mxu0 0.0
    %5629 = vmatpush2.msra.mxu0 0.0
    %5630 = vmatprep.subr.mxu0 0.0
    %5631 = vmatpush2.msra.mxu0 0.0
    %5632 = vmatprep.subr.mxu0 0.0
    %5633 = vmatpush2.msra.mxu0 0.0
    %5634 = vmatprep.subr.mxu0 0.0
    %5635 = vmatpush2.msra.mxu0 0.0
    %5636 = vmatprep.subr.mxu0 0.0
    %5637 = vmatpush2.msra.mxu0 0.0
    %5638 = vmatprep.subr.mxu0 0.0
    %5639 = vmatpush2.msra.mxu0 0.0
    %5640 = vmatprep.subr.mxu0 0.0
    %5641 = vmatpush2.msra.mxu0 0.0
    %5642 = vmatprep.subr.mxu0 0.0
    %5643 = vmatpush2.msra.mxu0 0.0
    %5644 = vmatprep.subr.mxu0 0.0
    %5645 = vmatpush2.msra.mxu0 0.0
    %5646 = vmatprep.subr.mxu0 0.0
    %5647 = vmatpush2.msra.mxu0 0.0
    %5648 = vmatprep.subr.mxu0 0.0
    %5649 = vmatpush2.msra.mxu0 0.0
    %5650 = vmatprep.subr.mxu0 0.0
    %5651 = vmatpush2.msra.mxu0 0.0
    %5652 = vmatprep.subr.mxu0 0.0
    %5653 = vmatpush2.msra.mxu0 0.0
    %5654 = vmatprep.subr.mxu0 0.0
    %5655 = vmatpush2.msra.mxu0 0.0
    %5656 = vmatprep.subr.mxu0 0.0
    %5657 = vmatpush2.msra.mxu0 0.0
    %5658 = vmatprep.subr.mxu0 0.0
    %5659 = vmatpush2.msra.mxu0 0.0
    %5660 = vmatprep.mubr.f32.mxu0 0.0
    %v5661 = vand.u32 %v5556, 4294901760
    %v5662 = vsub.f32 %v5556, %v5661
    %v5663 = vand.u32 %v5662, 4294901760
    %v5664 = vsub.f32 %v5662, %v5663
    %v5665 = vand.u32 %v5664, 4294901760
    %5666 = vmatmul.mubr.f32.gmra.mxu0 %v5665
    %v5667 = vpop.f32.mrf.mxu0
    %v5668 = vadd.f32 %v5578, %v5667
    %v5669 = vpop.f32.mrf.mxu0
    %5670 = vdwg.mxu0
    %5671 = vmatprep.subr.mxu0 0.0
    %v5672 = vand.u32 %v5572, 4294901760
    %v5673 = vsub.f32 %v5572, %v5672
    %v5674 = vand.u32 %v5673, 4294901760
    %v5675 = vsub.f32 %v5673, %v5674
    %v5676 = vand.u32 %v5675, 4294901760
    %5677 = vmatpush1.msra.mxu0 %v5676
    %5678 = vmatprep.subr.mxu0 0.0
    %v5679 = vand.u32 %v5571, 4294901760
    %v5680 = vsub.f32 %v5571, %v5679
    %v5681 = vand.u32 %v5680, 4294901760
    %v5682 = vsub.f32 %v5680, %v5681
    %v5683 = vand.u32 %v5682, 4294901760
    %5684 = vmatpush1.msra.mxu0 %v5683
    %5685 = vmatprep.subr.mxu0 0.0
    %v5686 = vand.u32 %v5570, 4294901760
    %v5687 = vsub.f32 %v5570, %v5686
    %v5688 = vand.u32 %v5687, 4294901760
    %v5689 = vsub.f32 %v5687, %v5688
    %v5690 = vand.u32 %v5689, 4294901760
    %5691 = vmatpush1.msra.mxu0 %v5690
    %5692 = vmatprep.subr.mxu0 0.0
    %v5693 = vand.u32 %v5569, 4294901760
    %v5694 = vsub.f32 %v5569, %v5693
    %v5695 = vand.u32 %v5694, 4294901760
    %v5696 = vsub.f32 %v5694, %v5695
    %v5697 = vand.u32 %v5696, 4294901760
    %5698 = vmatpush1.msra.mxu0 %v5697
    %5699 = vmatprep.subr.mxu0 0.0
    %v5700 = vand.u32 %v5568, 4294901760
    %v5701 = vsub.f32 %v5568, %v5700
    %v5702 = vand.u32 %v5701, 4294901760
    %v5703 = vsub.f32 %v5701, %v5702
    %v5704 = vand.u32 %v5703, 4294901760
    %5705 = vmatpush1.msra.mxu0 %v5704
    %5706 = vmatprep.subr.mxu0 0.0
    %v5707 = vand.u32 %v5567, 4294901760
    %v5708 = vsub.f32 %v5567, %v5707
    %v5709 = vand.u32 %v5708, 4294901760
    %v5710 = vsub.f32 %v5708, %v5709
    %v5711 = vand.u32 %v5710, 4294901760
    %5712 = vmatpush1.msra.mxu0 %v5711
    %5713 = vmatprep.subr.mxu0 0.0
    %v5714 = vand.u32 %v5566, 4294901760
    %v5715 = vsub.f32 %v5566, %v5714
    %v5716 = vand.u32 %v5715, 4294901760
    %v5717 = vsub.f32 %v5715, %v5716
    %v5718 = vand.u32 %v5717, 4294901760
    %5719 = vmatpush1.msra.mxu0 %v5718
    %5720 = vmatprep.subr.mxu0 0.0
    %v5721 = vand.u32 %v5565, 4294901760
    %v5722 = vsub.f32 %v5565, %v5721
    %v5723 = vand.u32 %v5722, 4294901760
    %v5724 = vsub.f32 %v5722, %v5723
    %v5725 = vand.u32 %v5724, 4294901760
    %5726 = vmatpush1.msra.mxu0 %v5725
    %5727 = vmatprep.subr.mxu0 0.0
    %v5728 = vand.u32 %v5564, 4294901760
    %v5729 = vsub.f32 %v5564, %v5728
    %v5730 = vand.u32 %v5729, 4294901760
    %v5731 = vsub.f32 %v5729, %v5730
    %v5732 = vand.u32 %v5731, 4294901760
    %5733 = vmatpush1.msra.mxu0 %v5732
    %5734 = vmatprep.subr.mxu0 0.0
    %v5735 = vand.u32 %v5563, 4294901760
    %v5736 = vsub.f32 %v5563, %v5735
    %v5737 = vand.u32 %v5736, 4294901760
    %v5738 = vsub.f32 %v5736, %v5737
    %v5739 = vand.u32 %v5738, 4294901760
    %5740 = vmatpush1.msra.mxu0 %v5739
    %5741 = vmatprep.subr.mxu0 0.0
    %v5742 = vand.u32 %v5562, 4294901760
    %v5743 = vsub.f32 %v5562, %v5742
    %v5744 = vand.u32 %v5743, 4294901760
    %v5745 = vsub.f32 %v5743, %v5744
    %v5746 = vand.u32 %v5745, 4294901760
    %5747 = vmatpush1.msra.mxu0 %v5746
    %5748 = vmatprep.subr.mxu0 0.0
    %v5749 = vand.u32 %v5561, 4294901760
    %v5750 = vsub.f32 %v5561, %v5749
    %v5751 = vand.u32 %v5750, 4294901760
    %v5752 = vsub.f32 %v5750, %v5751
    %v5753 = vand.u32 %v5752, 4294901760
    %5754 = vmatpush1.msra.mxu0 %v5753
    %5755 = vmatprep.subr.mxu0 0.0
    %v5756 = vand.u32 %v5560, 4294901760
    %v5757 = vsub.f32 %v5560, %v5756
    %v5758 = vand.u32 %v5757, 4294901760
    %v5759 = vsub.f32 %v5757, %v5758
    %v5760 = vand.u32 %v5759, 4294901760
    %5761 = vmatpush1.msra.mxu0 %v5760
    %5762 = vmatprep.subr.mxu0 0.0
    %v5763 = vand.u32 %v5559, 4294901760
    %v5764 = vsub.f32 %v5559, %v5763
    %v5765 = vand.u32 %v5764, 4294901760
    %v5766 = vsub.f32 %v5764, %v5765
    %v5767 = vand.u32 %v5766, 4294901760
    %5768 = vmatpush1.msra.mxu0 %v5767
    %5769 = vmatprep.subr.mxu0 0.0
    %v5770 = vand.u32 %v5558, 4294901760
    %v5771 = vsub.f32 %v5558, %v5770
    %v5772 = vand.u32 %v5771, 4294901760
    %v5773 = vsub.f32 %v5771, %v5772
    %v5774 = vand.u32 %v5773, 4294901760
    %5775 = vmatpush1.msra.mxu0 %v5774
    %5776 = vmatprep.subr.mxu0 0.0
    %v5777 = vand.u32 %v5557, 4294901760
    %v5778 = vsub.f32 %v5557, %v5777
    %v5779 = vand.u32 %v5778, 4294901760
    %v5780 = vsub.f32 %v5778, %v5779
    %v5781 = vand.u32 %v5780, 4294901760
    %5782 = vmatpush1.msra.mxu0 %v5781
    %5783 = vmatprep.subr.mxu0 0.0
    %5784 = vmatpush2.msra.mxu0 0.0
    %5785 = vmatprep.subr.mxu0 0.0
    %5786 = vmatpush2.msra.mxu0 0.0
    %5787 = vmatprep.subr.mxu0 0.0
    %5788 = vmatpush2.msra.mxu0 0.0
    %5789 = vmatprep.subr.mxu0 0.0
    %5790 = vmatpush2.msra.mxu0 0.0
    %5791 = vmatprep.subr.mxu0 0.0
    %5792 = vmatpush2.msra.mxu0 0.0
    %5793 = vmatprep.subr.mxu0 0.0
    %5794 = vmatpush2.msra.mxu0 0.0
    %5795 = vmatprep.subr.mxu0 0.0
    %5796 = vmatpush2.msra.mxu0 0.0
    %5797 = vmatprep.subr.mxu0 0.0
    %5798 = vmatpush2.msra.mxu0 0.0
    %5799 = vmatprep.subr.mxu0 0.0
    %5800 = vmatpush2.msra.mxu0 0.0
    %5801 = vmatprep.subr.mxu0 0.0
    %5802 = vmatpush2.msra.mxu0 0.0
    %5803 = vmatprep.subr.mxu0 0.0
    %5804 = vmatpush2.msra.mxu0 0.0
    %5805 = vmatprep.subr.mxu0 0.0
    %5806 = vmatpush2.msra.mxu0 0.0
    %5807 = vmatprep.subr.mxu0 0.0
    %5808 = vmatpush2.msra.mxu0 0.0
    %5809 = vmatprep.subr.mxu0 0.0
    %5810 = vmatpush2.msra.mxu0 0.0
    %5811 = vmatprep.subr.mxu0 0.0
    %5812 = vmatpush2.msra.mxu0 0.0
    %5813 = vmatprep.subr.mxu0 0.0
    %5814 = vmatpush2.msra.mxu0 0.0
    %5815 = vmatprep.mubr.f32.mxu0 0.0
    %v5816 = vand.u32 %v5556, 4294901760
    %5817 = vmatmul.mubr.f32.gmra.mxu0 %v5816
    %v5818 = vpop.f32.mrf.mxu0
    %v5819 = vadd.f32 %v5668, %v5818
    %v5820 = vpop.f32.mrf.mxu0
    %5821 = vdwg.mxu0
    %5822 = vmatprep.subr.mxu0 0.0
    %v5823 = vand.u32 %v5572, 4294901760
    %v5824 = vsub.f32 %v5572, %v5823
    %5825 = vmatpush1.msra.mxu0 %v5824
    %5826 = vmatprep.subr.mxu0 0.0
    %v5827 = vand.u32 %v5571, 4294901760
    %v5828 = vsub.f32 %v5571, %v5827
    %5829 = vmatpush1.msra.mxu0 %v5828
    %5830 = vmatprep.subr.mxu0 0.0
    %v5831 = vand.u32 %v5570, 4294901760
    %v5832 = vsub.f32 %v5570, %v5831
    %5833 = vmatpush1.msra.mxu0 %v5832
    %5834 = vmatprep.subr.mxu0 0.0
    %v5835 = vand.u32 %v5569, 4294901760
    %v5836 = vsub.f32 %v5569, %v5835
    %5837 = vmatpush1.msra.mxu0 %v5836
    %5838 = vmatprep.subr.mxu0 0.0
    %v5839 = vand.u32 %v5568, 4294901760
    %v5840 = vsub.f32 %v5568, %v5839
    %5841 = vmatpush1.msra.mxu0 %v5840
    %5842 = vmatprep.subr.mxu0 0.0
    %v5843 = vand.u32 %v5567, 4294901760
    %v5844 = vsub.f32 %v5567, %v5843
    %5845 = vmatpush1.msra.mxu0 %v5844
    %5846 = vmatprep.subr.mxu0 0.0
    %v5847 = vand.u32 %v5566, 4294901760
    %v5848 = vsub.f32 %v5566, %v5847
    %5849 = vmatpush1.msra.mxu0 %v5848
    %5850 = vmatprep.subr.mxu0 0.0
    %v5851 = vand.u32 %v5565, 4294901760
    %v5852 = vsub.f32 %v5565, %v5851
    %5853 = vmatpush1.msra.mxu0 %v5852
    %5854 = vmatprep.subr.mxu0 0.0
    %v5855 = vand.u32 %v5564, 4294901760
    %v5856 = vsub.f32 %v5564, %v5855
    %5857 = vmatpush1.msra.mxu0 %v5856
    %5858 = vmatprep.subr.mxu0 0.0
    %v5859 = vand.u32 %v5563, 4294901760
    %v5860 = vsub.f32 %v5563, %v5859
    %5861 = vmatpush1.msra.mxu0 %v5860
    %5862 = vmatprep.subr.mxu0 0.0
    %v5863 = vand.u32 %v5562, 4294901760
    %v5864 = vsub.f32 %v5562, %v5863
    %5865 = vmatpush1.msra.mxu0 %v5864
    %5866 = vmatprep.subr.mxu0 0.0
    %v5867 = vand.u32 %v5561, 4294901760
    %v5868 = vsub.f32 %v5561, %v5867
    %5869 = vmatpush1.msra.mxu0 %v5868
    %5870 = vmatprep.subr.mxu0 0.0
    %v5871 = vand.u32 %v5560, 4294901760
    %v5872 = vsub.f32 %v5560, %v5871
    %5873 = vmatpush1.msra.mxu0 %v5872
    %5874 = vmatprep.subr.mxu0 0.0
    %v5875 = vand.u32 %v5559, 4294901760
    %v5876 = vsub.f32 %v5559, %v5875
    %5877 = vmatpush1.msra.mxu0 %v5876
    %5878 = vmatprep.subr.mxu0 0.0
    %v5879 = vand.u32 %v5558, 4294901760
    %v5880 = vsub.f32 %v5558, %v5879
    %5881 = vmatpush1.msra.mxu0 %v5880
    %5882 = vmatprep.subr.mxu0 0.0
    %v5883 = vand.u32 %v5557, 4294901760
    %v5884 = vsub.f32 %v5557, %v5883
    %5885 = vmatpush1.msra.mxu0 %v5884
    %5886 = vmatprep.subr.mxu0 0.0
    %5887 = vmatpush2.msra.mxu0 0.0
    %5888 = vmatprep.subr.mxu0 0.0
    %5889 = vmatpush2.msra.mxu0 0.0
    %5890 = vmatprep.subr.mxu0 0.0
    %5891 = vmatpush2.msra.mxu0 0.0
    %5892 = vmatprep.subr.mxu0 0.0
    %5893 = vmatpush2.msra.mxu0 0.0
    %5894 = vmatprep.subr.mxu0 0.0
    %5895 = vmatpush2.msra.mxu0 0.0
    %5896 = vmatprep.subr.mxu0 0.0
    %5897 = vmatpush2.msra.mxu0 0.0
    %5898 = vmatprep.subr.mxu0 0.0
    %5899 = vmatpush2.msra.mxu0 0.0
    %5900 = vmatprep.subr.mxu0 0.0
    %5901 = vmatpush2.msra.mxu0 0.0
    %5902 = vmatprep.subr.mxu0 0.0
    %5903 = vmatpush2.msra.mxu0 0.0
    %5904 = vmatprep.subr.mxu0 0.0
    %5905 = vmatpush2.msra.mxu0 0.0
    %5906 = vmatprep.subr.mxu0 0.0
    %5907 = vmatpush2.msra.mxu0 0.0
    %5908 = vmatprep.subr.mxu0 0.0
    %5909 = vmatpush2.msra.mxu0 0.0
    %5910 = vmatprep.subr.mxu0 0.0
    %5911 = vmatpush2.msra.mxu0 0.0
    %5912 = vmatprep.subr.mxu0 0.0
    %5913 = vmatpush2.msra.mxu0 0.0
    %5914 = vmatprep.subr.mxu0 0.0
    %5915 = vmatpush2.msra.mxu0 0.0
    %5916 = vmatprep.subr.mxu0 0.0
    %5917 = vmatpush2.msra.mxu0 0.0
    %5918 = vmatprep.mubr.f32.mxu0 0.0
    %v5919 = vand.u32 %v5556, 4294901760
    %v5920 = vsub.f32 %v5556, %v5919
    %5921 = vmatmul.mubr.f32.gmra.mxu0 %v5920
    %v5922 = vpop.f32.mrf.mxu0
    %v5923 = vadd.f32 %v5819, %v5922
    %v5924 = vpop.f32.mrf.mxu0
    %5925 = vdwg.mxu0
    %5926 = vmatprep.subr.mxu0 0.0
    %v5927 = vand.u32 %v5572, 4294901760
    %5928 = vmatpush1.msra.mxu0 %v5927
    %5929 = vmatprep.subr.mxu0 0.0
    %v5930 = vand.u32 %v5571, 4294901760
    %5931 = vmatpush1.msra.mxu0 %v5930
    %5932 = vmatprep.subr.mxu0 0.0
    %v5933 = vand.u32 %v5570, 4294901760
    %5934 = vmatpush1.msra.mxu0 %v5933
    %5935 = vmatprep.subr.mxu0 0.0
    %v5936 = vand.u32 %v5569, 4294901760
    %5937 = vmatpush1.msra.mxu0 %v5936
    %5938 = vmatprep.subr.mxu0 0.0
    %v5939 = vand.u32 %v5568, 4294901760
    %5940 = vmatpush1.msra.mxu0 %v5939
    %5941 = vmatprep.subr.mxu0 0.0
    %v5942 = vand.u32 %v5567, 4294901760
    %5943 = vmatpush1.msra.mxu0 %v5942
    %5944 = vmatprep.subr.mxu0 0.0
    %v5945 = vand.u32 %v5566, 4294901760
    %5946 = vmatpush1.msra.mxu0 %v5945
    %5947 = vmatprep.subr.mxu0 0.0
    %v5948 = vand.u32 %v5565, 4294901760
    %5949 = vmatpush1.msra.mxu0 %v5948
    %5950 = vmatprep.subr.mxu0 0.0
    %v5951 = vand.u32 %v5564, 4294901760
    %5952 = vmatpush1.msra.mxu0 %v5951
    %5953 = vmatprep.subr.mxu0 0.0
    %v5954 = vand.u32 %v5563, 4294901760
    %5955 = vmatpush1.msra.mxu0 %v5954
    %5956 = vmatprep.subr.mxu0 0.0
    %v5957 = vand.u32 %v5562, 4294901760
    %5958 = vmatpush1.msra.mxu0 %v5957
    %5959 = vmatprep.subr.mxu0 0.0
    %v5960 = vand.u32 %v5561, 4294901760
    %5961 = vmatpush1.msra.mxu0 %v5960
    %5962 = vmatprep.subr.mxu0 0.0
    %v5963 = vand.u32 %v5560, 4294901760
    %5964 = vmatpush1.msra.mxu0 %v5963
    %5965 = vmatprep.subr.mxu0 0.0
    %v5966 = vand.u32 %v5559, 4294901760
    %5967 = vmatpush1.msra.mxu0 %v5966
    %5968 = vmatprep.subr.mxu0 0.0
    %v5969 = vand.u32 %v5558, 4294901760
    %5970 = vmatpush1.msra.mxu0 %v5969
    %5971 = vmatprep.subr.mxu0 0.0
    %v5972 = vand.u32 %v5557, 4294901760
    %5973 = vmatpush1.msra.mxu0 %v5972
    %5974 = vmatprep.subr.mxu0 0.0
    %5975 = vmatpush2.msra.mxu0 0.0
    %5976 = vmatprep.subr.mxu0 0.0
    %5977 = vmatpush2.msra.mxu0 0.0
    %5978 = vmatprep.subr.mxu0 0.0
    %5979 = vmatpush2.msra.mxu0 0.0
    %5980 = vmatprep.subr.mxu0 0.0
    %5981 = vmatpush2.msra.mxu0 0.0
    %5982 = vmatprep.subr.mxu0 0.0
    %5983 = vmatpush2.msra.mxu0 0.0
    %5984 = vmatprep.subr.mxu0 0.0
    %5985 = vmatpush2.msra.mxu0 0.0
    %5986 = vmatprep.subr.mxu0 0.0
    %5987 = vmatpush2.msra.mxu0 0.0
    %5988 = vmatprep.subr.mxu0 0.0
    %5989 = vmatpush2.msra.mxu0 0.0
    %5990 = vmatprep.subr.mxu0 0.0
    %5991 = vmatpush2.msra.mxu0 0.0
    %5992 = vmatprep.subr.mxu0 0.0
    %5993 = vmatpush2.msra.mxu0 0.0
    %5994 = vmatprep.subr.mxu0 0.0
    %5995 = vmatpush2.msra.mxu0 0.0
    %5996 = vmatprep.subr.mxu0 0.0
    %5997 = vmatpush2.msra.mxu0 0.0
    %5998 = vmatprep.subr.mxu0 0.0
    %5999 = vmatpush2.msra.mxu0 0.0
    %6000 = vmatprep.subr.mxu0 0.0
    %6001 = vmatpush2.msra.mxu0 0.0
    %6002 = vmatprep.subr.mxu0 0.0
    %6003 = vmatpush2.msra.mxu0 0.0
    %6004 = vmatprep.subr.mxu0 0.0
    %6005 = vmatpush2.msra.mxu0 0.0
    %6006 = vmatprep.mubr.f32.mxu0 0.0
    %v6007 = vand.u32 %v5556, 4294901760
    %v6008 = vsub.f32 %v5556, %v6007
    %v6009 = vand.u32 %v6008, 4294901760
    %6010 = vmatmul.mubr.f32.gmra.mxu0 %v6009
    %v6011 = vpop.f32.mrf.mxu0
    %v6012 = vadd.f32 %v5923, %v6011
    %v6013 = vpop.f32.mrf.mxu0
    %6014 = vdwg.mxu0
    %6015 = vmatprep.subr.mxu0 0.0
    %v6016 = vand.u32 %v5572, 4294901760
    %v6017 = vsub.f32 %v5572, %v6016
    %v6018 = vand.u32 %v6017, 4294901760
    %6019 = vmatpush1.msra.mxu0 %v6018
    %6020 = vmatprep.subr.mxu0 0.0
    %v6021 = vand.u32 %v5571, 4294901760
    %v6022 = vsub.f32 %v5571, %v6021
    %v6023 = vand.u32 %v6022, 4294901760
    %6024 = vmatpush1.msra.mxu0 %v6023
    %6025 = vmatprep.subr.mxu0 0.0
    %v6026 = vand.u32 %v5570, 4294901760
    %v6027 = vsub.f32 %v5570, %v6026
    %v6028 = vand.u32 %v6027, 4294901760
    %6029 = vmatpush1.msra.mxu0 %v6028
    %6030 = vmatprep.subr.mxu0 0.0
    %v6031 = vand.u32 %v5569, 4294901760
    %v6032 = vsub.f32 %v5569, %v6031
    %v6033 = vand.u32 %v6032, 4294901760
    %6034 = vmatpush1.msra.mxu0 %v6033
    %6035 = vmatprep.subr.mxu0 0.0
    %v6036 = vand.u32 %v5568, 4294901760
    %v6037 = vsub.f32 %v5568, %v6036
    %v6038 = vand.u32 %v6037, 4294901760
    %6039 = vmatpush1.msra.mxu0 %v6038
    %6040 = vmatprep.subr.mxu0 0.0
    %v6041 = vand.u32 %v5567, 4294901760
    %v6042 = vsub.f32 %v5567, %v6041
    %v6043 = vand.u32 %v6042, 4294901760
    %6044 = vmatpush1.msra.mxu0 %v6043
    %6045 = vmatprep.subr.mxu0 0.0
    %v6046 = vand.u32 %v5566, 4294901760
    %v6047 = vsub.f32 %v5566, %v6046
    %v6048 = vand.u32 %v6047, 4294901760
    %6049 = vmatpush1.msra.mxu0 %v6048
    %6050 = vmatprep.subr.mxu0 0.0
    %v6051 = vand.u32 %v5565, 4294901760
    %v6052 = vsub.f32 %v5565, %v6051
    %v6053 = vand.u32 %v6052, 4294901760
    %6054 = vmatpush1.msra.mxu0 %v6053
    %6055 = vmatprep.subr.mxu0 0.0
    %v6056 = vand.u32 %v5564, 4294901760
    %v6057 = vsub.f32 %v5564, %v6056
    %v6058 = vand.u32 %v6057, 4294901760
    %6059 = vmatpush1.msra.mxu0 %v6058
    %6060 = vmatprep.subr.mxu0 0.0
    %v6061 = vand.u32 %v5563, 4294901760
    %v6062 = vsub.f32 %v5563, %v6061
    %v6063 = vand.u32 %v6062, 4294901760
    %6064 = vmatpush1.msra.mxu0 %v6063
    %6065 = vmatprep.subr.mxu0 0.0
    %v6066 = vand.u32 %v5562, 4294901760
    %v6067 = vsub.f32 %v5562, %v6066
    %v6068 = vand.u32 %v6067, 4294901760
    %6069 = vmatpush1.msra.mxu0 %v6068
    %6070 = vmatprep.subr.mxu0 0.0
    %v6071 = vand.u32 %v5561, 4294901760
    %v6072 = vsub.f32 %v5561, %v6071
    %v6073 = vand.u32 %v6072, 4294901760
    %6074 = vmatpush1.msra.mxu0 %v6073
    %6075 = vmatprep.subr.mxu0 0.0
    %v6076 = vand.u32 %v5560, 4294901760
    %v6077 = vsub.f32 %v5560, %v6076
    %v6078 = vand.u32 %v6077, 4294901760
    %6079 = vmatpush1.msra.mxu0 %v6078
    %6080 = vmatprep.subr.mxu0 0.0
    %v6081 = vand.u32 %v5559, 4294901760
    %v6082 = vsub.f32 %v5559, %v6081
    %v6083 = vand.u32 %v6082, 4294901760
    %6084 = vmatpush1.msra.mxu0 %v6083
    %6085 = vmatprep.subr.mxu0 0.0
    %v6086 = vand.u32 %v5558, 4294901760
    %v6087 = vsub.f32 %v5558, %v6086
    %v6088 = vand.u32 %v6087, 4294901760
    %6089 = vmatpush1.msra.mxu0 %v6088
    %6090 = vmatprep.subr.mxu0 0.0
    %v6091 = vand.u32 %v5557, 4294901760
    %v6092 = vsub.f32 %v5557, %v6091
    %v6093 = vand.u32 %v6092, 4294901760
    %6094 = vmatpush1.msra.mxu0 %v6093
    %6095 = vmatprep.subr.mxu0 0.0
    %6096 = vmatpush2.msra.mxu0 0.0
    %6097 = vmatprep.subr.mxu0 0.0
    %6098 = vmatpush2.msra.mxu0 0.0
    %6099 = vmatprep.subr.mxu0 0.0
    %6100 = vmatpush2.msra.mxu0 0.0
    %6101 = vmatprep.subr.mxu0 0.0
    %6102 = vmatpush2.msra.mxu0 0.0
    %6103 = vmatprep.subr.mxu0 0.0
    %6104 = vmatpush2.msra.mxu0 0.0
    %6105 = vmatprep.subr.mxu0 0.0
    %6106 = vmatpush2.msra.mxu0 0.0
    %6107 = vmatprep.subr.mxu0 0.0
    %6108 = vmatpush2.msra.mxu0 0.0
    %6109 = vmatprep.subr.mxu0 0.0
    %6110 = vmatpush2.msra.mxu0 0.0
    %6111 = vmatprep.subr.mxu0 0.0
    %6112 = vmatpush2.msra.mxu0 0.0
    %6113 = vmatprep.subr.mxu0 0.0
    %6114 = vmatpush2.msra.mxu0 0.0
    %6115 = vmatprep.subr.mxu0 0.0
    %6116 = vmatpush2.msra.mxu0 0.0
    %6117 = vmatprep.subr.mxu0 0.0
    %6118 = vmatpush2.msra.mxu0 0.0
    %6119 = vmatprep.subr.mxu0 0.0
    %6120 = vmatpush2.msra.mxu0 0.0
    %6121 = vmatprep.subr.mxu0 0.0
    %6122 = vmatpush2.msra.mxu0 0.0
    %6123 = vmatprep.subr.mxu0 0.0
    %6124 = vmatpush2.msra.mxu0 0.0
    %6125 = vmatprep.subr.mxu0 0.0
    %6126 = vmatpush2.msra.mxu0 0.0
    %6127 = vmatprep.mubr.f32.mxu0 0.0
    %v6128 = vand.u32 %v5556, 4294901760
    %6129 = vmatmul.mubr.f32.gmra.mxu0 %v6128
    %v6130 = vpop.f32.mrf.mxu0
    %v6131 = vadd.f32 %v6012, %v6130
    %v6132 = vpop.f32.mrf.mxu0
    %6133 = vdwg.mxu0
    %6134 = vmatprep.subr.mxu0 0.0
    %v6135 = vand.u32 %v5572, 4294901760
    %6136 = vmatpush1.msra.mxu0 %v6135
    %6137 = vmatprep.subr.mxu0 0.0
    %v6138 = vand.u32 %v5571, 4294901760
    %6139 = vmatpush1.msra.mxu0 %v6138
    %6140 = vmatprep.subr.mxu0 0.0
    %v6141 = vand.u32 %v5570, 4294901760
    %6142 = vmatpush1.msra.mxu0 %v6141
    %6143 = vmatprep.subr.mxu0 0.0
    %v6144 = vand.u32 %v5569, 4294901760
    %6145 = vmatpush1.msra.mxu0 %v6144
    %6146 = vmatprep.subr.mxu0 0.0
    %v6147 = vand.u32 %v5568, 4294901760
    %6148 = vmatpush1.msra.mxu0 %v6147
    %6149 = vmatprep.subr.mxu0 0.0
    %v6150 = vand.u32 %v5567, 4294901760
    %6151 = vmatpush1.msra.mxu0 %v6150
    %6152 = vmatprep.subr.mxu0 0.0
    %v6153 = vand.u32 %v5566, 4294901760
    %6154 = vmatpush1.msra.mxu0 %v6153
    %6155 = vmatprep.subr.mxu0 0.0
    %v6156 = vand.u32 %v5565, 4294901760
    %6157 = vmatpush1.msra.mxu0 %v6156
    %6158 = vmatprep.subr.mxu0 0.0
    %v6159 = vand.u32 %v5564, 4294901760
    %6160 = vmatpush1.msra.mxu0 %v6159
    %6161 = vmatprep.subr.mxu0 0.0
    %v6162 = vand.u32 %v5563, 4294901760
    %6163 = vmatpush1.msra.mxu0 %v6162
    %6164 = vmatprep.subr.mxu0 0.0
    %v6165 = vand.u32 %v5562, 4294901760
    %6166 = vmatpush1.msra.mxu0 %v6165
    %6167 = vmatprep.subr.mxu0 0.0
    %v6168 = vand.u32 %v5561, 4294901760
    %6169 = vmatpush1.msra.mxu0 %v6168
    %6170 = vmatprep.subr.mxu0 0.0
    %v6171 = vand.u32 %v5560, 4294901760
    %6172 = vmatpush1.msra.mxu0 %v6171
    %6173 = vmatprep.subr.mxu0 0.0
    %v6174 = vand.u32 %v5559, 4294901760
    %6175 = vmatpush1.msra.mxu0 %v6174
    %6176 = vmatprep.subr.mxu0 0.0
    %v6177 = vand.u32 %v5558, 4294901760
    %6178 = vmatpush1.msra.mxu0 %v6177
    %6179 = vmatprep.subr.mxu0 0.0
    %v6180 = vand.u32 %v5557, 4294901760
    %6181 = vmatpush1.msra.mxu0 %v6180
    %6182 = vmatprep.subr.mxu0 0.0
    %6183 = vmatpush2.msra.mxu0 0.0
    %6184 = vmatprep.subr.mxu0 0.0
    %6185 = vmatpush2.msra.mxu0 0.0
    %6186 = vmatprep.subr.mxu0 0.0
    %6187 = vmatpush2.msra.mxu0 0.0
    %6188 = vmatprep.subr.mxu0 0.0
    %6189 = vmatpush2.msra.mxu0 0.0
    %6190 = vmatprep.subr.mxu0 0.0
    %6191 = vmatpush2.msra.mxu0 0.0
    %6192 = vmatprep.subr.mxu0 0.0
    %6193 = vmatpush2.msra.mxu0 0.0
    %6194 = vmatprep.subr.mxu0 0.0
    %6195 = vmatpush2.msra.mxu0 0.0
    %6196 = vmatprep.subr.mxu0 0.0
    %6197 = vmatpush2.msra.mxu0 0.0
    %6198 = vmatprep.subr.mxu0 0.0
    %6199 = vmatpush2.msra.mxu0 0.0
    %6200 = vmatprep.subr.mxu0 0.0
    %6201 = vmatpush2.msra.mxu0 0.0
    %6202 = vmatprep.subr.mxu0 0.0
    %6203 = vmatpush2.msra.mxu0 0.0
    %6204 = vmatprep.subr.mxu0 0.0
    %6205 = vmatpush2.msra.mxu0 0.0
    %6206 = vmatprep.subr.mxu0 0.0
    %6207 = vmatpush2.msra.mxu0 0.0
    %6208 = vmatprep.subr.mxu0 0.0
    %6209 = vmatpush2.msra.mxu0 0.0
    %6210 = vmatprep.subr.mxu0 0.0
    %6211 = vmatpush2.msra.mxu0 0.0
    %6212 = vmatprep.subr.mxu0 0.0
    %6213 = vmatpush2.msra.mxu0 0.0
    %6214 = vmatprep.mubr.f32.mxu0 0.0
    %v6215 = vand.u32 %v5556, 4294901760
    %6216 = vmatmul.mubr.f32.gmra.mxu0 %v6215
    %v6217 = vpop.f32.mrf.mxu0
    %v6218 = vadd.f32 %v6131, %v6217
    %v6219 = vpop.f32.mrf.mxu0
    %6220 = vdwg.mxu0
    %6221 = vst [vmem:[#allocation4] sm:$0xff] %v6218
    // Predicated region
    $region66: #{network_forward.1} parent=1 // pred_check
      _
    $region67: #{network_forward.1} parent=1 // pred_check_branch
      %6223 = sbr.rel (0) target = $region69
    $region68: #{network_forward.1} parent=1 // pred_region
      %s6225 = ssub.s32 128, 128
      %6226 = vsyncadd [#allocation3], %s6225
      %s6228 = sshll.u32 [#allocation2], 4
      %s6229 = int_to_ptr.vmem [resolvable:$true] %s6228
      %6231 = dma.vmem_to_hbm [thread:$0]  %s6229, 128, %s16, [#allocation3]
    $region69: #{network_forward.1} parent=1 // pred_fallthru
      _
    // Predicated region
    $region70: #{network_forward.1} parent=1 // pred_check
      _
    $region71: #{network_forward.1} parent=1 // pred_check_branch
      %6233 = sbr.rel (0) target = $region73
    $region72: #{network_forward.1} parent=1 // pred_region
      %s6235 = ssub.s32 128, 128
      %6236 = vsyncadd [#allocation5], %s6235
      %s6238 = sshll.u32 [#allocation4], 4
      %s6239 = int_to_ptr.vmem [resolvable:$true] %s6238
      %6241 = dma.vmem_to_hbm [thread:$0]  %s6239, 128, %s17, [#allocation5]
    $region73: #{network_forward.1} parent=1 // pred_fallthru
      _
    // Predicated region
    $region74: #{network_forward.1} parent=1 // pred_check
      _
    $region75: #{network_forward.1} parent=1 // pred_check_branch
      %6243 = sbr.rel (0) target = $region77
    $region76: #{network_forward.1} parent=1 // pred_region
      %6244 = dma.done [#allocation3], 128
    $region77: #{network_forward.1} parent=1 // pred_fallthru
      _
    // Predicated region
    $region78: #{network_forward.1} parent=1 // pred_check
      _
    $region79: #{network_forward.1} parent=1 // pred_check_branch
      %6246 = sbr.rel (0) target = $region81
    $region80: #{network_forward.1} parent=1 // pred_region
      %6247 = dma.done [#allocation5], 128
    $region81: #{network_forward.1} parent=1 // pred_fallthru
      _
    %6248 = vsyncpa [#allocation3], 1
    %6249 = vsyncpa [#allocation5], 1

</llo_original>
